<compile_context>
chip_gen: v6e
topology: v6e:2x2x1
jax: 0.10.0
libtpu: 0.0.40
codegen_flags: <defaults>
</compile_context>

<pallas_src>
import functools
import math

import jax
import jax.numpy as jnp
from jax import lax
from jax.experimental import pallas as pl
from jax.experimental.pallas import tpu as pltpu

MXU_DTYPE = jnp.bfloat16      # MXU operand dtype (f32 accumulation everywhere)
LN_EPS = 1e-9                 # matches nn.LayerNorm(D, eps=1e-09) in the spec


def _layernorm(z, gamma, beta, eps):
    mu = jnp.mean(z, axis=-1, keepdims=True)
    d = z - mu
    var = jnp.mean(d * d, axis=-1, keepdims=True)
    return d * lax.rsqrt(var + eps) * gamma + beta


# ---------------------------------------------------------------------------
# Single fused kernel: input proj -> L decoder layers -> output proj.
# Grid is over batch only ("parallel" so v7x shards it across its 2 TCs).
# ---------------------------------------------------------------------------
def _decoder_kernel(x_ref, w_in_ref, b_in_ref, pos_ref,
                    wqkv_ref, wproj_ref, wffn1_ref, wffn2_ref, vec_ref,
                    w_out_ref, b_out_ref,
                    out_ref, attn_ref,
                    vals_scr,
                    *, num_layers, num_heads, d_model, head_dim, hidden,
                    seq_len, last_len, eps):
    L, H, D, hd, S = num_layers, num_heads, d_model, head_dim, seq_len
    scale_in = math.sqrt(float(D))
    scale_attn = 1.0 / math.sqrt(float(hd))

    # ---- input projection: (x @ W_in + b) * sqrt(D) + pos[:S] -------------
    x = x_ref[0].astype(MXU_DTYPE)                                  # (S, F_in)
    h = jnp.dot(x, w_in_ref[...], preferred_element_type=jnp.float32)
    h = (h + b_in_ref[...]) * scale_in + pos_ref[...]               # (S, D) f32
    # self.dropout is identity (eval mode)

    # ---- decoder layers (static unroll; all weights resident in VMEM) ----
    for l in range(L):
        vec = vec_ref[l]                           # (8, W) packed f32 vectors
        b_qkv = vec[0:1, :3 * D]
        b_proj = vec[1:2, :D]
        b_ffn1 = vec[2:3, :hidden]
        b_ffn2 = vec[3:4, :D]
        g1, be1 = vec[4:5, :D], vec[5:6, :D]
        g2, be2 = vec[6:7, :D], vec[7:8, :D]

        # Fused QKV projection: one (S,D)@(D,3D) matmul.
        qkv = jnp.dot(h.astype(MXU_DTYPE), wqkv_ref[l],
                      preferred_element_type=jnp.float32) + b_qkv   # (S, 3D)

        # Per-head scaled dot-product attention (exact softmax, f32 math).
        for head in range(H):
            base = head * 3 * hd                   # matches reshape+permute+chunk
            q = qkv[:, base:base + hd].astype(MXU_DTYPE)
            k = qkv[:, base + hd:base + 2 * hd].astype(MXU_DTYPE)
            v = qkv[:, base + 2 * hd:base + 3 * hd].astype(MXU_DTYPE)
            s = lax.dot_general(q, k, (((1,), (1,)), ((), ())),
                                preferred_element_type=jnp.float32) * scale_attn
            m = jnp.max(s, axis=-1, keepdims=True)
            e = jnp.exp(s - m)
            p = e / jnp.sum(e, axis=-1, keepdims=True)              # (S, S)
            attn_ref[0, l * H + head] = p
            # values[h] stored as rows [h*S, (h+1)*S) of the (H*S, hd) scratch
            vals_scr[head * S:(head + 1) * S, :] = jnp.dot(
                p.astype(MXU_DTYPE), v, preferred_element_type=jnp.float32)

        # Reproduce the reference's values.reshape(B, S, H*hd) merge (row-major
        # reshape of (H, S, hd), WITHOUT transposing heads back):
        #   merged[s, j*hd:(j+1)*hd] = vals_flat[s*H + j, :]
        # i.e. column block j is a stride-H row gather of the scratch.
        merged = jnp.concatenate(
            [vals_scr[pl.ds(j, S, stride=H), :] for j in range(H)],
            axis=-1)                                                # (S, D)

        attn_out = jnp.dot(merged.astype(MXU_DTYPE), wproj_ref[l],
                           preferred_element_type=jnp.float32) + b_proj
        # dropout1 is identity (eval mode)
        out1 = _layernorm(h + attn_out, g1, be1, eps)

        ff = jnp.dot(out1.astype(MXU_DTYPE), wffn1_ref[l],
                     preferred_element_type=jnp.float32) + b_ffn1
        ff = jnp.maximum(ff, 0.0)                  # ReLU; FFN dropout identity
        ff = jnp.dot(ff.astype(MXU_DTYPE), wffn2_ref[l],
                     preferred_element_type=jnp.float32) + b_ffn2
        # dropout2 is identity (eval mode)
        h = _layernorm(out1 + ff, g2, be2, eps)

    # ---- output projection on the last min(48, S) positions ---------------
    h_last = h[S - last_len:, :]
    out_ref[0] = jnp.dot(h_last.astype(MXU_DTYPE), w_out_ref[...],
                         preferred_element_type=jnp.float32) + b_out_ref[...]


def decoder_forward(x, params, num_heads):
    B, S, F_in = x.shape
    w_in = params["w_in"]
    D = w_in.shape[1]
    L = params["wqkv"].shape[0]
    hd = D // num_heads
    hidden = params["wffn1"].shape[2]
    F_out = params["w_out"].shape[1]
    W = params["vec"].shape[2]
    last = min(48, S)                              # clamps like PyTorch x[:, -48:, :]

    kernel = functools.partial(
        _decoder_kernel, num_layers=L, num_heads=num_heads, d_model=D,
        head_dim=hd, hidden=hidden, seq_len=S, last_len=last, eps=LN_EPS)

    out, attn = pl.pallas_call(
        kernel,
        grid=(B,),
        in_specs=[
            pl.BlockSpec((1, S, F_in), lambda i: (i, 0, 0)),        # x
            pl.BlockSpec((F_in, D), lambda i: (0, 0)),              # w_in (bf16)
            pl.BlockSpec((1, D), lambda i: (0, 0)),                 # b_in
            pl.BlockSpec((S, D), lambda i: (0, 0)),                 # pos[:S]
            pl.BlockSpec((L, D, 3 * D), lambda i: (0, 0, 0)),       # wqkv (bf16)
            pl.BlockSpec((L, D, D), lambda i: (0, 0, 0)),           # w_proj
            pl.BlockSpec((L, D, hidden), lambda i: (0, 0, 0)),      # w_ffn1
            pl.BlockSpec((L, hidden, D), lambda i: (0, 0, 0)),      # w_ffn2
            pl.BlockSpec((L, 8, W), lambda i: (0, 0, 0)),           # packed biases/LN
            pl.BlockSpec((D, F_out), lambda i: (0, 0)),             # w_out
            pl.BlockSpec((1, F_out), lambda i: (0, 0)),             # b_out
        ],
        out_specs=(
            pl.BlockSpec((1, last, F_out), lambda i: (i, 0, 0)),
            pl.BlockSpec((1, L * num_heads, S, S), lambda i: (i, 0, 0, 0)),
        ),
        out_shape=(
            jax.ShapeDtypeStruct((B, last, F_out), jnp.float32),
            jax.ShapeDtypeStruct((B, L * num_heads, S, S), jnp.float32),
        ),
        scratch_shapes=[pltpu.VMEM((num_heads * S, hd), jnp.float32)],
        compiler_params=pltpu.CompilerParams(dimension_semantics=("parallel",)),
    )(x, w_in, params["b_in"], params["pos"], params["wqkv"], params["wproj"],
      params["wffn1"], params["wffn2"], params["vec"],
      params["w_out"], params["b_out"])

    attn = attn.reshape(B, L, num_heads, S, S)
    attention_weights = {f"decoder_layer{i + 1}": attn[:, i] for i in range(L)}
    return out, attention_weights


# ---------------------------------------------------------------------------
# Parameter construction (nn.Linear-style weights, pre-transposed & stacked).
# ---------------------------------------------------------------------------
def init_params(key, num_layers, D, H, hidden_mlp_dim, inp_features, out_features):
    keys = list(jax.random.split(key, 3 + 4 * num_layers))
    kit = iter(keys)

    def dense(k, out_dim, in_dim):
        # nn.Linear-style (out, in) init; stored pre-transposed as (in, out) in
        # the MXU dtype so no per-call transpose ops are emitted.
        w = 0.05 * jax.random.normal(k, (out_dim, in_dim), dtype=jnp.float32)
        b = jnp.zeros((out_dim,), dtype=jnp.float32)
        return jnp.asarray(w.T, dtype=MXU_DTYPE), b

    params = {}
    w_in, b_in = dense(next(kit), D, inp_features)
    params["w_in"], params["b_in"] = w_in, b_in.reshape(1, D)
    params["pos"] = jax.random.normal(next(kit), (168, D), dtype=jnp.float32)

    W = max(3 * D, hidden_mlp_dim, D)

    def padrow(v):
        return jnp.pad(v, (0, W - v.shape[0]))

    wqkv_l, wproj_l, wffn1_l, wffn2_l, vec_l = [], [], [], [], []
    for _ in range(num_layers):
        wqkv, bqkv = dense(next(kit), 3 * D, D)          # (D, 3D) bf16
        wproj, bproj = dense(next(kit), D, D)
        wffn1, bffn1 = dense(next(kit), hidden_mlp_dim, D)
        wffn2, bffn2 = dense(next(kit), D, hidden_mlp_dim)
        ln1g = jnp.ones((D,), jnp.float32)
        ln1b = jnp.zeros((D,), jnp.float32)
        ln2g = jnp.ones((D,), jnp.float32)
        ln2b = jnp.zeros((D,), jnp.float32)
        wqkv_l.append(wqkv)
        wproj_l.append(wproj)
        wffn1_l.append(wffn1)
        wffn2_l.append(wffn2)
        # One packed f32 slab per layer: rows = [bqkv, bproj, bffn1, bffn2,
        # ln1_g, ln1_b, ln2_g, ln2_b], each padded to width W.
        vec_l.append(jnp.stack([padrow(bqkv), padrow(bproj), padrow(bffn1),
                                padrow(bffn2), padrow(ln1g), padrow(ln1b),
                                padrow(ln2g), padrow(ln2b)]))
    params["wqkv"] = jnp.stack(wqkv_l)
    params["wproj"] = jnp.stack(wproj_l)
    params["wffn1"] = jnp.stack(wffn1_l)
    params["wffn2"] = jnp.stack(wffn2_l)
    params["vec"] = jnp.stack(vec_l)

    w_out, b_out = dense(next(kit), out_features, D)
    params["w_out"], params["b_out"] = w_out, b_out.reshape(1, out_features)
    return params


if __name__ == "__main__":
    num_layers, D, H, hidden_mlp_dim = 2, 32, 4, 64
    inp_features, out_features = 8, 4
    B, S = 2, 16

    key = jax.random.PRNGKey(0)
    pkey, xkey = jax.random.split(key)
    params = init_params(pkey, num_layers, D, H, hidden_mlp_dim,
                         inp_features, out_features)
    x = jax.random.normal(xkey, (B, S, inp_features), dtype=jnp.float32)

    fwd = jax.jit(functools.partial(decoder_forward, num_heads=H))
    out, attn_w = fwd(x, params)
    out = jax.block_until_ready(out)
    for v in attn_w.values():
        jax.block_until_ready(v)

    assert out.shape == (B, min(48, S), out_features)
    for i in range(num_layers):
        assert attn_w[f"decoder_layer{i + 1}"].shape == (B, H, S, S)
    print("KERNEL_OK")
</pallas_src>

<mosaic_0001>
module attributes {stable_mosaic.version = 11 : i64} {
  func.func @_decoder_kernel(%arg0: i32, %arg1: memref<1x16x8xf32, #tpu.memory_space<vmem>>, %arg2: memref<8x32xbf16, #tpu.memory_space<vmem>>, %arg3: memref<1x32xf32, #tpu.memory_space<vmem>>, %arg4: memref<16x32xf32, #tpu.memory_space<vmem>>, %arg5: memref<2x32x96xbf16, #tpu.memory_space<vmem>>, %arg6: memref<2x32x32xbf16, #tpu.memory_space<vmem>>, %arg7: memref<2x32x64xbf16, #tpu.memory_space<vmem>>, %arg8: memref<2x64x32xbf16, #tpu.memory_space<vmem>>, %arg9: memref<2x8x96xf32, #tpu.memory_space<vmem>>, %arg10: memref<32x4xbf16, #tpu.memory_space<vmem>>, %arg11: memref<1x4xf32, #tpu.memory_space<vmem>>, %arg12: memref<1x16x4xf32, #tpu.memory_space<vmem>>, %arg13: memref<1x8x16x16xf32, #tpu.memory_space<vmem>>, %arg14: memref<64x8xf32, #tpu.memory_space<vmem>>) attributes {dimension_semantics = [#tpu.dimension_semantics<parallel>], iteration_bounds = array<i64: 2>, scalar_prefetch = 0 : i64, scratch_operands = 1 : i64, tpu.core_type = #tpu.core_type<tc>, window_params = [{transform_indices = @transform_0, window_bounds = array<i64: 1, 16, 8>}, {pipeline_mode = #tpu.pipeline_mode<synchronous>, transform_indices = @transform_1, window_bounds = array<i64: 8, 32>}, {pipeline_mode = #tpu.pipeline_mode<synchronous>, transform_indices = @transform_2, window_bounds = array<i64: 1, 32>}, {transform_indices = @transform_3, window_bounds = array<i64: 16, 32>}, {pipeline_mode = #tpu.pipeline_mode<synchronous>, transform_indices = @transform_4, window_bounds = array<i64: 2, 32, 96>}, {pipeline_mode = #tpu.pipeline_mode<synchronous>, transform_indices = @transform_5, window_bounds = array<i64: 2, 32, 32>}, {pipeline_mode = #tpu.pipeline_mode<synchronous>, transform_indices = @transform_6, window_bounds = array<i64: 2, 32, 64>}, {pipeline_mode = #tpu.pipeline_mode<synchronous>, transform_indices = @transform_7, window_bounds = array<i64: 2, 64, 32>}, {pipeline_mode = #tpu.pipeline_mode<synchronous>, transform_indices = @transform_8, window_bounds = array<i64: 2, 8, 96>}, {pipeline_mode = #tpu.pipeline_mode<synchronous>, transform_indices = @transform_9, window_bounds = array<i64: 32, 4>}, {pipeline_mode = #tpu.pipeline_mode<synchronous>, transform_indices = @transform_10, window_bounds = array<i64: 1, 4>}, {transform_indices = @transform_11, window_bounds = array<i64: 1, 16, 4>}, {transform_indices = @transform_12, window_bounds = array<i64: 1, 8, 16, 16>}]} {
    %c0 = arith.constant 0 : index
    %c0_0 = arith.constant 0 : index
    %c0_1 = arith.constant 0 : index
    %0 = vector.load %arg1[%c0, %c0_0, %c0_1] : memref<1x16x8xf32, #tpu.memory_space<vmem>>, vector<1x16x8xf32>
    %1 = vector.shape_cast %0 : vector<1x16x8xf32> to vector<16x8xf32>
    %2 = arith.truncf %1 : vector<16x8xf32> to vector<16x8xbf16>
    %c0_2 = arith.constant 0 : index
    %c0_3 = arith.constant 0 : index
    %3 = vector.load %arg2[%c0_2, %c0_3] : memref<8x32xbf16, #tpu.memory_space<vmem>>, vector<8x32xbf16>
    %cst = arith.constant dense<0.000000e+00> : vector<16x32xf32>
    %4 = tpu.matmul %2, %3, %cst {dimension_numbers = #tpu.dot_dimension_numbers<[1], [0], [0], [1], [0, 0, 1, 1], [], []>} : vector<16x8xbf16>, vector<8x32xbf16>, vector<16x32xf32> -> vector<16x32xf32>
    %c0_4 = arith.constant 0 : index
    %c0_5 = arith.constant 0 : index
    %5 = vector.load %arg3[%c0_4, %c0_5] : memref<1x32xf32, #tpu.memory_space<vmem>>, vector<1x32xf32>
    %6 = vector.broadcast %5 : vector<1x32xf32> to vector<16x32xf32>
    %7 = arith.addf %4, %6 : vector<16x32xf32>
    %cst_6 = arith.constant 5.65685415 : f32
    %8 = vector.broadcast %cst_6 : f32 to vector<16x32xf32>
    %9 = arith.mulf %7, %8 : vector<16x32xf32>
    %c0_7 = arith.constant 0 : index
    %c0_8 = arith.constant 0 : index
    %10 = vector.load %arg4[%c0_7, %c0_8] : memref<16x32xf32, #tpu.memory_space<vmem>>, vector<16x32xf32>
    %11 = arith.addf %9, %10 : vector<16x32xf32>
    %c0_9 = arith.constant 0 : index
    %c0_10 = arith.constant 0 : index
    %c0_11 = arith.constant 0 : index
    %12 = vector.load %arg9[%c0_9, %c0_10, %c0_11] : memref<2x8x96xf32, #tpu.memory_space<vmem>>, vector<1x8x96xf32>
    %13 = vector.shape_cast %12 : vector<1x8x96xf32> to vector<8x96xf32>
    %14 = vector.extract_strided_slice %13 {offsets = [0, 0], sizes = [1, 96], strides = [1, 1]} : vector<8x96xf32> to vector<1x96xf32>
    %15 = vector.extract_strided_slice %13 {offsets = [1, 0], sizes = [1, 32], strides = [1, 1]} : vector<8x96xf32> to vector<1x32xf32>
    %16 = vector.extract_strided_slice %13 {offsets = [2, 0], sizes = [1, 64], strides = [1, 1]} : vector<8x96xf32> to vector<1x64xf32>
    %17 = vector.extract_strided_slice %13 {offsets = [3, 0], sizes = [1, 32], strides = [1, 1]} : vector<8x96xf32> to vector<1x32xf32>
    %18 = vector.extract_strided_slice %13 {offsets = [4, 0], sizes = [1, 32], strides = [1, 1]} : vector<8x96xf32> to vector<1x32xf32>
    %19 = vector.extract_strided_slice %13 {offsets = [5, 0], sizes = [1, 32], strides = [1, 1]} : vector<8x96xf32> to vector<1x32xf32>
    %20 = vector.extract_strided_slice %13 {offsets = [6, 0], sizes = [1, 32], strides = [1, 1]} : vector<8x96xf32> to vector<1x32xf32>
    %21 = vector.extract_strided_slice %13 {offsets = [7, 0], sizes = [1, 32], strides = [1, 1]} : vector<8x96xf32> to vector<1x32xf32>
    %22 = arith.truncf %11 : vector<16x32xf32> to vector<16x32xbf16>
    %c0_12 = arith.constant 0 : index
    %c0_13 = arith.constant 0 : index
    %c0_14 = arith.constant 0 : index
    %23 = vector.load %arg5[%c0_12, %c0_13, %c0_14] : memref<2x32x96xbf16, #tpu.memory_space<vmem>>, vector<1x32x96xbf16>
    %24 = vector.shape_cast %23 : vector<1x32x96xbf16> to vector<32x96xbf16>
    %cst_15 = arith.constant dense<0.000000e+00> : vector<16x96xf32>
    %25 = tpu.matmul %22, %24, %cst_15 {dimension_numbers = #tpu.dot_dimension_numbers<[1], [0], [0], [1], [0, 0, 1, 1], [], []>} : vector<16x32xbf16>, vector<32x96xbf16>, vector<16x96xf32> -> vector<16x96xf32>
    %26 = vector.broadcast %14 : vector<1x96xf32> to vector<16x96xf32>
    %27 = arith.addf %25, %26 : vector<16x96xf32>
    %28 = vector.extract_strided_slice %27 {offsets = [0, 0], sizes = [16, 8], strides = [1, 1]} : vector<16x96xf32> to vector<16x8xf32>
    %29 = arith.truncf %28 : vector<16x8xf32> to vector<16x8xbf16>
    %30 = vector.extract_strided_slice %27 {offsets = [0, 8], sizes = [16, 8], strides = [1, 1]} : vector<16x96xf32> to vector<16x8xf32>
    %31 = arith.truncf %30 : vector<16x8xf32> to vector<16x8xbf16>
    %32 = vector.extract_strided_slice %27 {offsets = [0, 16], sizes = [16, 8], strides = [1, 1]} : vector<16x96xf32> to vector<16x8xf32>
    %33 = arith.truncf %32 : vector<16x8xf32> to vector<16x8xbf16>
    %cst_16 = arith.constant dense<0.000000e+00> : vector<16x16xf32>
    %34 = tpu.matmul %29, %31, %cst_16 {dimension_numbers = #tpu.dot_dimension_numbers<[1], [1], [0], [0], [0, 0, 1, 0], [], []>} : vector<16x8xbf16>, vector<16x8xbf16>, vector<16x16xf32> -> vector<16x16xf32>
    %cst_17 = arith.constant 0.353553385 : f32
    %35 = vector.broadcast %cst_17 : f32 to vector<16x16xf32>
    %36 = arith.mulf %34, %35 : vector<16x16xf32>
    %cst_18 = arith.constant dense<0xFF800000> : vector<16xf32>
    %37 = vector.multi_reduction <maximumf>, %36, %cst_18 [1] : vector<16x16xf32> to vector<16xf32>
    %38 = vector.shape_cast %37 : vector<16xf32> to vector<16x1xf32>
    %39 = vector.broadcast %38 : vector<16x1xf32> to vector<16x16xf32>
    %40 = arith.subf %36, %39 : vector<16x16xf32>
    %41 = math.exp %40 : vector<16x16xf32>
    %cst_19 = arith.constant dense<0.000000e+00> : vector<16xf32>
    %42 = vector.multi_reduction <add>, %41, %cst_19 [1] : vector<16x16xf32> to vector<16xf32>
    %43 = vector.shape_cast %42 : vector<16xf32> to vector<16x1xf32>
    %44 = vector.broadcast %43 : vector<16x1xf32> to vector<16x16xf32>
    %45 = arith.divf %41, %44 : vector<16x16xf32>
    %c0_20 = arith.constant 0 : index
    %c0_21 = arith.constant 0 : index
    %c0_22 = arith.constant 0 : index
    %c0_23 = arith.constant 0 : index
    %46 = vector.load %arg13[%c0_20, %c0_21, %c0_22, %c0_23] : memref<1x8x16x16xf32, #tpu.memory_space<vmem>>, vector<1x1x16x16xf32>
    %47 = vector.shape_cast %46 : vector<1x1x16x16xf32> to vector<16x16xf32>
    %48 = vector.shape_cast %45 : vector<16x16xf32> to vector<1x1x16x16xf32>
    tpu.vector_store %arg13[%c0_20, %c0_21, %c0_22, %c0_23], %48 {strides = array<i32>} : memref<1x8x16x16xf32, #tpu.memory_space<vmem>>, vector<1x1x16x16xf32>,
    %49 = arith.truncf %45 : vector<16x16xf32> to vector<16x16xbf16>
    %cst_24 = arith.constant dense<0.000000e+00> : vector<16x8xf32>
    %50 = tpu.matmul %49, %33, %cst_24 {dimension_numbers = #tpu.dot_dimension_numbers<[1], [0], [0], [1], [0, 0, 1, 1], [], []>} : vector<16x16xbf16>, vector<16x8xbf16>, vector<16x8xf32> -> vector<16x8xf32>
    %c0_25 = arith.constant 0 : index
    %c0_26 = arith.constant 0 : index
    %51 = vector.load %arg14[%c0_25, %c0_26] : memref<64x8xf32, #tpu.memory_space<vmem>>, vector<16x8xf32>
    tpu.vector_store %arg14[%c0_25, %c0_26], %50 {strides = array<i32>} : memref<64x8xf32, #tpu.memory_space<vmem>>, vector<16x8xf32>,
    %52 = vector.extract_strided_slice %27 {offsets = [0, 24], sizes = [16, 8], strides = [1, 1]} : vector<16x96xf32> to vector<16x8xf32>
    %53 = arith.truncf %52 : vector<16x8xf32> to vector<16x8xbf16>
    %54 = vector.extract_strided_slice %27 {offsets = [0, 32], sizes = [16, 8], strides = [1, 1]} : vector<16x96xf32> to vector<16x8xf32>
    %55 = arith.truncf %54 : vector<16x8xf32> to vector<16x8xbf16>
    %56 = vector.extract_strided_slice %27 {offsets = [0, 40], sizes = [16, 8], strides = [1, 1]} : vector<16x96xf32> to vector<16x8xf32>
    %57 = arith.truncf %56 : vector<16x8xf32> to vector<16x8xbf16>
    %cst_27 = arith.constant dense<0.000000e+00> : vector<16x16xf32>
    %58 = tpu.matmul %53, %55, %cst_27 {dimension_numbers = #tpu.dot_dimension_numbers<[1], [1], [0], [0], [0, 0, 1, 0], [], []>} : vector<16x8xbf16>, vector<16x8xbf16>, vector<16x16xf32> -> vector<16x16xf32>
    %cst_28 = arith.constant 0.353553385 : f32
    %59 = vector.broadcast %cst_28 : f32 to vector<16x16xf32>
    %60 = arith.mulf %58, %59 : vector<16x16xf32>
    %cst_29 = arith.constant dense<0xFF800000> : vector<16xf32>
    %61 = vector.multi_reduction <maximumf>, %60, %cst_29 [1] : vector<16x16xf32> to vector<16xf32>
    %62 = vector.shape_cast %61 : vector<16xf32> to vector<16x1xf32>
    %63 = vector.broadcast %62 : vector<16x1xf32> to vector<16x16xf32>
    %64 = arith.subf %60, %63 : vector<16x16xf32>
    %65 = math.exp %64 : vector<16x16xf32>
    %cst_30 = arith.constant dense<0.000000e+00> : vector<16xf32>
    %66 = vector.multi_reduction <add>, %65, %cst_30 [1] : vector<16x16xf32> to vector<16xf32>
    %67 = vector.shape_cast %66 : vector<16xf32> to vector<16x1xf32>
    %68 = vector.broadcast %67 : vector<16x1xf32> to vector<16x16xf32>
    %69 = arith.divf %65, %68 : vector<16x16xf32>
    %c0_31 = arith.constant 0 : index
    %c1 = arith.constant 1 : index
    %c0_32 = arith.constant 0 : index
    %c0_33 = arith.constant 0 : index
    %70 = vector.load %arg13[%c0_31, %c1, %c0_32, %c0_33] : memref<1x8x16x16xf32, #tpu.memory_space<vmem>>, vector<1x1x16x16xf32>
    %71 = vector.shape_cast %70 : vector<1x1x16x16xf32> to vector<16x16xf32>
    %72 = vector.shape_cast %69 : vector<16x16xf32> to vector<1x1x16x16xf32>
    tpu.vector_store %arg13[%c0_31, %c1, %c0_32, %c0_33], %72 {strides = array<i32>} : memref<1x8x16x16xf32, #tpu.memory_space<vmem>>, vector<1x1x16x16xf32>,
    %73 = arith.truncf %69 : vector<16x16xf32> to vector<16x16xbf16>
    %cst_34 = arith.constant dense<0.000000e+00> : vector<16x8xf32>
    %74 = tpu.matmul %73, %57, %cst_34 {dimension_numbers = #tpu.dot_dimension_numbers<[1], [0], [0], [1], [0, 0, 1, 1], [], []>} : vector<16x16xbf16>, vector<16x8xbf16>, vector<16x8xf32> -> vector<16x8xf32>
    %c16 = arith.constant 16 : index
    %c0_35 = arith.constant 0 : index
    %75 = vector.load %arg14[%c16, %c0_35] : memref<64x8xf32, #tpu.memory_space<vmem>>, vector<16x8xf32>
    tpu.vector_store %arg14[%c16, %c0_35], %74 {strides = array<i32>} : memref<64x8xf32, #tpu.memory_space<vmem>>, vector<16x8xf32>,
    %76 = vector.extract_strided_slice %27 {offsets = [0, 48], sizes = [16, 8], strides = [1, 1]} : vector<16x96xf32> to vector<16x8xf32>
    %77 = arith.truncf %76 : vector<16x8xf32> to vector<16x8xbf16>
    %78 = vector.extract_strided_slice %27 {offsets = [0, 56], sizes = [16, 8], strides = [1, 1]} : vector<16x96xf32> to vector<16x8xf32>
    %79 = arith.truncf %78 : vector<16x8xf32> to vector<16x8xbf16>
    %80 = vector.extract_strided_slice %27 {offsets = [0, 64], sizes = [16, 8], strides = [1, 1]} : vector<16x96xf32> to vector<16x8xf32>
    %81 = arith.truncf %80 : vector<16x8xf32> to vector<16x8xbf16>
    %cst_36 = arith.constant dense<0.000000e+00> : vector<16x16xf32>
    %82 = tpu.matmul %77, %79, %cst_36 {dimension_numbers = #tpu.dot_dimension_numbers<[1], [1], [0], [0], [0, 0, 1, 0], [], []>} : vector<16x8xbf16>, vector<16x8xbf16>, vector<16x16xf32> -> vector<16x16xf32>
    %cst_37 = arith.constant 0.353553385 : f32
    %83 = vector.broadcast %cst_37 : f32 to vector<16x16xf32>
    %84 = arith.mulf %82, %83 : vector<16x16xf32>
    %cst_38 = arith.constant dense<0xFF800000> : vector<16xf32>
    %85 = vector.multi_reduction <maximumf>, %84, %cst_38 [1] : vector<16x16xf32> to vector<16xf32>
    %86 = vector.shape_cast %85 : vector<16xf32> to vector<16x1xf32>
    %87 = vector.broadcast %86 : vector<16x1xf32> to vector<16x16xf32>
    %88 = arith.subf %84, %87 : vector<16x16xf32>
    %89 = math.exp %88 : vector<16x16xf32>
    %cst_39 = arith.constant dense<0.000000e+00> : vector<16xf32>
    %90 = vector.multi_reduction <add>, %89, %cst_39 [1] : vector<16x16xf32> to vector<16xf32>
    %91 = vector.shape_cast %90 : vector<16xf32> to vector<16x1xf32>
    %92 = vector.broadcast %91 : vector<16x1xf32> to vector<16x16xf32>
    %93 = arith.divf %89, %92 : vector<16x16xf32>
    %c0_40 = arith.constant 0 : index
    %c2 = arith.constant 2 : index
    %c0_41 = arith.constant 0 : index
    %c0_42 = arith.constant 0 : index
    %94 = vector.load %arg13[%c0_40, %c2, %c0_41, %c0_42] : memref<1x8x16x16xf32, #tpu.memory_space<vmem>>, vector<1x1x16x16xf32>
    %95 = vector.shape_cast %94 : vector<1x1x16x16xf32> to vector<16x16xf32>
    %96 = vector.shape_cast %93 : vector<16x16xf32> to vector<1x1x16x16xf32>
    tpu.vector_store %arg13[%c0_40, %c2, %c0_41, %c0_42], %96 {strides = array<i32>} : memref<1x8x16x16xf32, #tpu.memory_space<vmem>>, vector<1x1x16x16xf32>,
    %97 = arith.truncf %93 : vector<16x16xf32> to vector<16x16xbf16>
    %cst_43 = arith.constant dense<0.000000e+00> : vector<16x8xf32>
    %98 = tpu.matmul %97, %81, %cst_43 {dimension_numbers = #tpu.dot_dimension_numbers<[1], [0], [0], [1], [0, 0, 1, 1], [], []>} : vector<16x16xbf16>, vector<16x8xbf16>, vector<16x8xf32> -> vector<16x8xf32>
    %c32 = arith.constant 32 : index
    %c0_44 = arith.constant 0 : index
    %99 = vector.load %arg14[%c32, %c0_44] : memref<64x8xf32, #tpu.memory_space<vmem>>, vector<16x8xf32>
    tpu.vector_store %arg14[%c32, %c0_44], %98 {strides = array<i32>} : memref<64x8xf32, #tpu.memory_space<vmem>>, vector<16x8xf32>,
    %100 = vector.extract_strided_slice %27 {offsets = [0, 72], sizes = [16, 8], strides = [1, 1]} : vector<16x96xf32> to vector<16x8xf32>
    %101 = arith.truncf %100 : vector<16x8xf32> to vector<16x8xbf16>
    %102 = vector.extract_strided_slice %27 {offsets = [0, 80], sizes = [16, 8], strides = [1, 1]} : vector<16x96xf32> to vector<16x8xf32>
    %103 = arith.truncf %102 : vector<16x8xf32> to vector<16x8xbf16>
    %104 = vector.extract_strided_slice %27 {offsets = [0, 88], sizes = [16, 8], strides = [1, 1]} : vector<16x96xf32> to vector<16x8xf32>
    %105 = arith.truncf %104 : vector<16x8xf32> to vector<16x8xbf16>
    %cst_45 = arith.constant dense<0.000000e+00> : vector<16x16xf32>
    %106 = tpu.matmul %101, %103, %cst_45 {dimension_numbers = #tpu.dot_dimension_numbers<[1], [1], [0], [0], [0, 0, 1, 0], [], []>} : vector<16x8xbf16>, vector<16x8xbf16>, vector<16x16xf32> -> vector<16x16xf32>
    %cst_46 = arith.constant 0.353553385 : f32
    %107 = vector.broadcast %cst_46 : f32 to vector<16x16xf32>
    %108 = arith.mulf %106, %107 : vector<16x16xf32>
    %cst_47 = arith.constant dense<0xFF800000> : vector<16xf32>
    %109 = vector.multi_reduction <maximumf>, %108, %cst_47 [1] : vector<16x16xf32> to vector<16xf32>
    %110 = vector.shape_cast %109 : vector<16xf32> to vector<16x1xf32>
    %111 = vector.broadcast %110 : vector<16x1xf32> to vector<16x16xf32>
    %112 = arith.subf %108, %111 : vector<16x16xf32>
    %113 = math.exp %112 : vector<16x16xf32>
    %cst_48 = arith.constant dense<0.000000e+00> : vector<16xf32>
    %114 = vector.multi_reduction <add>, %113, %cst_48 [1] : vector<16x16xf32> to vector<16xf32>
    %115 = vector.shape_cast %114 : vector<16xf32> to vector<16x1xf32>
    %116 = vector.broadcast %115 : vector<16x1xf32> to vector<16x16xf32>
    %117 = arith.divf %113, %116 : vector<16x16xf32>
    %c0_49 = arith.constant 0 : index
    %c3 = arith.constant 3 : index
    %c0_50 = arith.constant 0 : index
    %c0_51 = arith.constant 0 : index
    %118 = vector.load %arg13[%c0_49, %c3, %c0_50, %c0_51] : memref<1x8x16x16xf32, #tpu.memory_space<vmem>>, vector<1x1x16x16xf32>
    %119 = vector.shape_cast %118 : vector<1x1x16x16xf32> to vector<16x16xf32>
    %120 = vector.shape_cast %117 : vector<16x16xf32> to vector<1x1x16x16xf32>
    tpu.vector_store %arg13[%c0_49, %c3, %c0_50, %c0_51], %120 {strides = array<i32>} : memref<1x8x16x16xf32, #tpu.memory_space<vmem>>, vector<1x1x16x16xf32>,
    %121 = arith.truncf %117 : vector<16x16xf32> to vector<16x16xbf16>
    %cst_52 = arith.constant dense<0.000000e+00> : vector<16x8xf32>
    %122 = tpu.matmul %121, %105, %cst_52 {dimension_numbers = #tpu.dot_dimension_numbers<[1], [0], [0], [1], [0, 0, 1, 1], [], []>} : vector<16x16xbf16>, vector<16x8xbf16>, vector<16x8xf32> -> vector<16x8xf32>
    %c48 = arith.constant 48 : index
    %c0_53 = arith.constant 0 : index
    %123 = vector.load %arg14[%c48, %c0_53] : memref<64x8xf32, #tpu.memory_space<vmem>>, vector<16x8xf32>
    tpu.vector_store %arg14[%c48, %c0_53], %122 {strides = array<i32>} : memref<64x8xf32, #tpu.memory_space<vmem>>, vector<16x8xf32>,
    %c0_54 = arith.constant 0 : index
    %c0_55 = arith.constant 0 : index
    %124 = tpu.strided_load %arg14[%c0_54, %c0_55] {strides = array<i32: 4, 1>} : memref<64x8xf32, #tpu.memory_space<vmem>>, vector<16x8xf32>
    %c1_56 = arith.constant 1 : index
    %c0_57 = arith.constant 0 : index
    %125 = tpu.strided_load %arg14[%c1_56, %c0_57] {strides = array<i32: 4, 1>} : memref<64x8xf32, #tpu.memory_space<vmem>>, vector<16x8xf32>
    %c2_58 = arith.constant 2 : index
    %c0_59 = arith.constant 0 : index
    %126 = tpu.strided_load %arg14[%c2_58, %c0_59] {strides = array<i32: 4, 1>} : memref<64x8xf32, #tpu.memory_space<vmem>>, vector<16x8xf32>
    %c3_60 = arith.constant 3 : index
    %c0_61 = arith.constant 0 : index
    %127 = tpu.strided_load %arg14[%c3_60, %c0_61] {strides = array<i32: 4, 1>} : memref<64x8xf32, #tpu.memory_space<vmem>>, vector<16x8xf32>
    %128 = tpu.concatenate %124, %125, %126, %127 in 1 : vector<16x8xf32>, vector<16x8xf32>, vector<16x8xf32>, vector<16x8xf32> -> vector<16x32xf32>
    %129 = arith.truncf %128 : vector<16x32xf32> to vector<16x32xbf16>
    %c0_62 = arith.constant 0 : index
    %c0_63 = arith.constant 0 : index
    %c0_64 = arith.constant 0 : index
    %130 = vector.load %arg6[%c0_62, %c0_63, %c0_64] : memref<2x32x32xbf16, #tpu.memory_space<vmem>>, vector<1x32x32xbf16>
    %131 = vector.shape_cast %130 : vector<1x32x32xbf16> to vector<32x32xbf16>
    %cst_65 = arith.constant dense<0.000000e+00> : vector<16x32xf32>
    %132 = tpu.matmul %129, %131, %cst_65 {dimension_numbers = #tpu.dot_dimension_numbers<[1], [0], [0], [1], [0, 0, 1, 1], [], []>} : vector<16x32xbf16>, vector<32x32xbf16>, vector<16x32xf32> -> vector<16x32xf32>
    %133 = vector.broadcast %15 : vector<1x32xf32> to vector<16x32xf32>
    %134 = arith.addf %132, %133 : vector<16x32xf32>
    %135 = arith.addf %11, %134 : vector<16x32xf32>
    %cst_66 = arith.constant dense<0.000000e+00> : vector<16xf32>
    %136 = vector.multi_reduction <add>, %135, %cst_66 [1] : vector<16x32xf32> to vector<16xf32>
    %137 = vector.shape_cast %136 : vector<16xf32> to vector<16x1xf32>
    %cst_67 = arith.constant 3.200000e+01 : f32
    %138 = vector.broadcast %cst_67 : f32 to vector<16x1xf32>
    %139 = arith.divf %137, %138 : vector<16x1xf32>
    %140 = vector.broadcast %139 : vector<16x1xf32> to vector<16x32xf32>
    %141 = arith.subf %135, %140 : vector<16x32xf32>
    %142 = arith.mulf %141, %141 : vector<16x32xf32>
    %cst_68 = arith.constant dense<0.000000e+00> : vector<16xf32>
    %143 = vector.multi_reduction <add>, %142, %cst_68 [1] : vector<16x32xf32> to vector<16xf32>
    %144 = vector.shape_cast %143 : vector<16xf32> to vector<16x1xf32>
    %cst_69 = arith.constant 3.200000e+01 : f32
    %145 = vector.broadcast %cst_69 : f32 to vector<16x1xf32>
    %146 = arith.divf %144, %145 : vector<16x1xf32>
    %cst_70 = arith.constant 9.99999971E-10 : f32
    %147 = vector.broadcast %cst_70 : f32 to vector<16x1xf32>
    %148 = arith.addf %146, %147 : vector<16x1xf32>
    %149 = math.rsqrt %148 : vector<16x1xf32>
    %150 = vector.broadcast %149 : vector<16x1xf32> to vector<16x32xf32>
    %151 = arith.mulf %141, %150 : vector<16x32xf32>
    %152 = vector.broadcast %18 : vector<1x32xf32> to vector<16x32xf32>
    %153 = arith.mulf %151, %152 : vector<16x32xf32>
    %154 = vector.broadcast %19 : vector<1x32xf32> to vector<16x32xf32>
    %155 = arith.addf %153, %154 : vector<16x32xf32>
    %156 = arith.truncf %155 : vector<16x32xf32> to vector<16x32xbf16>
    %c0_71 = arith.constant 0 : index
    %c0_72 = arith.constant 0 : index
    %c0_73 = arith.constant 0 : index
    %157 = vector.load %arg7[%c0_71, %c0_72, %c0_73] : memref<2x32x64xbf16, #tpu.memory_space<vmem>>, vector<1x32x64xbf16>
    %158 = vector.shape_cast %157 : vector<1x32x64xbf16> to vector<32x64xbf16>
    %cst_74 = arith.constant dense<0.000000e+00> : vector<16x64xf32>
    %159 = tpu.matmul %156, %158, %cst_74 {dimension_numbers = #tpu.dot_dimension_numbers<[1], [0], [0], [1], [0, 0, 1, 1], [], []>} : vector<16x32xbf16>, vector<32x64xbf16>, vector<16x64xf32> -> vector<16x64xf32>
    %160 = vector.broadcast %16 : vector<1x64xf32> to vector<16x64xf32>
    %161 = arith.addf %159, %160 : vector<16x64xf32>
    %cst_75 = arith.constant 0.000000e+00 : f32
    %162 = vector.broadcast %cst_75 : f32 to vector<16x64xf32>
    %163 = arith.maximumf %161, %162 : vector<16x64xf32>
    %164 = arith.truncf %163 : vector<16x64xf32> to vector<16x64xbf16>
    %c0_76 = arith.constant 0 : index
    %c0_77 = arith.constant 0 : index
    %c0_78 = arith.constant 0 : index
    %165 = vector.load %arg8[%c0_76, %c0_77, %c0_78] : memref<2x64x32xbf16, #tpu.memory_space<vmem>>, vector<1x64x32xbf16>
    %166 = vector.shape_cast %165 : vector<1x64x32xbf16> to vector<64x32xbf16>
    %cst_79 = arith.constant dense<0.000000e+00> : vector<16x32xf32>
    %167 = tpu.matmul %164, %166, %cst_79 {dimension_numbers = #tpu.dot_dimension_numbers<[1], [0], [0], [1], [0, 0, 1, 1], [], []>} : vector<16x64xbf16>, vector<64x32xbf16>, vector<16x32xf32> -> vector<16x32xf32>
    %168 = vector.broadcast %17 : vector<1x32xf32> to vector<16x32xf32>
    %169 = arith.addf %167, %168 : vector<16x32xf32>
    %170 = arith.addf %155, %169 : vector<16x32xf32>
    %cst_80 = arith.constant dense<0.000000e+00> : vector<16xf32>
    %171 = vector.multi_reduction <add>, %170, %cst_80 [1] : vector<16x32xf32> to vector<16xf32>
    %172 = vector.shape_cast %171 : vector<16xf32> to vector<16x1xf32>
    %cst_81 = arith.constant 3.200000e+01 : f32
    %173 = vector.broadcast %cst_81 : f32 to vector<16x1xf32>
    %174 = arith.divf %172, %173 : vector<16x1xf32>
    %175 = vector.broadcast %174 : vector<16x1xf32> to vector<16x32xf32>
    %176 = arith.subf %170, %175 : vector<16x32xf32>
    %177 = arith.mulf %176, %176 : vector<16x32xf32>
    %cst_82 = arith.constant dense<0.000000e+00> : vector<16xf32>
    %178 = vector.multi_reduction <add>, %177, %cst_82 [1] : vector<16x32xf32> to vector<16xf32>
    %179 = vector.shape_cast %178 : vector<16xf32> to vector<16x1xf32>
    %cst_83 = arith.constant 3.200000e+01 : f32
    %180 = vector.broadcast %cst_83 : f32 to vector<16x1xf32>
    %181 = arith.divf %179, %180 : vector<16x1xf32>
    %cst_84 = arith.constant 9.99999971E-10 : f32
    %182 = vector.broadcast %cst_84 : f32 to vector<16x1xf32>
    %183 = arith.addf %181, %182 : vector<16x1xf32>
    %184 = math.rsqrt %183 : vector<16x1xf32>
    %185 = vector.broadcast %184 : vector<16x1xf32> to vector<16x32xf32>
    %186 = arith.mulf %176, %185 : vector<16x32xf32>
    %187 = vector.broadcast %20 : vector<1x32xf32> to vector<16x32xf32>
    %188 = arith.mulf %186, %187 : vector<16x32xf32>
    %189 = vector.broadcast %21 : vector<1x32xf32> to vector<16x32xf32>
    %190 = arith.addf %188, %189 : vector<16x32xf32>
    %c1_85 = arith.constant 1 : index
    %c0_86 = arith.constant 0 : index
    %c0_87 = arith.constant 0 : index
    %191 = vector.load %arg9[%c1_85, %c0_86, %c0_87] : memref<2x8x96xf32, #tpu.memory_space<vmem>>, vector<1x8x96xf32>
    %192 = vector.shape_cast %191 : vector<1x8x96xf32> to vector<8x96xf32>
    %193 = vector.extract_strided_slice %192 {offsets = [0, 0], sizes = [1, 96], strides = [1, 1]} : vector<8x96xf32> to vector<1x96xf32>
    %194 = vector.extract_strided_slice %192 {offsets = [1, 0], sizes = [1, 32], strides = [1, 1]} : vector<8x96xf32> to vector<1x32xf32>
    %195 = vector.extract_strided_slice %192 {offsets = [2, 0], sizes = [1, 64], strides = [1, 1]} : vector<8x96xf32> to vector<1x64xf32>
    %196 = vector.extract_strided_slice %192 {offsets = [3, 0], sizes = [1, 32], strides = [1, 1]} : vector<8x96xf32> to vector<1x32xf32>
    %197 = vector.extract_strided_slice %192 {offsets = [4, 0], sizes = [1, 32], strides = [1, 1]} : vector<8x96xf32> to vector<1x32xf32>
    %198 = vector.extract_strided_slice %192 {offsets = [5, 0], sizes = [1, 32], strides = [1, 1]} : vector<8x96xf32> to vector<1x32xf32>
    %199 = vector.extract_strided_slice %192 {offsets = [6, 0], sizes = [1, 32], strides = [1, 1]} : vector<8x96xf32> to vector<1x32xf32>
    %200 = vector.extract_strided_slice %192 {offsets = [7, 0], sizes = [1, 32], strides = [1, 1]} : vector<8x96xf32> to vector<1x32xf32>
    %201 = arith.truncf %190 : vector<16x32xf32> to vector<16x32xbf16>
    %c1_88 = arith.constant 1 : index
    %c0_89 = arith.constant 0 : index
    %c0_90 = arith.constant 0 : index
    %202 = vector.load %arg5[%c1_88, %c0_89, %c0_90] : memref<2x32x96xbf16, #tpu.memory_space<vmem>>, vector<1x32x96xbf16>
    %203 = vector.shape_cast %202 : vector<1x32x96xbf16> to vector<32x96xbf16>
    %cst_91 = arith.constant dense<0.000000e+00> : vector<16x96xf32>
    %204 = tpu.matmul %201, %203, %cst_91 {dimension_numbers = #tpu.dot_dimension_numbers<[1], [0], [0], [1], [0, 0, 1, 1], [], []>} : vector<16x32xbf16>, vector<32x96xbf16>, vector<16x96xf32> -> vector<16x96xf32>
    %205 = vector.broadcast %193 : vector<1x96xf32> to vector<16x96xf32>
    %206 = arith.addf %204, %205 : vector<16x96xf32>
    %207 = vector.extract_strided_slice %206 {offsets = [0, 0], sizes = [16, 8], strides = [1, 1]} : vector<16x96xf32> to vector<16x8xf32>
    %208 = arith.truncf %207 : vector<16x8xf32> to vector<16x8xbf16>
    %209 = vector.extract_strided_slice %206 {offsets = [0, 8], sizes = [16, 8], strides = [1, 1]} : vector<16x96xf32> to vector<16x8xf32>
    %210 = arith.truncf %209 : vector<16x8xf32> to vector<16x8xbf16>
    %211 = vector.extract_strided_slice %206 {offsets = [0, 16], sizes = [16, 8], strides = [1, 1]} : vector<16x96xf32> to vector<16x8xf32>
    %212 = arith.truncf %211 : vector<16x8xf32> to vector<16x8xbf16>
    %cst_92 = arith.constant dense<0.000000e+00> : vector<16x16xf32>
    %213 = tpu.matmul %208, %210, %cst_92 {dimension_numbers = #tpu.dot_dimension_numbers<[1], [1], [0], [0], [0, 0, 1, 0], [], []>} : vector<16x8xbf16>, vector<16x8xbf16>, vector<16x16xf32> -> vector<16x16xf32>
    %cst_93 = arith.constant 0.353553385 : f32
    %214 = vector.broadcast %cst_93 : f32 to vector<16x16xf32>
    %215 = arith.mulf %213, %214 : vector<16x16xf32>
    %cst_94 = arith.constant dense<0xFF800000> : vector<16xf32>
    %216 = vector.multi_reduction <maximumf>, %215, %cst_94 [1] : vector<16x16xf32> to vector<16xf32>
    %217 = vector.shape_cast %216 : vector<16xf32> to vector<16x1xf32>
    %218 = vector.broadcast %217 : vector<16x1xf32> to vector<16x16xf32>
    %219 = arith.subf %215, %218 : vector<16x16xf32>
    %220 = math.exp %219 : vector<16x16xf32>
    %cst_95 = arith.constant dense<0.000000e+00> : vector<16xf32>
    %221 = vector.multi_reduction <add>, %220, %cst_95 [1] : vector<16x16xf32> to vector<16xf32>
    %222 = vector.shape_cast %221 : vector<16xf32> to vector<16x1xf32>
    %223 = vector.broadcast %222 : vector<16x1xf32> to vector<16x16xf32>
    %224 = arith.divf %220, %223 : vector<16x16xf32>
    %c0_96 = arith.constant 0 : index
    %c4 = arith.constant 4 : index
    %c0_97 = arith.constant 0 : index
    %c0_98 = arith.constant 0 : index
    %225 = vector.load %arg13[%c0_96, %c4, %c0_97, %c0_98] : memref<1x8x16x16xf32, #tpu.memory_space<vmem>>, vector<1x1x16x16xf32>
    %226 = vector.shape_cast %225 : vector<1x1x16x16xf32> to vector<16x16xf32>
    %227 = vector.shape_cast %224 : vector<16x16xf32> to vector<1x1x16x16xf32>
    tpu.vector_store %arg13[%c0_96, %c4, %c0_97, %c0_98], %227 {strides = array<i32>} : memref<1x8x16x16xf32, #tpu.memory_space<vmem>>, vector<1x1x16x16xf32>,
    %228 = arith.truncf %224 : vector<16x16xf32> to vector<16x16xbf16>
    %cst_99 = arith.constant dense<0.000000e+00> : vector<16x8xf32>
    %229 = tpu.matmul %228, %212, %cst_99 {dimension_numbers = #tpu.dot_dimension_numbers<[1], [0], [0], [1], [0, 0, 1, 1], [], []>} : vector<16x16xbf16>, vector<16x8xbf16>, vector<16x8xf32> -> vector<16x8xf32>
    %c0_100 = arith.constant 0 : index
    %c0_101 = arith.constant 0 : index
    %230 = vector.load %arg14[%c0_100, %c0_101] : memref<64x8xf32, #tpu.memory_space<vmem>>, vector<16x8xf32>
    tpu.vector_store %arg14[%c0_100, %c0_101], %229 {strides = array<i32>} : memref<64x8xf32, #tpu.memory_space<vmem>>, vector<16x8xf32>,
    %231 = vector.extract_strided_slice %206 {offsets = [0, 24], sizes = [16, 8], strides = [1, 1]} : vector<16x96xf32> to vector<16x8xf32>
    %232 = arith.truncf %231 : vector<16x8xf32> to vector<16x8xbf16>
    %233 = vector.extract_strided_slice %206 {offsets = [0, 32], sizes = [16, 8], strides = [1, 1]} : vector<16x96xf32> to vector<16x8xf32>
    %234 = arith.truncf %233 : vector<16x8xf32> to vector<16x8xbf16>
    %235 = vector.extract_strided_slice %206 {offsets = [0, 40], sizes = [16, 8], strides = [1, 1]} : vector<16x96xf32> to vector<16x8xf32>
    %236 = arith.truncf %235 : vector<16x8xf32> to vector<16x8xbf16>
    %cst_102 = arith.constant dense<0.000000e+00> : vector<16x16xf32>
    %237 = tpu.matmul %232, %234, %cst_102 {dimension_numbers = #tpu.dot_dimension_numbers<[1], [1], [0], [0], [0, 0, 1, 0], [], []>} : vector<16x8xbf16>, vector<16x8xbf16>, vector<16x16xf32> -> vector<16x16xf32>
    %cst_103 = arith.constant 0.353553385 : f32
    %238 = vector.broadcast %cst_103 : f32 to vector<16x16xf32>
    %239 = arith.mulf %237, %238 : vector<16x16xf32>
    %cst_104 = arith.constant dense<0xFF800000> : vector<16xf32>
    %240 = vector.multi_reduction <maximumf>, %239, %cst_104 [1] : vector<16x16xf32> to vector<16xf32>
    %241 = vector.shape_cast %240 : vector<16xf32> to vector<16x1xf32>
    %242 = vector.broadcast %241 : vector<16x1xf32> to vector<16x16xf32>
    %243 = arith.subf %239, %242 : vector<16x16xf32>
    %244 = math.exp %243 : vector<16x16xf32>
    %cst_105 = arith.constant dense<0.000000e+00> : vector<16xf32>
    %245 = vector.multi_reduction <add>, %244, %cst_105 [1] : vector<16x16xf32> to vector<16xf32>
    %246 = vector.shape_cast %245 : vector<16xf32> to vector<16x1xf32>
    %247 = vector.broadcast %246 : vector<16x1xf32> to vector<16x16xf32>
    %248 = arith.divf %244, %247 : vector<16x16xf32>
    %c0_106 = arith.constant 0 : index
    %c5 = arith.constant 5 : index
    %c0_107 = arith.constant 0 : index
    %c0_108 = arith.constant 0 : index
    %249 = vector.load %arg13[%c0_106, %c5, %c0_107, %c0_108] : memref<1x8x16x16xf32, #tpu.memory_space<vmem>>, vector<1x1x16x16xf32>
    %250 = vector.shape_cast %249 : vector<1x1x16x16xf32> to vector<16x16xf32>
    %251 = vector.shape_cast %248 : vector<16x16xf32> to vector<1x1x16x16xf32>
    tpu.vector_store %arg13[%c0_106, %c5, %c0_107, %c0_108], %251 {strides = array<i32>} : memref<1x8x16x16xf32, #tpu.memory_space<vmem>>, vector<1x1x16x16xf32>,
    %252 = arith.truncf %248 : vector<16x16xf32> to vector<16x16xbf16>
    %cst_109 = arith.constant dense<0.000000e+00> : vector<16x8xf32>
    %253 = tpu.matmul %252, %236, %cst_109 {dimension_numbers = #tpu.dot_dimension_numbers<[1], [0], [0], [1], [0, 0, 1, 1], [], []>} : vector<16x16xbf16>, vector<16x8xbf16>, vector<16x8xf32> -> vector<16x8xf32>
    %c16_110 = arith.constant 16 : index
    %c0_111 = arith.constant 0 : index
    %254 = vector.load %arg14[%c16_110, %c0_111] : memref<64x8xf32, #tpu.memory_space<vmem>>, vector<16x8xf32>
    tpu.vector_store %arg14[%c16_110, %c0_111], %253 {strides = array<i32>} : memref<64x8xf32, #tpu.memory_space<vmem>>, vector<16x8xf32>,
    %255 = vector.extract_strided_slice %206 {offsets = [0, 48], sizes = [16, 8], strides = [1, 1]} : vector<16x96xf32> to vector<16x8xf32>
    %256 = arith.truncf %255 : vector<16x8xf32> to vector<16x8xbf16>
    %257 = vector.extract_strided_slice %206 {offsets = [0, 56], sizes = [16, 8], strides = [1, 1]} : vector<16x96xf32> to vector<16x8xf32>
    %258 = arith.truncf %257 : vector<16x8xf32> to vector<16x8xbf16>
    %259 = vector.extract_strided_slice %206 {offsets = [0, 64], sizes = [16, 8], strides = [1, 1]} : vector<16x96xf32> to vector<16x8xf32>
    %260 = arith.truncf %259 : vector<16x8xf32> to vector<16x8xbf16>
    %cst_112 = arith.constant dense<0.000000e+00> : vector<16x16xf32>
    %261 = tpu.matmul %256, %258, %cst_112 {dimension_numbers = #tpu.dot_dimension_numbers<[1], [1], [0], [0], [0, 0, 1, 0], [], []>} : vector<16x8xbf16>, vector<16x8xbf16>, vector<16x16xf32> -> vector<16x16xf32>
    %cst_113 = arith.constant 0.353553385 : f32
    %262 = vector.broadcast %cst_113 : f32 to vector<16x16xf32>
    %263 = arith.mulf %261, %262 : vector<16x16xf32>
    %cst_114 = arith.constant dense<0xFF800000> : vector<16xf32>
    %264 = vector.multi_reduction <maximumf>, %263, %cst_114 [1] : vector<16x16xf32> to vector<16xf32>
    %265 = vector.shape_cast %264 : vector<16xf32> to vector<16x1xf32>
    %266 = vector.broadcast %265 : vector<16x1xf32> to vector<16x16xf32>
    %267 = arith.subf %263, %266 : vector<16x16xf32>
    %268 = math.exp %267 : vector<16x16xf32>
    %cst_115 = arith.constant dense<0.000000e+00> : vector<16xf32>
    %269 = vector.multi_reduction <add>, %268, %cst_115 [1] : vector<16x16xf32> to vector<16xf32>
    %270 = vector.shape_cast %269 : vector<16xf32> to vector<16x1xf32>
    %271 = vector.broadcast %270 : vector<16x1xf32> to vector<16x16xf32>
    %272 = arith.divf %268, %271 : vector<16x16xf32>
    %c0_116 = arith.constant 0 : index
    %c6 = arith.constant 6 : index
    %c0_117 = arith.constant 0 : index
    %c0_118 = arith.constant 0 : index
    %273 = vector.load %arg13[%c0_116, %c6, %c0_117, %c0_118] : memref<1x8x16x16xf32, #tpu.memory_space<vmem>>, vector<1x1x16x16xf32>
    %274 = vector.shape_cast %273 : vector<1x1x16x16xf32> to vector<16x16xf32>
    %275 = vector.shape_cast %272 : vector<16x16xf32> to vector<1x1x16x16xf32>
    tpu.vector_store %arg13[%c0_116, %c6, %c0_117, %c0_118], %275 {strides = array<i32>} : memref<1x8x16x16xf32, #tpu.memory_space<vmem>>, vector<1x1x16x16xf32>,
    %276 = arith.truncf %272 : vector<16x16xf32> to vector<16x16xbf16>
    %cst_119 = arith.constant dense<0.000000e+00> : vector<16x8xf32>
    %277 = tpu.matmul %276, %260, %cst_119 {dimension_numbers = #tpu.dot_dimension_numbers<[1], [0], [0], [1], [0, 0, 1, 1], [], []>} : vector<16x16xbf16>, vector<16x8xbf16>, vector<16x8xf32> -> vector<16x8xf32>
    %c32_120 = arith.constant 32 : index
    %c0_121 = arith.constant 0 : index
    %278 = vector.load %arg14[%c32_120, %c0_121] : memref<64x8xf32, #tpu.memory_space<vmem>>, vector<16x8xf32>
    tpu.vector_store %arg14[%c32_120, %c0_121], %277 {strides = array<i32>} : memref<64x8xf32, #tpu.memory_space<vmem>>, vector<16x8xf32>,
    %279 = vector.extract_strided_slice %206 {offsets = [0, 72], sizes = [16, 8], strides = [1, 1]} : vector<16x96xf32> to vector<16x8xf32>
    %280 = arith.truncf %279 : vector<16x8xf32> to vector<16x8xbf16>
    %281 = vector.extract_strided_slice %206 {offsets = [0, 80], sizes = [16, 8], strides = [1, 1]} : vector<16x96xf32> to vector<16x8xf32>
    %282 = arith.truncf %281 : vector<16x8xf32> to vector<16x8xbf16>
    %283 = vector.extract_strided_slice %206 {offsets = [0, 88], sizes = [16, 8], strides = [1, 1]} : vector<16x96xf32> to vector<16x8xf32>
    %284 = arith.truncf %283 : vector<16x8xf32> to vector<16x8xbf16>
    %cst_122 = arith.constant dense<0.000000e+00> : vector<16x16xf32>
    %285 = tpu.matmul %280, %282, %cst_122 {dimension_numbers = #tpu.dot_dimension_numbers<[1], [1], [0], [0], [0, 0, 1, 0], [], []>} : vector<16x8xbf16>, vector<16x8xbf16>, vector<16x16xf32> -> vector<16x16xf32>
    %cst_123 = arith.constant 0.353553385 : f32
    %286 = vector.broadcast %cst_123 : f32 to vector<16x16xf32>
    %287 = arith.mulf %285, %286 : vector<16x16xf32>
    %cst_124 = arith.constant dense<0xFF800000> : vector<16xf32>
    %288 = vector.multi_reduction <maximumf>, %287, %cst_124 [1] : vector<16x16xf32> to vector<16xf32>
    %289 = vector.shape_cast %288 : vector<16xf32> to vector<16x1xf32>
    %290 = vector.broadcast %289 : vector<16x1xf32> to vector<16x16xf32>
    %291 = arith.subf %287, %290 : vector<16x16xf32>
    %292 = math.exp %291 : vector<16x16xf32>
    %cst_125 = arith.constant dense<0.000000e+00> : vector<16xf32>
    %293 = vector.multi_reduction <add>, %292, %cst_125 [1] : vector<16x16xf32> to vector<16xf32>
    %294 = vector.shape_cast %293 : vector<16xf32> to vector<16x1xf32>
    %295 = vector.broadcast %294 : vector<16x1xf32> to vector<16x16xf32>
    %296 = arith.divf %292, %295 : vector<16x16xf32>
    %c0_126 = arith.constant 0 : index
    %c7 = arith.constant 7 : index
    %c0_127 = arith.constant 0 : index
    %c0_128 = arith.constant 0 : index
    %297 = vector.load %arg13[%c0_126, %c7, %c0_127, %c0_128] : memref<1x8x16x16xf32, #tpu.memory_space<vmem>>, vector<1x1x16x16xf32>
    %298 = vector.shape_cast %297 : vector<1x1x16x16xf32> to vector<16x16xf32>
    %299 = vector.shape_cast %296 : vector<16x16xf32> to vector<1x1x16x16xf32>
    tpu.vector_store %arg13[%c0_126, %c7, %c0_127, %c0_128], %299 {strides = array<i32>} : memref<1x8x16x16xf32, #tpu.memory_space<vmem>>, vector<1x1x16x16xf32>,
    %300 = arith.truncf %296 : vector<16x16xf32> to vector<16x16xbf16>
    %cst_129 = arith.constant dense<0.000000e+00> : vector<16x8xf32>
    %301 = tpu.matmul %300, %284, %cst_129 {dimension_numbers = #tpu.dot_dimension_numbers<[1], [0], [0], [1], [0, 0, 1, 1], [], []>} : vector<16x16xbf16>, vector<16x8xbf16>, vector<16x8xf32> -> vector<16x8xf32>
    %c48_130 = arith.constant 48 : index
    %c0_131 = arith.constant 0 : index
    %302 = vector.load %arg14[%c48_130, %c0_131] : memref<64x8xf32, #tpu.memory_space<vmem>>, vector<16x8xf32>
    tpu.vector_store %arg14[%c48_130, %c0_131], %301 {strides = array<i32>} : memref<64x8xf32, #tpu.memory_space<vmem>>, vector<16x8xf32>,
    %c0_132 = arith.constant 0 : index
    %c0_133 = arith.constant 0 : index
    %303 = tpu.strided_load %arg14[%c0_132, %c0_133] {strides = array<i32: 4, 1>} : memref<64x8xf32, #tpu.memory_space<vmem>>, vector<16x8xf32>
    %c1_134 = arith.constant 1 : index
    %c0_135 = arith.constant 0 : index
    %304 = tpu.strided_load %arg14[%c1_134, %c0_135] {strides = array<i32: 4, 1>} : memref<64x8xf32, #tpu.memory_space<vmem>>, vector<16x8xf32>
    %c2_136 = arith.constant 2 : index
    %c0_137 = arith.constant 0 : index
    %305 = tpu.strided_load %arg14[%c2_136, %c0_137] {strides = array<i32: 4, 1>} : memref<64x8xf32, #tpu.memory_space<vmem>>, vector<16x8xf32>
    %c3_138 = arith.constant 3 : index
    %c0_139 = arith.constant 0 : index
    %306 = tpu.strided_load %arg14[%c3_138, %c0_139] {strides = array<i32: 4, 1>} : memref<64x8xf32, #tpu.memory_space<vmem>>, vector<16x8xf32>
    %307 = tpu.concatenate %303, %304, %305, %306 in 1 : vector<16x8xf32>, vector<16x8xf32>, vector<16x8xf32>, vector<16x8xf32> -> vector<16x32xf32>
    %308 = arith.truncf %307 : vector<16x32xf32> to vector<16x32xbf16>
    %c1_140 = arith.constant 1 : index
    %c0_141 = arith.constant 0 : index
    %c0_142 = arith.constant 0 : index
    %309 = vector.load %arg6[%c1_140, %c0_141, %c0_142] : memref<2x32x32xbf16, #tpu.memory_space<vmem>>, vector<1x32x32xbf16>
    %310 = vector.shape_cast %309 : vector<1x32x32xbf16> to vector<32x32xbf16>
    %cst_143 = arith.constant dense<0.000000e+00> : vector<16x32xf32>
    %311 = tpu.matmul %308, %310, %cst_143 {dimension_numbers = #tpu.dot_dimension_numbers<[1], [0], [0], [1], [0, 0, 1, 1], [], []>} : vector<16x32xbf16>, vector<32x32xbf16>, vector<16x32xf32> -> vector<16x32xf32>
    %312 = vector.broadcast %194 : vector<1x32xf32> to vector<16x32xf32>
    %313 = arith.addf %311, %312 : vector<16x32xf32>
    %314 = arith.addf %190, %313 : vector<16x32xf32>
    %cst_144 = arith.constant dense<0.000000e+00> : vector<16xf32>
    %315 = vector.multi_reduction <add>, %314, %cst_144 [1] : vector<16x32xf32> to vector<16xf32>
    %316 = vector.shape_cast %315 : vector<16xf32> to vector<16x1xf32>
    %cst_145 = arith.constant 3.200000e+01 : f32
    %317 = vector.broadcast %cst_145 : f32 to vector<16x1xf32>
    %318 = arith.divf %316, %317 : vector<16x1xf32>
    %319 = vector.broadcast %318 : vector<16x1xf32> to vector<16x32xf32>
    %320 = arith.subf %314, %319 : vector<16x32xf32>
    %321 = arith.mulf %320, %320 : vector<16x32xf32>
    %cst_146 = arith.constant dense<0.000000e+00> : vector<16xf32>
    %322 = vector.multi_reduction <add>, %321, %cst_146 [1] : vector<16x32xf32> to vector<16xf32>
    %323 = vector.shape_cast %322 : vector<16xf32> to vector<16x1xf32>
    %cst_147 = arith.constant 3.200000e+01 : f32
    %324 = vector.broadcast %cst_147 : f32 to vector<16x1xf32>
    %325 = arith.divf %323, %324 : vector<16x1xf32>
    %cst_148 = arith.constant 9.99999971E-10 : f32
    %326 = vector.broadcast %cst_148 : f32 to vector<16x1xf32>
    %327 = arith.addf %325, %326 : vector<16x1xf32>
    %328 = math.rsqrt %327 : vector<16x1xf32>
    %329 = vector.broadcast %328 : vector<16x1xf32> to vector<16x32xf32>
    %330 = arith.mulf %320, %329 : vector<16x32xf32>
    %331 = vector.broadcast %197 : vector<1x32xf32> to vector<16x32xf32>
    %332 = arith.mulf %330, %331 : vector<16x32xf32>
    %333 = vector.broadcast %198 : vector<1x32xf32> to vector<16x32xf32>
    %334 = arith.addf %332, %333 : vector<16x32xf32>
    %335 = arith.truncf %334 : vector<16x32xf32> to vector<16x32xbf16>
    %c1_149 = arith.constant 1 : index
    %c0_150 = arith.constant 0 : index
    %c0_151 = arith.constant 0 : index
    %336 = vector.load %arg7[%c1_149, %c0_150, %c0_151] : memref<2x32x64xbf16, #tpu.memory_space<vmem>>, vector<1x32x64xbf16>
    %337 = vector.shape_cast %336 : vector<1x32x64xbf16> to vector<32x64xbf16>
    %cst_152 = arith.constant dense<0.000000e+00> : vector<16x64xf32>
    %338 = tpu.matmul %335, %337, %cst_152 {dimension_numbers = #tpu.dot_dimension_numbers<[1], [0], [0], [1], [0, 0, 1, 1], [], []>} : vector<16x32xbf16>, vector<32x64xbf16>, vector<16x64xf32> -> vector<16x64xf32>
    %339 = vector.broadcast %195 : vector<1x64xf32> to vector<16x64xf32>
    %340 = arith.addf %338, %339 : vector<16x64xf32>
    %cst_153 = arith.constant 0.000000e+00 : f32
    %341 = vector.broadcast %cst_153 : f32 to vector<16x64xf32>
    %342 = arith.maximumf %340, %341 : vector<16x64xf32>
    %343 = arith.truncf %342 : vector<16x64xf32> to vector<16x64xbf16>
    %c1_154 = arith.constant 1 : index
    %c0_155 = arith.constant 0 : index
    %c0_156 = arith.constant 0 : index
    %344 = vector.load %arg8[%c1_154, %c0_155, %c0_156] : memref<2x64x32xbf16, #tpu.memory_space<vmem>>, vector<1x64x32xbf16>
    %345 = vector.shape_cast %344 : vector<1x64x32xbf16> to vector<64x32xbf16>
    %cst_157 = arith.constant dense<0.000000e+00> : vector<16x32xf32>
    %346 = tpu.matmul %343, %345, %cst_157 {dimension_numbers = #tpu.dot_dimension_numbers<[1], [0], [0], [1], [0, 0, 1, 1], [], []>} : vector<16x64xbf16>, vector<64x32xbf16>, vector<16x32xf32> -> vector<16x32xf32>
    %347 = vector.broadcast %196 : vector<1x32xf32> to vector<16x32xf32>
    %348 = arith.addf %346, %347 : vector<16x32xf32>
    %349 = arith.addf %334, %348 : vector<16x32xf32>
    %cst_158 = arith.constant dense<0.000000e+00> : vector<16xf32>
    %350 = vector.multi_reduction <add>, %349, %cst_158 [1] : vector<16x32xf32> to vector<16xf32>
    %351 = vector.shape_cast %350 : vector<16xf32> to vector<16x1xf32>
    %cst_159 = arith.constant 3.200000e+01 : f32
    %352 = vector.broadcast %cst_159 : f32 to vector<16x1xf32>
    %353 = arith.divf %351, %352 : vector<16x1xf32>
    %354 = vector.broadcast %353 : vector<16x1xf32> to vector<16x32xf32>
    %355 = arith.subf %349, %354 : vector<16x32xf32>
    %356 = arith.mulf %355, %355 : vector<16x32xf32>
    %cst_160 = arith.constant dense<0.000000e+00> : vector<16xf32>
    %357 = vector.multi_reduction <add>, %356, %cst_160 [1] : vector<16x32xf32> to vector<16xf32>
    %358 = vector.shape_cast %357 : vector<16xf32> to vector<16x1xf32>
    %cst_161 = arith.constant 3.200000e+01 : f32
    %359 = vector.broadcast %cst_161 : f32 to vector<16x1xf32>
    %360 = arith.divf %358, %359 : vector<16x1xf32>
    %cst_162 = arith.constant 9.99999971E-10 : f32
    %361 = vector.broadcast %cst_162 : f32 to vector<16x1xf32>
    %362 = arith.addf %360, %361 : vector<16x1xf32>
    %363 = math.rsqrt %362 : vector<16x1xf32>
    %364 = vector.broadcast %363 : vector<16x1xf32> to vector<16x32xf32>
    %365 = arith.mulf %355, %364 : vector<16x32xf32>
    %366 = vector.broadcast %199 : vector<1x32xf32> to vector<16x32xf32>
    %367 = arith.mulf %365, %366 : vector<16x32xf32>
    %368 = vector.broadcast %200 : vector<1x32xf32> to vector<16x32xf32>
    %369 = arith.addf %367, %368 : vector<16x32xf32>
    %370 = arith.truncf %369 : vector<16x32xf32> to vector<16x32xbf16>
    %c0_163 = arith.constant 0 : index
    %c0_164 = arith.constant 0 : index
    %371 = vector.load %arg10[%c0_163, %c0_164] : memref<32x4xbf16, #tpu.memory_space<vmem>>, vector<32x4xbf16>
    %cst_165 = arith.constant dense<0.000000e+00> : vector<16x4xf32>
    %372 = tpu.matmul %370, %371, %cst_165 {dimension_numbers = #tpu.dot_dimension_numbers<[1], [0], [0], [1], [0, 0, 1, 1], [], []>} : vector<16x32xbf16>, vector<32x4xbf16>, vector<16x4xf32> -> vector<16x4xf32>
    %c0_166 = arith.constant 0 : index
    %c0_167 = arith.constant 0 : index
    %373 = vector.load %arg11[%c0_166, %c0_167] : memref<1x4xf32, #tpu.memory_space<vmem>>, vector<1x4xf32>
    %374 = vector.broadcast %373 : vector<1x4xf32> to vector<16x4xf32>
    %375 = arith.addf %372, %374 : vector<16x4xf32>
    %c0_168 = arith.constant 0 : index
    %c0_169 = arith.constant 0 : index
    %c0_170 = arith.constant 0 : index
    %376 = vector.load %arg12[%c0_168, %c0_169, %c0_170] : memref<1x16x4xf32, #tpu.memory_space<vmem>>, vector<1x16x4xf32>
    %377 = vector.shape_cast %376 : vector<1x16x4xf32> to vector<16x4xf32>
    %378 = vector.shape_cast %375 : vector<16x4xf32> to vector<1x16x4xf32>
    tpu.vector_store %arg12[%c0_168, %c0_169, %c0_170], %378 {strides = array<i32>} : memref<1x16x4xf32, #tpu.memory_space<vmem>>, vector<1x16x4xf32>,
    return
  }
  func.func @transform_0(%arg0: i32) -> (i32, i32, i32) {
    %c0_i32 = arith.constant 0 : i32
    %c0_i32_0 = arith.constant 0 : i32
    %c0_i32_1 = arith.constant 0 : i32
    return %arg0, %c0_i32, %c0_i32_0 : i32, i32, i32
  }
  func.func @transform_1(%arg0: i32) -> (i32, i32) {
    %c0_i32 = arith.constant 0 : i32
    %c0_i32_0 = arith.constant 0 : i32
    %c0_i32_1 = arith.constant 0 : i32
    return %c0_i32, %c0_i32_0 : i32, i32
  }
  func.func @transform_2(%arg0: i32) -> (i32, i32) {
    %c0_i32 = arith.constant 0 : i32
    %c0_i32_0 = arith.constant 0 : i32
    %c0_i32_1 = arith.constant 0 : i32
    return %c0_i32, %c0_i32_0 : i32, i32
  }
  func.func @transform_3(%arg0: i32) -> (i32, i32) {
    %c0_i32 = arith.constant 0 : i32
    %c0_i32_0 = arith.constant 0 : i32
    %c0_i32_1 = arith.constant 0 : i32
    return %c0_i32, %c0_i32_0 : i32, i32
  }
  func.func @transform_4(%arg0: i32) -> (i32, i32, i32) {
    %c0_i32 = arith.constant 0 : i32
    %c0_i32_0 = arith.constant 0 : i32
    %c0_i32_1 = arith.constant 0 : i32
    %c0_i32_2 = arith.constant 0 : i32
    return %c0_i32, %c0_i32_0, %c0_i32_1 : i32, i32, i32
  }
  func.func @transform_5(%arg0: i32) -> (i32, i32, i32) {
    %c0_i32 = arith.constant 0 : i32
    %c0_i32_0 = arith.constant 0 : i32
    %c0_i32_1 = arith.constant 0 : i32
    %c0_i32_2 = arith.constant 0 : i32
    return %c0_i32, %c0_i32_0, %c0_i32_1 : i32, i32, i32
  }
  func.func @transform_6(%arg0: i32) -> (i32, i32, i32) {
    %c0_i32 = arith.constant 0 : i32
    %c0_i32_0 = arith.constant 0 : i32
    %c0_i32_1 = arith.constant 0 : i32
    %c0_i32_2 = arith.constant 0 : i32
    return %c0_i32, %c0_i32_0, %c0_i32_1 : i32, i32, i32
  }
  func.func @transform_7(%arg0: i32) -> (i32, i32, i32) {
    %c0_i32 = arith.constant 0 : i32
    %c0_i32_0 = arith.constant 0 : i32
    %c0_i32_1 = arith.constant 0 : i32
    %c0_i32_2 = arith.constant 0 : i32
    return %c0_i32, %c0_i32_0, %c0_i32_1 : i32, i32, i32
  }
  func.func @transform_8(%arg0: i32) -> (i32, i32, i32) {
    %c0_i32 = arith.constant 0 : i32
    %c0_i32_0 = arith.constant 0 : i32
    %c0_i32_1 = arith.constant 0 : i32
    %c0_i32_2 = arith.constant 0 : i32
    return %c0_i32, %c0_i32_0, %c0_i32_1 : i32, i32, i32
  }
  func.func @transform_9(%arg0: i32) -> (i32, i32) {
    %c0_i32 = arith.constant 0 : i32
    %c0_i32_0 = arith.constant 0 : i32
    %c0_i32_1 = arith.constant 0 : i32
    return %c0_i32, %c0_i32_0 : i32, i32
  }
  func.func @transform_10(%arg0: i32) -> (i32, i32) {
    %c0_i32 = arith.constant 0 : i32
    %c0_i32_0 = arith.constant 0 : i32
    %c0_i32_1 = arith.constant 0 : i32
    return %c0_i32, %c0_i32_0 : i32, i32
  }
  func.func @transform_11(%arg0: i32) -> (i32, i32, i32) {
    %c0_i32 = arith.constant 0 : i32
    %c0_i32_0 = arith.constant 0 : i32
    %c0_i32_1 = arith.constant 0 : i32
    return %arg0, %c0_i32, %c0_i32_0 : i32, i32, i32
  }
  func.func @transform_12(%arg0: i32) -> (i32, i32, i32, i32) {
    %c0_i32 = arith.constant 0 : i32
    %c0_i32_0 = arith.constant 0 : i32
    %c0_i32_1 = arith.constant 0 : i32
    %c0_i32_2 = arith.constant 0 : i32
    return %arg0, %c0_i32, %c0_i32_0, %c0_i32_1 : i32, i32, i32, i32
  }
}

</mosaic_0001>

<llo_original>
// kernel: decoder_forward.1
$region0: #{decoder_forward.1}
  #allocation0 [shape = 'u32[]', space=smem, size = 0x4, offset = 0x4, fixed_abs, tag = 'smem constant byte address 0x4 - core index']
  #allocation1 [shape = 'u32[144,128]{1,0:T(1,128)}', space=vmem, size = 0x12000, scoped, tag = 'internal scratch']
  #allocation2 [shape = 'f32[64,8]{1,0:T(8,128)}', space=vmem, size = 0x8000, scoped, tag = 'scratch operand']
  %s0 = inlined_call_operand.vmem [shape: f32[2,16,8], index: 0, kind: input, shape index: {}]
  %s1 = inlined_call_operand.vmem [shape: bf16[8,32], index: 1, kind: input, shape index: {}]
  %s2 = inlined_call_operand.vmem [shape: f32[1,32], index: 2, kind: input, shape index: {}]
  %s3 = inlined_call_operand.vmem [shape: f32[168,32], index: 3, kind: input, shape index: {}]
  %s4 = inlined_call_operand.vmem [shape: bf16[2,32,96], index: 4, kind: input, shape index: {}]
  %s5 = inlined_call_operand.vmem [shape: bf16[2,32,32], index: 5, kind: input, shape index: {}]
  %s6 = inlined_call_operand.vmem [shape: bf16[2,32,64], index: 6, kind: input, shape index: {}]
  %s7 = inlined_call_operand.vmem [shape: bf16[2,64,32], index: 7, kind: input, shape index: {}]
  %s8 = inlined_call_operand.vmem [shape: f32[2,8,96], index: 8, kind: input, shape index: {}]
  %s9 = inlined_call_operand.vmem [shape: bf16[32,4], index: 9, kind: input, shape index: {}]
  %s10 = inlined_call_operand.vmem [shape: f32[1,4], index: 10, kind: input, shape index: {}]
  %s11 = inlined_call_operand.vmem [shape: f32[2,16,4], index: 11, kind: output, shape index: {0}]
  %s12 = inlined_call_operand.vmem [shape: f32[2,8,16,16], index: 12, kind: output, shape index: {1}]
  %13 = xla_tuple %s11, %s12
  %s14 = sld [smem:[#allocation0]]
  $region85: #{decoder_forward.1} parent=0
    _
  %s16 = ssub.s32 1, %s14
  %s17 = scalar_select 0, %s16, %s14
  loop: start=0, step=1, limit=4
  $region2: #{decoder_forward.1} parent=0 // loop_pre_header
    _
  $region3: #{decoder_forward.1} parent=0 // loop_header
    %s19 = sphi 0, %s23
    %p20 = scmp.ge.s32.totalorder %s19, 4
    %s29 = sphi 0, %s31
    %s32 = sphi 0, %s29
    %s33 = sphi 0, %s32
    %s49 = sphi 0, %s33
    %s53 = sphi 0, %s53
    %s55 = sphi 0, %s53
    %s56 = sphi 0, %s55
    %s70 = sphi 0, %s56
    %s74 = sphi 0, %s74
    %s76 = sphi 0, %s74
    %s77 = sphi 0, %s76
    %s91 = sphi 0, %s77
    %s95 = sphi 0, %s95
    %s97 = sphi 0, %s95
    %s98 = sphi 0, %s97
    %s112 = sphi 0, %s98
    %s116 = sphi 0, %s116
    %s118 = sphi 0, %s116
    %s119 = sphi 0, %s118
    %s133 = sphi 0, %s119
    %s137 = sphi 0, %s137
    %s139 = sphi 0, %s137
    %s140 = sphi 0, %s139
    %s154 = sphi 0, %s140
    %s158 = sphi 0, %s158
    %s160 = sphi 0, %s158
    %s161 = sphi 0, %s160
    %s175 = sphi 0, %s161
    %s179 = sphi 0, %s179
    %s181 = sphi 0, %s179
    %s182 = sphi 0, %s181
    %s196 = sphi 0, %s182
    %s200 = sphi 0, %s200
    %s202 = sphi 0, %s200
    %s203 = sphi 0, %s202
    %s217 = sphi 0, %s203
    %s221 = sphi 0, %s221
    %s223 = sphi 0, %s221
    %s224 = sphi 0, %s223
    %s238 = sphi 0, %s224
    %s242 = sphi 0, %s242
    %s244 = sphi 0, %s242
    %s245 = sphi 0, %s244
    %s259 = sphi 0, %s245
    %s265 = sphi 0, %s267
    %s268 = sphi 0, %s265
    %s269 = sphi 0, %s268
    %s285 = sphi 0, %s269
    %s291 = sphi 0, %s293
    %s294 = sphi 0, %s291
    %s295 = sphi 0, %s294
    %s311 = sphi 0, %s295
  $region4: #{decoder_forward.1} parent=0 // loop_header_branch
    %22 = sbr.rel (%p20) target = $region8
  $region5: #{decoder_forward.1} parent=0 // loop_body
    %s24 = ssub.s32 %s19, 1
    %s25 = ssub.s32 %s19, 2
    %s26 = sadd.s32 %s19, 1
    %s27 = ssub.s32 %s19, %s26
    %p28 = scmp.eq.s32.totalorder %s27, 0
    %s30 = sadd.s32 %s29, 1
    %s31 = scalar_select %p28, %s29, %s30
    %p34 = pneg %p28
    %p35 = scmp.eq.s32.totalorder %s19, 1
    %p36 = por %p34, %p35
    %p37 = scmp.ne.s32.totalorder %s29, %s32
    %p38 = scmp.eq.s32.totalorder %s19, 0
    %p39 = por %p37, %p38
    %p40 = scmp.ne.s32.totalorder %s29, %s32
    %p41 = scmp.eq.s32.totalorder %s24, 1
    %p42 = por %p40, %p41
    %p43 = scmp.ne.s32.totalorder %s32, %s33
    %p44 = scmp.eq.s32.totalorder %s24, 0
    %p45 = por %p43, %p44
    %p46 = scmp.ne.s32.totalorder %s32, %s33
    %p47 = scmp.eq.s32.totalorder %s25, 1
    %p48 = por %p46, %p47
    %p50 = scmp.ne.s32.totalorder %s33, %s49
    %p51 = scmp.eq.s32.totalorder %s25, 0
    %p52 = por %p50, %p51
    %s54 = sadd.s32 %s53, 1
    %p57 = scmp.eq.s32.totalorder %s19, 1
    %p58 = scmp.ne.s32.totalorder %s53, %s55
    %p59 = scmp.eq.s32.totalorder %s19, 0
    %p60 = por %p58, %p59
    %p61 = scmp.ne.s32.totalorder %s53, %s55
    %p62 = scmp.eq.s32.totalorder %s24, 1
    %p63 = por %p61, %p62
    %p64 = scmp.ne.s32.totalorder %s55, %s56
    %p65 = scmp.eq.s32.totalorder %s24, 0
    %p66 = por %p64, %p65
    %p67 = scmp.ne.s32.totalorder %s55, %s56
    %p68 = scmp.eq.s32.totalorder %s25, 1
    %p69 = por %p67, %p68
    %p71 = scmp.ne.s32.totalorder %s56, %s70
    %p72 = scmp.eq.s32.totalorder %s25, 0
    %p73 = por %p71, %p72
    %s75 = sadd.s32 %s74, 1
    %p78 = scmp.eq.s32.totalorder %s19, 1
    %p79 = scmp.ne.s32.totalorder %s74, %s76
    %p80 = scmp.eq.s32.totalorder %s19, 0
    %p81 = por %p79, %p80
    %p82 = scmp.ne.s32.totalorder %s74, %s76
    %p83 = scmp.eq.s32.totalorder %s24, 1
    %p84 = por %p82, %p83
    %p85 = scmp.ne.s32.totalorder %s76, %s77
    %p86 = scmp.eq.s32.totalorder %s24, 0
    %p87 = por %p85, %p86
    %p88 = scmp.ne.s32.totalorder %s76, %s77
    %p89 = scmp.eq.s32.totalorder %s25, 1
    %p90 = por %p88, %p89
    %p92 = scmp.ne.s32.totalorder %s77, %s91
    %p93 = scmp.eq.s32.totalorder %s25, 0
    %p94 = por %p92, %p93
    %s96 = sadd.s32 %s95, 1
    %p99 = scmp.eq.s32.totalorder %s19, 1
    %p100 = scmp.ne.s32.totalorder %s95, %s97
    %p101 = scmp.eq.s32.totalorder %s19, 0
    %p102 = por %p100, %p101
    %p103 = scmp.ne.s32.totalorder %s95, %s97
    %p104 = scmp.eq.s32.totalorder %s24, 1
    %p105 = por %p103, %p104
    %p106 = scmp.ne.s32.totalorder %s97, %s98
    %p107 = scmp.eq.s32.totalorder %s24, 0
    %p108 = por %p106, %p107
    %p109 = scmp.ne.s32.totalorder %s97, %s98
    %p110 = scmp.eq.s32.totalorder %s25, 1
    %p111 = por %p109, %p110
    %p113 = scmp.ne.s32.totalorder %s98, %s112
    %p114 = scmp.eq.s32.totalorder %s25, 0
    %p115 = por %p113, %p114
    %s117 = sadd.s32 %s116, 1
    %p120 = scmp.eq.s32.totalorder %s19, 1
    %p121 = scmp.ne.s32.totalorder %s116, %s118
    %p122 = scmp.eq.s32.totalorder %s19, 0
    %p123 = por %p121, %p122
    %p124 = scmp.ne.s32.totalorder %s116, %s118
    %p125 = scmp.eq.s32.totalorder %s24, 1
    %p126 = por %p124, %p125
    %p127 = scmp.ne.s32.totalorder %s118, %s119
    %p128 = scmp.eq.s32.totalorder %s24, 0
    %p129 = por %p127, %p128
    %p130 = scmp.ne.s32.totalorder %s118, %s119
    %p131 = scmp.eq.s32.totalorder %s25, 1
    %p132 = por %p130, %p131
    %p134 = scmp.ne.s32.totalorder %s119, %s133
    %p135 = scmp.eq.s32.totalorder %s25, 0
    %p136 = por %p134, %p135
    %s138 = sadd.s32 %s137, 1
    %p141 = scmp.eq.s32.totalorder %s19, 1
    %p142 = scmp.ne.s32.totalorder %s137, %s139
    %p143 = scmp.eq.s32.totalorder %s19, 0
    %p144 = por %p142, %p143
    %p145 = scmp.ne.s32.totalorder %s137, %s139
    %p146 = scmp.eq.s32.totalorder %s24, 1
    %p147 = por %p145, %p146
    %p148 = scmp.ne.s32.totalorder %s139, %s140
    %p149 = scmp.eq.s32.totalorder %s24, 0
    %p150 = por %p148, %p149
    %p151 = scmp.ne.s32.totalorder %s139, %s140
    %p152 = scmp.eq.s32.totalorder %s25, 1
    %p153 = por %p151, %p152
    %p155 = scmp.ne.s32.totalorder %s140, %s154
    %p156 = scmp.eq.s32.totalorder %s25, 0
    %p157 = por %p155, %p156
    %s159 = sadd.s32 %s158, 1
    %p162 = scmp.eq.s32.totalorder %s19, 1
    %p163 = scmp.ne.s32.totalorder %s158, %s160
    %p164 = scmp.eq.s32.totalorder %s19, 0
    %p165 = por %p163, %p164
    %p166 = scmp.ne.s32.totalorder %s158, %s160
    %p167 = scmp.eq.s32.totalorder %s24, 1
    %p168 = por %p166, %p167
    %p169 = scmp.ne.s32.totalorder %s160, %s161
    %p170 = scmp.eq.s32.totalorder %s24, 0
    %p171 = por %p169, %p170
    %p172 = scmp.ne.s32.totalorder %s160, %s161
    %p173 = scmp.eq.s32.totalorder %s25, 1
    %p174 = por %p172, %p173
    %p176 = scmp.ne.s32.totalorder %s161, %s175
    %p177 = scmp.eq.s32.totalorder %s25, 0
    %p178 = por %p176, %p177
    %s180 = sadd.s32 %s179, 1
    %p183 = scmp.eq.s32.totalorder %s19, 1
    %p184 = scmp.ne.s32.totalorder %s179, %s181
    %p185 = scmp.eq.s32.totalorder %s19, 0
    %p186 = por %p184, %p185
    %p187 = scmp.ne.s32.totalorder %s179, %s181
    %p188 = scmp.eq.s32.totalorder %s24, 1
    %p189 = por %p187, %p188
    %p190 = scmp.ne.s32.totalorder %s181, %s182
    %p191 = scmp.eq.s32.totalorder %s24, 0
    %p192 = por %p190, %p191
    %p193 = scmp.ne.s32.totalorder %s181, %s182
    %p194 = scmp.eq.s32.totalorder %s25, 1
    %p195 = por %p193, %p194
    %p197 = scmp.ne.s32.totalorder %s182, %s196
    %p198 = scmp.eq.s32.totalorder %s25, 0
    %p199 = por %p197, %p198
    %s201 = sadd.s32 %s200, 1
    %p204 = scmp.eq.s32.totalorder %s19, 1
    %p205 = scmp.ne.s32.totalorder %s200, %s202
    %p206 = scmp.eq.s32.totalorder %s19, 0
    %p207 = por %p205, %p206
    %p208 = scmp.ne.s32.totalorder %s200, %s202
    %p209 = scmp.eq.s32.totalorder %s24, 1
    %p210 = por %p208, %p209
    %p211 = scmp.ne.s32.totalorder %s202, %s203
    %p212 = scmp.eq.s32.totalorder %s24, 0
    %p213 = por %p211, %p212
    %p214 = scmp.ne.s32.totalorder %s202, %s203
    %p215 = scmp.eq.s32.totalorder %s25, 1
    %p216 = por %p214, %p215
    %p218 = scmp.ne.s32.totalorder %s203, %s217
    %p219 = scmp.eq.s32.totalorder %s25, 0
    %p220 = por %p218, %p219
    %s222 = sadd.s32 %s221, 1
    %p225 = scmp.eq.s32.totalorder %s19, 1
    %p226 = scmp.ne.s32.totalorder %s221, %s223
    %p227 = scmp.eq.s32.totalorder %s19, 0
    %p228 = por %p226, %p227
    %p229 = scmp.ne.s32.totalorder %s221, %s223
    %p230 = scmp.eq.s32.totalorder %s24, 1
    %p231 = por %p229, %p230
    %p232 = scmp.ne.s32.totalorder %s223, %s224
    %p233 = scmp.eq.s32.totalorder %s24, 0
    %p234 = por %p232, %p233
    %p235 = scmp.ne.s32.totalorder %s223, %s224
    %p236 = scmp.eq.s32.totalorder %s25, 1
    %p237 = por %p235, %p236
    %p239 = scmp.ne.s32.totalorder %s224, %s238
    %p240 = scmp.eq.s32.totalorder %s25, 0
    %p241 = por %p239, %p240
    %s243 = sadd.s32 %s242, 1
    %p246 = scmp.eq.s32.totalorder %s19, 1
    %p247 = scmp.ne.s32.totalorder %s242, %s244
    %p248 = scmp.eq.s32.totalorder %s19, 0
    %p249 = por %p247, %p248
    %p250 = scmp.ne.s32.totalorder %s242, %s244
    %p251 = scmp.eq.s32.totalorder %s24, 1
    %p252 = por %p250, %p251
    %p253 = scmp.ne.s32.totalorder %s244, %s245
    %p254 = scmp.eq.s32.totalorder %s24, 0
    %p255 = por %p253, %p254
    %p256 = scmp.ne.s32.totalorder %s244, %s245
    %p257 = scmp.eq.s32.totalorder %s25, 1
    %p258 = por %p256, %p257
    %p260 = scmp.ne.s32.totalorder %s245, %s259
    %p261 = scmp.eq.s32.totalorder %s25, 0
    %p262 = por %p260, %p261
    %s263 = ssub.s32 %s19, %s26
    %p264 = scmp.eq.s32.totalorder %s263, 0
    %s266 = sadd.s32 %s265, 1
    %s267 = scalar_select %p264, %s265, %s266
    %p270 = pneg %p264
    %p271 = scmp.eq.s32.totalorder %s19, 1
    %p272 = por %p270, %p271
    %p273 = scmp.ne.s32.totalorder %s265, %s268
    %p274 = scmp.eq.s32.totalorder %s19, 0
    %p275 = por %p273, %p274
    %p276 = scmp.ne.s32.totalorder %s265, %s268
    %p277 = scmp.eq.s32.totalorder %s24, 1
    %p278 = por %p276, %p277
    %p279 = scmp.ne.s32.totalorder %s268, %s269
    %p280 = scmp.eq.s32.totalorder %s24, 0
    %p281 = por %p279, %p280
    %p282 = scmp.ne.s32.totalorder %s268, %s269
    %p283 = scmp.eq.s32.totalorder %s25, 1
    %p284 = por %p282, %p283
    %p286 = scmp.ne.s32.totalorder %s269, %s285
    %p287 = scmp.eq.s32.totalorder %s25, 0
    %p288 = por %p286, %p287
    %s289 = ssub.s32 %s19, %s26
    %p290 = scmp.eq.s32.totalorder %s289, 0
    %s292 = sadd.s32 %s291, 1
    %s293 = scalar_select %p290, %s291, %s292
    %p296 = pneg %p290
    %p297 = scmp.eq.s32.totalorder %s19, 1
    %p298 = por %p296, %p297
    %p299 = scmp.ne.s32.totalorder %s291, %s294
    %p300 = scmp.eq.s32.totalorder %s19, 0
    %p301 = por %p299, %p300
    %p302 = scmp.ne.s32.totalorder %s291, %s294
    %p303 = scmp.eq.s32.totalorder %s24, 1
    %p304 = por %p302, %p303
    %p305 = scmp.ne.s32.totalorder %s294, %s295
    %p306 = scmp.eq.s32.totalorder %s24, 0
    %p307 = por %p305, %p306
    %p308 = scmp.ne.s32.totalorder %s294, %s295
    %p309 = scmp.eq.s32.totalorder %s25, 1
    %p310 = por %p308, %p309
    %p312 = scmp.ne.s32.totalorder %s295, %s311
    %p313 = scmp.eq.s32.totalorder %s25, 0
    %p314 = por %p312, %p313
    %p315 = scmp.le.s32.totalorder 1, %s19
    %p316 = scmp.lt.s32.totalorder %s19, 3
    %p317 = pnand %p315, %p316
    %p318 = pneg %p317
    // Predicated region
    $region9: #{decoder_forward.1} parent=5 // pred_check
      _
    $region10: #{decoder_forward.1} parent=5 // pred_check_branch
      %320 = sbr.rel (%p317) target = $region12
    $region11: #{decoder_forward.1} parent=5 // pred_region
      %s321 = ssub.s32 %s19, 1
      // Predicated region
      $region13: #{decoder_forward.1} parent=11 // pred_check
        %p322 = pneg %p66
      $region14: #{decoder_forward.1} parent=11 // pred_check_branch
        %324 = sbr.rel (%p322) target = $region16
      $region15: #{decoder_forward.1} parent=11 // pred_region
        _
      $region16: #{decoder_forward.1} parent=11 // pred_fallthru
        _
      // Predicated region
      $region17: #{decoder_forward.1} parent=11 // pred_check
        %p325 = pneg %p87
      $region18: #{decoder_forward.1} parent=11 // pred_check_branch
        %327 = sbr.rel (%p325) target = $region20
      $region19: #{decoder_forward.1} parent=11 // pred_region
        _
      $region20: #{decoder_forward.1} parent=11 // pred_fallthru
        _
      // Predicated region
      $region21: #{decoder_forward.1} parent=11 // pred_check
        %p328 = pneg %p108
      $region22: #{decoder_forward.1} parent=11 // pred_check_branch
        %330 = sbr.rel (%p328) target = $region24
      $region23: #{decoder_forward.1} parent=11 // pred_region
        _
      $region24: #{decoder_forward.1} parent=11 // pred_fallthru
        _
      // Predicated region
      $region25: #{decoder_forward.1} parent=11 // pred_check
        %p331 = pneg %p129
      $region26: #{decoder_forward.1} parent=11 // pred_check_branch
        %333 = sbr.rel (%p331) target = $region28
      $region27: #{decoder_forward.1} parent=11 // pred_region
        _
      $region28: #{decoder_forward.1} parent=11 // pred_fallthru
        _
      // Predicated region
      $region29: #{decoder_forward.1} parent=11 // pred_check
        %p334 = pneg %p150
      $region30: #{decoder_forward.1} parent=11 // pred_check_branch
        %336 = sbr.rel (%p334) target = $region32
      $region31: #{decoder_forward.1} parent=11 // pred_region
        _
      $region32: #{decoder_forward.1} parent=11 // pred_fallthru
        _
      // Predicated region
      $region33: #{decoder_forward.1} parent=11 // pred_check
        %p337 = pneg %p171
      $region34: #{decoder_forward.1} parent=11 // pred_check_branch
        %339 = sbr.rel (%p337) target = $region36
      $region35: #{decoder_forward.1} parent=11 // pred_region
        _
      $region36: #{decoder_forward.1} parent=11 // pred_fallthru
        _
      // Predicated region
      $region37: #{decoder_forward.1} parent=11 // pred_check
        %p340 = pneg %p192
      $region38: #{decoder_forward.1} parent=11 // pred_check_branch
        %342 = sbr.rel (%p340) target = $region40
      $region39: #{decoder_forward.1} parent=11 // pred_region
        _
      $region40: #{decoder_forward.1} parent=11 // pred_fallthru
        _
      // Predicated region
      $region41: #{decoder_forward.1} parent=11 // pred_check
        %p343 = pneg %p213
      $region42: #{decoder_forward.1} parent=11 // pred_check_branch
        %345 = sbr.rel (%p343) target = $region44
      $region43: #{decoder_forward.1} parent=11 // pred_region
        _
      $region44: #{decoder_forward.1} parent=11 // pred_fallthru
        _
      // Predicated region
      $region45: #{decoder_forward.1} parent=11 // pred_check
        %p346 = pneg %p234
      $region46: #{decoder_forward.1} parent=11 // pred_check_branch
        %348 = sbr.rel (%p346) target = $region48
      $region47: #{decoder_forward.1} parent=11 // pred_region
        _
      $region48: #{decoder_forward.1} parent=11 // pred_fallthru
        _
      // Predicated region
      $region49: #{decoder_forward.1} parent=11 // pred_check
        %p349 = pneg %p255
      $region50: #{decoder_forward.1} parent=11 // pred_check_branch
        %351 = sbr.rel (%p349) target = $region52
      $region51: #{decoder_forward.1} parent=11 // pred_region
        _
      $region52: #{decoder_forward.1} parent=11 // pred_fallthru
        _
    $region12: #{decoder_forward.1} parent=5 // pred_fallthru
      _
    %p352 = scmp.lt.s32.totalorder %s19, 2
    // Predicated region
    $region53: #{decoder_forward.1} parent=5 // pred_check
      %p353 = pneg %p352
    $region54: #{decoder_forward.1} parent=5 // pred_check_branch
      %355 = sbr.rel (%p353) target = $region56
    $region55: #{decoder_forward.1} parent=5 // pred_region
      // Predicated region
      $region57: #{decoder_forward.1} parent=55 // pred_check
        %p356 = pneg %p39
      $region58: #{decoder_forward.1} parent=55 // pred_check_branch
        %358 = sbr.rel (%p356) target = $region60
      $region59: #{decoder_forward.1} parent=55 // pred_region
        %p359 = scmp.lt.s32.totalorder %s19, 1
        %s360 = scalar_select %p359, %s19, 1
        %s361 = smul.addr %s360, 2
        %s362 = smul.addr %s361, 8
        %s363 = scalar_lea.vmem %s0, %s362
      $region60: #{decoder_forward.1} parent=55 // pred_fallthru
        _
    $region56: #{decoder_forward.1} parent=5 // pred_fallthru
      _
    %p364 = scmp.le.s32.totalorder 1, %s19
    %p365 = scmp.lt.s32.totalorder %s19, 3
    %p366 = pnand %p364, %p365
    %p367 = pneg %p366
    // Predicated region
    $region61: #{decoder_forward.1} parent=5 // pred_check
      _
    $region62: #{decoder_forward.1} parent=5 // pred_check_branch
      %369 = sbr.rel (%p366) target = $region64
    $region63: #{decoder_forward.1} parent=5 // pred_region
      %s370 = ssub.s32 %s19, 1
      %p371 = scmp.lt.s32.totalorder %s24, 1
      %s372 = scalar_select %p371, %s24, 1
      %s373 = smul.addr %s372, 2
      %s374 = smul.addr %s373, 8
      %s375 = scalar_lea.vmem %s0, %s374
      %p376 = pneg %p45
      %p377 = pneg %p42
      %p378 = pneg %p66
      %p379 = pneg %p63
      %p380 = pneg %p87
      %p381 = pneg %p84
      %p382 = pneg %p108
      %p383 = pneg %p105
      %p384 = pneg %p129
      %p385 = pneg %p126
      %p386 = pneg %p150
      %p387 = pneg %p147
      %p388 = pneg %p171
      %p389 = pneg %p168
      %p390 = pneg %p192
      %p391 = pneg %p189
      %p392 = pneg %p213
      %p393 = pneg %p210
      %p394 = pneg %p234
      %p395 = pneg %p231
      %p396 = pneg %p255
      %p397 = pneg %p252
      %p398 = pneg %p281
      %p399 = pneg %p278
      %p400 = scmp.lt.s32.totalorder %s24, 1
      %s401 = scalar_select %p400, %s24, 1
      %s402 = smul.addr %s401, 2
      %s403 = smul.addr %s402, 8
      %s404 = scalar_lea.vmem %s11, %s403
      %p405 = pneg %p307
      %p406 = pneg %p304
      %p407 = scmp.lt.s32.totalorder %s24, 1
      %s408 = scalar_select %p407, %s24, 1
      %s409 = smul.addr %s408, 16
      %s410 = smul.addr %s409, 8
      %s411 = scalar_lea.vmem %s12, %s410
      %p412 = scmp.lt.s32.totalorder %s24, 1
      %s413 = scalar_select %p412, %s24, 1
      %s414 = smul.addr %s413, 2
      %s415 = smul.addr %s414, 8
      %s416 = scalar_lea.vmem %s0, %s415
      %p417 = scmp.lt.s32.totalorder %s24, 1
      %s418 = scalar_select %p417, %s24, 1
      %s419 = smul.addr %s418, 2
      %s420 = smul.addr %s419, 8
      %s421 = scalar_lea.vmem %s11, %s420
      %p422 = scmp.lt.s32.totalorder %s24, 1
      %s423 = scalar_select %p422, %s24, 1
      %s424 = smul.addr %s423, 16
      %s425 = smul.addr %s424, 8
      %s426 = scalar_lea.vmem %s12, %s425
      %v428 = vld [vmem:[%s416] sm:$0xff]
      %v429 = vld [vmem:[%s416 + $0x8] sm:$0xff]
      %v430 = vpack.c.bf16 %v429, %v428
      %v431 = vld [vmem:[%s1] sm:$0xf]
      %v432 = vld [vmem:[%s2] sm:$0x1]
      %v434 = vlaneseq
      %v435 = vshrl.u32 %v434, 7
      %v436 = vsub.s32 0, %v435
      %v437 = vrot.slane %v432, %v436
      %vm439 = vcmask 64512
      %v441 = vsel %vm439, %v430, 0
      %vm443 = vcmask 1043456
      %v445 = vsel %vm443, %v431, 0
      %447 = vmatprep.subr.bf16.mxu0 0
      %448 = vmatpush1.bf16.msra.mxu0 0
      %449 = vmatprep.subr.bf16.mxu0 0
      %450 = vmatpush1.bf16.msra.mxu0 0
      %451 = vmatprep.subr.bf16.mxu0 0
      %452 = vmatpush1.bf16.msra.mxu0 0
      %453 = vmatprep.subr.bf16.mxu0 0
      %454 = vmatpush1.bf16.msra.mxu0 0
      %455 = vmatprep.subr.bf16.mxu0 0
      %456 = vmatpush1.bf16.msra.mxu0 0
      %457 = vmatprep.subr.bf16.mxu0 0
      %458 = vmatpush1.bf16.msra.mxu0 0
      %459 = vmatprep.subr.bf16.mxu0 0
      %460 = vmatpush1.bf16.msra.mxu0 0
      %461 = vmatprep.subr.bf16.mxu0 0
      %462 = vmatpush1.bf16.msra.mxu0 %v445
      %463 = vmatprep.subr.bf16.mxu0 0
      %464 = vmatpush2.bf16.msra.mxu0 0
      %465 = vmatprep.subr.bf16.mxu0 0
      %466 = vmatpush2.bf16.msra.mxu0 0
      %467 = vmatprep.subr.bf16.mxu0 0
      %468 = vmatpush2.bf16.msra.mxu0 0
      %469 = vmatprep.subr.bf16.mxu0 0
      %470 = vmatpush2.bf16.msra.mxu0 0
      %471 = vmatprep.subr.bf16.mxu0 0
      %472 = vmatpush2.bf16.msra.mxu0 0
      %473 = vmatprep.subr.bf16.mxu0 0
      %474 = vmatpush2.bf16.msra.mxu0 0
      %475 = vmatprep.subr.bf16.mxu0 0
      %476 = vmatpush2.bf16.msra.mxu0 0
      %477 = vmatprep.subr.bf16.mxu0 0
      %478 = vmatpush2.bf16.msra.mxu0 0
      %479 = vmatprep.mubr.bf16.mxu0 0
      %480 = vmatmul.mubr.bf16.gmra.mxu0 %v441
      %v481 = vpop.f32.mrf.mxu0
      %v482 = vadd.f32 %v437, %v481
      %v483 = vpop.f32.mrf.mxu0
      %v484 = vpop.f32.mrf.mxu0
      %v485 = vadd.f32 %v437, %v484
      %v486 = vpop.f32.mrf.mxu0
      %487 = vdwg.mxu0
      %v488 = vmul.f32 %v482, 5.656854
      %v489 = vmul.f32 %v485, 5.656854
      %v490 = vld [vmem:[%s3] sm:$0xff]
      %v491 = vld [vmem:[%s3 + $0x8] sm:$0xff]
      %v492 = vadd.f32 %v488, %v490
      %v493 = vadd.f32 %v489, %v491
      %v494 = vld [vmem:[%s8] sm:$0xff]
      %v495 = vpack.c.bf16 %v493, %v492
      %v496 = vld [vmem:[%s4] sm:$0xf]
      %v497 = vld [vmem:[%s4 + $0x4] sm:$0xf]
      %v498 = vld [vmem:[%s4 + $0x8] sm:$0xf]
      %v499 = vld [vmem:[%s4 + $0xc] sm:$0xf]
      %v500 = vlaneseq
      %v501 = vshrl.u32 %v500, 7
      %v502 = vsub.s32 0, %v501
      %v503 = vrot.slane %v494, %v502
      %v508 = vunpack.c.l.b16 %v496
      %v509 = vunpack.c.l.b16 %v497
      %v510 = vunpack.c.l.b16 %v498
      %v511 = vunpack.c.l.b16 %v499
      %v512 = vpack.c.b16 %v509, %v508
      %v513 = vpack.c.b16 %v511, %v510
      %vm516 = vcmask 261120
      %v518 = vsel %vm516, %v495, 0
      %520 = vmatprep.subr.bf16.mxu0 0
      %521 = vmatpush1.bf16.msra.mxu0 0
      %522 = vmatprep.subr.bf16.mxu0 0
      %523 = vmatpush1.bf16.msra.mxu0 0
      %524 = vmatprep.subr.bf16.mxu0 0
      %525 = vmatpush1.bf16.msra.mxu0 0
      %526 = vmatprep.subr.bf16.mxu0 0
      %527 = vmatpush1.bf16.msra.mxu0 0
      %528 = vmatprep.subr.bf16.mxu0 0
      %529 = vmatpush1.bf16.msra.mxu0 0
      %530 = vmatprep.subr.bf16.mxu0 0
      %531 = vmatpush1.bf16.msra.mxu0 0
      %532 = vmatprep.subr.bf16.mxu0 0
      %533 = vmatpush1.bf16.msra.mxu0 %v513
      %534 = vmatprep.subr.bf16.mxu0 0
      %535 = vmatpush1.bf16.msra.mxu0 %v512
      %536 = vmatprep.subr.bf16.mxu0 0
      %537 = vmatpush2.bf16.msra.mxu0 0
      %538 = vmatprep.subr.bf16.mxu0 0
      %539 = vmatpush2.bf16.msra.mxu0 0
      %540 = vmatprep.subr.bf16.mxu0 0
      %541 = vmatpush2.bf16.msra.mxu0 0
      %542 = vmatprep.subr.bf16.mxu0 0
      %543 = vmatpush2.bf16.msra.mxu0 0
      %544 = vmatprep.subr.bf16.mxu0 0
      %545 = vmatpush2.bf16.msra.mxu0 0
      %546 = vmatprep.subr.bf16.mxu0 0
      %547 = vmatpush2.bf16.msra.mxu0 0
      %548 = vmatprep.subr.bf16.mxu0 0
      %549 = vmatpush2.bf16.msra.mxu0 0
      %550 = vmatprep.subr.bf16.mxu0 0
      %551 = vmatpush2.bf16.msra.mxu0 0
      %552 = vmatprep.mubr.bf16.mxu0 0
      %553 = vmatmul.mubr.bf16.gmra.mxu0 %v518
      %v554 = vpop.f32.mrf.mxu0
      %v555 = vadd.f32 %v503, %v554
      %v556 = vpop.f32.mrf.mxu0
      %v557 = vpop.f32.mrf.mxu0
      %v558 = vadd.f32 %v503, %v557
      %v559 = vpop.f32.mrf.mxu0
      %560 = vdwg.mxu0
      %v561 = vpack.c.bf16 %v558, %v555
      %563 = vrot.lane.b32.xlu0 %v561, 120
      %v564 = vpop.permute.xlu0 %563
      %v566 = vsel %vm439, %v561, 0
      %v569 = vsel %vm439, %v564, 0
      %571 = vmatprep.subr.bf16.mxu0 0
      %572 = vmatpush1.bf16.xpose.msra.mxu0 0
      %573 = vmatprep.subr.bf16.mxu0 0
      %574 = vmatpush1.bf16.xpose.msra.mxu0 0
      %575 = vmatprep.subr.bf16.mxu0 0
      %576 = vmatpush1.bf16.xpose.msra.mxu0 0
      %577 = vmatprep.subr.bf16.mxu0 0
      %578 = vmatpush1.bf16.xpose.msra.mxu0 0
      %579 = vmatprep.subr.bf16.mxu0 0
      %580 = vmatpush1.bf16.xpose.msra.mxu0 0
      %581 = vmatprep.subr.bf16.mxu0 0
      %582 = vmatpush1.bf16.xpose.msra.mxu0 0
      %583 = vmatprep.subr.bf16.mxu0 0
      %584 = vmatpush1.bf16.xpose.msra.mxu0 0
      %585 = vmatprep.subr.bf16.mxu0 0
      %586 = vmatpush1.bf16.xpose.msra.mxu0 %v569
      %587 = vmatprep.subr.bf16.mxu0 0
      %588 = vmatpush2.bf16.xpose.msra.mxu0 0
      %589 = vmatprep.subr.bf16.mxu0 0
      %590 = vmatpush2.bf16.xpose.msra.mxu0 0
      %591 = vmatprep.subr.bf16.mxu0 0
      %592 = vmatpush2.bf16.xpose.msra.mxu0 0
      %593 = vmatprep.subr.bf16.mxu0 0
      %594 = vmatpush2.bf16.xpose.msra.mxu0 0
      %595 = vmatprep.subr.bf16.mxu0 0
      %596 = vmatpush2.bf16.xpose.msra.mxu0 0
      %597 = vmatprep.subr.bf16.mxu0 0
      %598 = vmatpush2.bf16.xpose.msra.mxu0 0
      %599 = vmatprep.subr.bf16.mxu0 0
      %600 = vmatpush2.bf16.xpose.msra.mxu0 0
      %601 = vmatprep.subr.bf16.mxu0 0
      %602 = vmatpush2.bf16.xpose.msra.mxu0 0
      %603 = vmatprep.mubr.bf16.mxu0 0
      %604 = vmatmul.mubr.bf16.gmra.mxu0 %v566
      %v605 = vpop.f32.mrf.mxu0
      %v606 = vadd.f32 0.0, %v605
      %v607 = vpop.f32.mrf.mxu0
      %v608 = vpop.f32.mrf.mxu0
      %v609 = vadd.f32 0.0, %v608
      %v610 = vpop.f32.mrf.mxu0
      %611 = vdwg.mxu0
      %v612 = vmul.f32 %v606, 0.35355338
      %v613 = vmul.f32 %v609, 0.35355338
      %vm614 = vcmask 130048
      %v615 = vsel %vm614, %v612, -inf
      %616 = vmax.xlane.f32.xlu0 %v615
      %v617 = vpop.xlane.xlu0 %616
      %v618 = vsel %vm614, %v613, -inf
      %619 = vmax.xlane.f32.xlu0 %v618
      %v620 = vpop.xlane.xlu0 %619
      %v621 = vsub.f32 %v612, %v617
      %v622 = vsub.f32 %v613, %v620
      %v623 = vmul.f32 %v621, 1.442695
      %v624 = vpow.pop %v623
      %v625 = vmul.f32 %v622, 1.442695
      %v626 = vpow.pop %v625
      %v627 = vsel %vm614, %v624, 0.0
      %628 = vadd.xlane.f32.xlu0 %v627
      %v629 = vpop.xlane.xlu0 %628
      %v630 = vsel %vm614, %v626, 0.0
      %631 = vadd.xlane.f32.xlu0 %v630
      %v632 = vpop.xlane.xlu0 %631
      %v633 = vrcp.pop %v629
      %v634 = vmul.f32 %v624, %v633
      %v635 = vrcp.pop %v632
      %v636 = vmul.f32 %v626, %v635
      %637 = vst.msk [vmem:[%s426] sm:$0xff] %vm614, %v634
      %638 = vst.msk [vmem:[%s426 + $0x8] sm:$0xff] %vm614, %v636
      %v639 = vpack.c.bf16 %v636, %v634
      %640 = vrot.lane.b32.xlu0 %v561, 112
      %v641 = vpop.permute.xlu0 %640
      %v644 = vsel %vm614, %v639, 0
      %646 = vmatprep.subr.bf16.mxu0 0
      %647 = vmatpush1.bf16.msra.mxu0 0
      %648 = vmatprep.subr.bf16.mxu0 0
      %649 = vmatpush1.bf16.msra.mxu0 0
      %650 = vmatprep.subr.bf16.mxu0 0
      %651 = vmatpush1.bf16.msra.mxu0 0
      %652 = vmatprep.subr.bf16.mxu0 0
      %653 = vmatpush1.bf16.msra.mxu0 0
      %654 = vmatprep.subr.bf16.mxu0 0
      %655 = vmatpush1.bf16.msra.mxu0 0
      %656 = vmatprep.subr.bf16.mxu0 0
      %657 = vmatpush1.bf16.msra.mxu0 0
      %658 = vmatprep.subr.bf16.mxu0 0
      %659 = vmatpush1.bf16.msra.mxu0 0
      %660 = vmatprep.subr.bf16.mxu0 0
      %661 = vmatpush1.bf16.msra.mxu0 %v641
      %662 = vmatprep.subr.bf16.mxu0 0
      %663 = vmatpush2.bf16.msra.mxu0 0
      %664 = vmatprep.subr.bf16.mxu0 0
      %665 = vmatpush2.bf16.msra.mxu0 0
      %666 = vmatprep.subr.bf16.mxu0 0
      %667 = vmatpush2.bf16.msra.mxu0 0
      %668 = vmatprep.subr.bf16.mxu0 0
      %669 = vmatpush2.bf16.msra.mxu0 0
      %670 = vmatprep.subr.bf16.mxu0 0
      %671 = vmatpush2.bf16.msra.mxu0 0
      %672 = vmatprep.subr.bf16.mxu0 0
      %673 = vmatpush2.bf16.msra.mxu0 0
      %674 = vmatprep.subr.bf16.mxu0 0
      %675 = vmatpush2.bf16.msra.mxu0 0
      %676 = vmatprep.subr.bf16.mxu0 0
      %677 = vmatpush2.bf16.msra.mxu0 0
      %678 = vmatprep.mubr.bf16.mxu0 0
      %679 = vmatmul.mubr.bf16.gmra.mxu0 %v644
      %v680 = vpop.f32.mrf.mxu0
      %v681 = vadd.f32 0.0, %v680
      %v682 = vpop.f32.mrf.mxu0
      %v683 = vpop.f32.mrf.mxu0
      %v684 = vadd.f32 0.0, %v683
      %v685 = vpop.f32.mrf.mxu0
      %686 = vdwg.mxu0
      %687 = vst.msk [vmem:[#allocation2] sm:$0xff] %vm439, %v681
      %688 = vst.msk [vmem:[#allocation2 + $0x8] sm:$0xff] %vm439, %v684
      %689 = vrot.lane.b32.xlu0 %v561, 104
      %v690 = vpop.permute.xlu0 %689
      %691 = vrot.lane.b32.xlu0 %v561, 96
      %v692 = vpop.permute.xlu0 %691
      %v694 = vsel %vm439, %v690, 0
      %v697 = vsel %vm439, %v692, 0
      %699 = vmatprep.subr.bf16.mxu0 0
      %700 = vmatpush1.bf16.xpose.msra.mxu0 0
      %701 = vmatprep.subr.bf16.mxu0 0
      %702 = vmatpush1.bf16.xpose.msra.mxu0 0
      %703 = vmatprep.subr.bf16.mxu0 0
      %704 = vmatpush1.bf16.xpose.msra.mxu0 0
      %705 = vmatprep.subr.bf16.mxu0 0
      %706 = vmatpush1.bf16.xpose.msra.mxu0 0
      %707 = vmatprep.subr.bf16.mxu0 0
      %708 = vmatpush1.bf16.xpose.msra.mxu0 0
      %709 = vmatprep.subr.bf16.mxu0 0
      %710 = vmatpush1.bf16.xpose.msra.mxu0 0
      %711 = vmatprep.subr.bf16.mxu0 0
      %712 = vmatpush1.bf16.xpose.msra.mxu0 0
      %713 = vmatprep.subr.bf16.mxu0 0
      %714 = vmatpush1.bf16.xpose.msra.mxu0 %v697
      %715 = vmatprep.subr.bf16.mxu0 0
      %716 = vmatpush2.bf16.xpose.msra.mxu0 0
      %717 = vmatprep.subr.bf16.mxu0 0
      %718 = vmatpush2.bf16.xpose.msra.mxu0 0
      %719 = vmatprep.subr.bf16.mxu0 0
      %720 = vmatpush2.bf16.xpose.msra.mxu0 0
      %721 = vmatprep.subr.bf16.mxu0 0
      %722 = vmatpush2.bf16.xpose.msra.mxu0 0
      %723 = vmatprep.subr.bf16.mxu0 0
      %724 = vmatpush2.bf16.xpose.msra.mxu0 0
      %725 = vmatprep.subr.bf16.mxu0 0
      %726 = vmatpush2.bf16.xpose.msra.mxu0 0
      %727 = vmatprep.subr.bf16.mxu0 0
      %728 = vmatpush2.bf16.xpose.msra.mxu0 0
      %729 = vmatprep.subr.bf16.mxu0 0
      %730 = vmatpush2.bf16.xpose.msra.mxu0 0
      %731 = vmatprep.mubr.bf16.mxu0 0
      %732 = vmatmul.mubr.bf16.gmra.mxu0 %v694
      %v733 = vpop.f32.mrf.mxu0
      %v734 = vadd.f32 0.0, %v733
      %v735 = vpop.f32.mrf.mxu0
      %v736 = vpop.f32.mrf.mxu0
      %v737 = vadd.f32 0.0, %v736
      %v738 = vpop.f32.mrf.mxu0
      %739 = vdwg.mxu0
      %v740 = vmul.f32 %v734, 0.35355338
      %v741 = vmul.f32 %v737, 0.35355338
      %v742 = vsel %vm614, %v740, -inf
      %743 = vmax.xlane.f32.xlu0 %v742
      %v744 = vpop.xlane.xlu0 %743
      %v745 = vsel %vm614, %v741, -inf
      %746 = vmax.xlane.f32.xlu0 %v745
      %v747 = vpop.xlane.xlu0 %746
      %v748 = vsub.f32 %v740, %v744
      %v749 = vsub.f32 %v741, %v747
      %v750 = vmul.f32 %v748, 1.442695
      %v751 = vpow.pop %v750
      %v752 = vmul.f32 %v749, 1.442695
      %v753 = vpow.pop %v752
      %v754 = vsel %vm614, %v751, 0.0
      %755 = vadd.xlane.f32.xlu0 %v754
      %v756 = vpop.xlane.xlu0 %755
      %v757 = vsel %vm614, %v753, 0.0
      %758 = vadd.xlane.f32.xlu0 %v757
      %v759 = vpop.xlane.xlu0 %758
      %v760 = vrcp.pop %v756
      %v761 = vmul.f32 %v751, %v760
      %v762 = vrcp.pop %v759
      %v763 = vmul.f32 %v753, %v762
      %s764 = scalar_lea.vmem %s426, 16
      %765 = vst.msk [vmem:[%s764] sm:$0xff] %vm614, %v761
      %766 = vst.msk [vmem:[%s764 + $0x8] sm:$0xff] %vm614, %v763
      %v767 = vpack.c.bf16 %v763, %v761
      %768 = vrot.lane.b32.xlu0 %v561, 88
      %v769 = vpop.permute.xlu0 %768
      %v772 = vsel %vm614, %v767, 0
      %774 = vmatprep.subr.bf16.mxu0 0
      %775 = vmatpush1.bf16.msra.mxu0 0
      %776 = vmatprep.subr.bf16.mxu0 0
      %777 = vmatpush1.bf16.msra.mxu0 0
      %778 = vmatprep.subr.bf16.mxu0 0
      %779 = vmatpush1.bf16.msra.mxu0 0
      %780 = vmatprep.subr.bf16.mxu0 0
      %781 = vmatpush1.bf16.msra.mxu0 0
      %782 = vmatprep.subr.bf16.mxu0 0
      %783 = vmatpush1.bf16.msra.mxu0 0
      %784 = vmatprep.subr.bf16.mxu0 0
      %785 = vmatpush1.bf16.msra.mxu0 0
      %786 = vmatprep.subr.bf16.mxu0 0
      %787 = vmatpush1.bf16.msra.mxu0 0
      %788 = vmatprep.subr.bf16.mxu0 0
      %789 = vmatpush1.bf16.msra.mxu0 %v769
      %790 = vmatprep.subr.bf16.mxu0 0
      %791 = vmatpush2.bf16.msra.mxu0 0
      %792 = vmatprep.subr.bf16.mxu0 0
      %793 = vmatpush2.bf16.msra.mxu0 0
      %794 = vmatprep.subr.bf16.mxu0 0
      %795 = vmatpush2.bf16.msra.mxu0 0
      %796 = vmatprep.subr.bf16.mxu0 0
      %797 = vmatpush2.bf16.msra.mxu0 0
      %798 = vmatprep.subr.bf16.mxu0 0
      %799 = vmatpush2.bf16.msra.mxu0 0
      %800 = vmatprep.subr.bf16.mxu0 0
      %801 = vmatpush2.bf16.msra.mxu0 0
      %802 = vmatprep.subr.bf16.mxu0 0
      %803 = vmatpush2.bf16.msra.mxu0 0
      %804 = vmatprep.subr.bf16.mxu0 0
      %805 = vmatpush2.bf16.msra.mxu0 0
      %806 = vmatprep.mubr.bf16.mxu0 0
      %807 = vmatmul.mubr.bf16.gmra.mxu0 %v772
      %v808 = vpop.f32.mrf.mxu0
      %v809 = vadd.f32 0.0, %v808
      %v810 = vpop.f32.mrf.mxu0
      %v811 = vpop.f32.mrf.mxu0
      %v812 = vadd.f32 0.0, %v811
      %v813 = vpop.f32.mrf.mxu0
      %814 = vdwg.mxu0
      %815 = vst.msk [vmem:[#allocation2 + $0x10] sm:$0xff] %vm439, %v809
      %816 = vst.msk [vmem:[#allocation2 + $0x18] sm:$0xff] %vm439, %v812
      %817 = vrot.lane.b32.xlu0 %v561, 80
      %v818 = vpop.permute.xlu0 %817
      %819 = vrot.lane.b32.xlu0 %v561, 72
      %v820 = vpop.permute.xlu0 %819
      %v822 = vsel %vm439, %v818, 0
      %v825 = vsel %vm439, %v820, 0
      %827 = vmatprep.subr.bf16.mxu0 0
      %828 = vmatpush1.bf16.xpose.msra.mxu0 0
      %829 = vmatprep.subr.bf16.mxu0 0
      %830 = vmatpush1.bf16.xpose.msra.mxu0 0
      %831 = vmatprep.subr.bf16.mxu0 0
      %832 = vmatpush1.bf16.xpose.msra.mxu0 0
      %833 = vmatprep.subr.bf16.mxu0 0
      %834 = vmatpush1.bf16.xpose.msra.mxu0 0
      %835 = vmatprep.subr.bf16.mxu0 0
      %836 = vmatpush1.bf16.xpose.msra.mxu0 0
      %837 = vmatprep.subr.bf16.mxu0 0
      %838 = vmatpush1.bf16.xpose.msra.mxu0 0
      %839 = vmatprep.subr.bf16.mxu0 0
      %840 = vmatpush1.bf16.xpose.msra.mxu0 0
      %841 = vmatprep.subr.bf16.mxu0 0
      %842 = vmatpush1.bf16.xpose.msra.mxu0 %v825
      %843 = vmatprep.subr.bf16.mxu0 0
      %844 = vmatpush2.bf16.xpose.msra.mxu0 0
      %845 = vmatprep.subr.bf16.mxu0 0
      %846 = vmatpush2.bf16.xpose.msra.mxu0 0
      %847 = vmatprep.subr.bf16.mxu0 0
      %848 = vmatpush2.bf16.xpose.msra.mxu0 0
      %849 = vmatprep.subr.bf16.mxu0 0
      %850 = vmatpush2.bf16.xpose.msra.mxu0 0
      %851 = vmatprep.subr.bf16.mxu0 0
      %852 = vmatpush2.bf16.xpose.msra.mxu0 0
      %853 = vmatprep.subr.bf16.mxu0 0
      %854 = vmatpush2.bf16.xpose.msra.mxu0 0
      %855 = vmatprep.subr.bf16.mxu0 0
      %856 = vmatpush2.bf16.xpose.msra.mxu0 0
      %857 = vmatprep.subr.bf16.mxu0 0
      %858 = vmatpush2.bf16.xpose.msra.mxu0 0
      %859 = vmatprep.mubr.bf16.mxu0 0
      %860 = vmatmul.mubr.bf16.gmra.mxu0 %v822
      %v861 = vpop.f32.mrf.mxu0
      %v862 = vadd.f32 0.0, %v861
      %v863 = vpop.f32.mrf.mxu0
      %v864 = vpop.f32.mrf.mxu0
      %v865 = vadd.f32 0.0, %v864
      %v866 = vpop.f32.mrf.mxu0
      %867 = vdwg.mxu0
      %v868 = vmul.f32 %v862, 0.35355338
      %v869 = vmul.f32 %v865, 0.35355338
      %v870 = vsel %vm614, %v868, -inf
      %871 = vmax.xlane.f32.xlu0 %v870
      %v872 = vpop.xlane.xlu0 %871
      %v873 = vsel %vm614, %v869, -inf
      %874 = vmax.xlane.f32.xlu0 %v873
      %v875 = vpop.xlane.xlu0 %874
      %v876 = vsub.f32 %v868, %v872
      %v877 = vsub.f32 %v869, %v875
      %v878 = vmul.f32 %v876, 1.442695
      %v879 = vpow.pop %v878
      %v880 = vmul.f32 %v877, 1.442695
      %v881 = vpow.pop %v880
      %v882 = vsel %vm614, %v879, 0.0
      %883 = vadd.xlane.f32.xlu0 %v882
      %v884 = vpop.xlane.xlu0 %883
      %v885 = vsel %vm614, %v881, 0.0
      %886 = vadd.xlane.f32.xlu0 %v885
      %v887 = vpop.xlane.xlu0 %886
      %v888 = vrcp.pop %v884
      %v889 = vmul.f32 %v879, %v888
      %v890 = vrcp.pop %v887
      %v891 = vmul.f32 %v881, %v890
      %s892 = scalar_lea.vmem %s426, 32
      %893 = vst.msk [vmem:[%s892] sm:$0xff] %vm614, %v889
      %894 = vst.msk [vmem:[%s892 + $0x8] sm:$0xff] %vm614, %v891
      %v895 = vpack.c.bf16 %v891, %v889
      %896 = vrot.lane.b32.xlu0 %v561, 64
      %v897 = vpop.permute.xlu0 %896
      %v900 = vsel %vm614, %v895, 0
      %902 = vmatprep.subr.bf16.mxu0 0
      %903 = vmatpush1.bf16.msra.mxu0 0
      %904 = vmatprep.subr.bf16.mxu0 0
      %905 = vmatpush1.bf16.msra.mxu0 0
      %906 = vmatprep.subr.bf16.mxu0 0
      %907 = vmatpush1.bf16.msra.mxu0 0
      %908 = vmatprep.subr.bf16.mxu0 0
      %909 = vmatpush1.bf16.msra.mxu0 0
      %910 = vmatprep.subr.bf16.mxu0 0
      %911 = vmatpush1.bf16.msra.mxu0 0
      %912 = vmatprep.subr.bf16.mxu0 0
      %913 = vmatpush1.bf16.msra.mxu0 0
      %914 = vmatprep.subr.bf16.mxu0 0
      %915 = vmatpush1.bf16.msra.mxu0 0
      %916 = vmatprep.subr.bf16.mxu0 0
      %917 = vmatpush1.bf16.msra.mxu0 %v897
      %918 = vmatprep.subr.bf16.mxu0 0
      %919 = vmatpush2.bf16.msra.mxu0 0
      %920 = vmatprep.subr.bf16.mxu0 0
      %921 = vmatpush2.bf16.msra.mxu0 0
      %922 = vmatprep.subr.bf16.mxu0 0
      %923 = vmatpush2.bf16.msra.mxu0 0
      %924 = vmatprep.subr.bf16.mxu0 0
      %925 = vmatpush2.bf16.msra.mxu0 0
      %926 = vmatprep.subr.bf16.mxu0 0
      %927 = vmatpush2.bf16.msra.mxu0 0
      %928 = vmatprep.subr.bf16.mxu0 0
      %929 = vmatpush2.bf16.msra.mxu0 0
      %930 = vmatprep.subr.bf16.mxu0 0
      %931 = vmatpush2.bf16.msra.mxu0 0
      %932 = vmatprep.subr.bf16.mxu0 0
      %933 = vmatpush2.bf16.msra.mxu0 0
      %934 = vmatprep.mubr.bf16.mxu0 0
      %935 = vmatmul.mubr.bf16.gmra.mxu0 %v900
      %v936 = vpop.f32.mrf.mxu0
      %v937 = vadd.f32 0.0, %v936
      %v938 = vpop.f32.mrf.mxu0
      %v939 = vpop.f32.mrf.mxu0
      %v940 = vadd.f32 0.0, %v939
      %v941 = vpop.f32.mrf.mxu0
      %942 = vdwg.mxu0
      %943 = vst.msk [vmem:[#allocation2 + $0x20] sm:$0xff] %vm439, %v937
      %944 = vst.msk [vmem:[#allocation2 + $0x28] sm:$0xff] %vm439, %v940
      %945 = vrot.lane.b32.xlu0 %v561, 56
      %v946 = vpop.permute.xlu0 %945
      %947 = vrot.lane.b32.xlu0 %v561, 48
      %v948 = vpop.permute.xlu0 %947
      %v950 = vsel %vm439, %v946, 0
      %v953 = vsel %vm439, %v948, 0
      %955 = vmatprep.subr.bf16.mxu0 0
      %956 = vmatpush1.bf16.xpose.msra.mxu0 0
      %957 = vmatprep.subr.bf16.mxu0 0
      %958 = vmatpush1.bf16.xpose.msra.mxu0 0
      %959 = vmatprep.subr.bf16.mxu0 0
      %960 = vmatpush1.bf16.xpose.msra.mxu0 0
      %961 = vmatprep.subr.bf16.mxu0 0
      %962 = vmatpush1.bf16.xpose.msra.mxu0 0
      %963 = vmatprep.subr.bf16.mxu0 0
      %964 = vmatpush1.bf16.xpose.msra.mxu0 0
      %965 = vmatprep.subr.bf16.mxu0 0
      %966 = vmatpush1.bf16.xpose.msra.mxu0 0
      %967 = vmatprep.subr.bf16.mxu0 0
      %968 = vmatpush1.bf16.xpose.msra.mxu0 0
      %969 = vmatprep.subr.bf16.mxu0 0
      %970 = vmatpush1.bf16.xpose.msra.mxu0 %v953
      %971 = vmatprep.subr.bf16.mxu0 0
      %972 = vmatpush2.bf16.xpose.msra.mxu0 0
      %973 = vmatprep.subr.bf16.mxu0 0
      %974 = vmatpush2.bf16.xpose.msra.mxu0 0
      %975 = vmatprep.subr.bf16.mxu0 0
      %976 = vmatpush2.bf16.xpose.msra.mxu0 0
      %977 = vmatprep.subr.bf16.mxu0 0
      %978 = vmatpush2.bf16.xpose.msra.mxu0 0
      %979 = vmatprep.subr.bf16.mxu0 0
      %980 = vmatpush2.bf16.xpose.msra.mxu0 0
      %981 = vmatprep.subr.bf16.mxu0 0
      %982 = vmatpush2.bf16.xpose.msra.mxu0 0
      %983 = vmatprep.subr.bf16.mxu0 0
      %984 = vmatpush2.bf16.xpose.msra.mxu0 0
      %985 = vmatprep.subr.bf16.mxu0 0
      %986 = vmatpush2.bf16.xpose.msra.mxu0 0
      %987 = vmatprep.mubr.bf16.mxu0 0
      %988 = vmatmul.mubr.bf16.gmra.mxu0 %v950
      %v989 = vpop.f32.mrf.mxu0
      %v990 = vadd.f32 0.0, %v989
      %v991 = vpop.f32.mrf.mxu0
      %v992 = vpop.f32.mrf.mxu0
      %v993 = vadd.f32 0.0, %v992
      %v994 = vpop.f32.mrf.mxu0
      %995 = vdwg.mxu0
      %v996 = vmul.f32 %v990, 0.35355338
      %v997 = vmul.f32 %v993, 0.35355338
      %v998 = vsel %vm614, %v996, -inf
      %999 = vmax.xlane.f32.xlu0 %v998
      %v1000 = vpop.xlane.xlu0 %999
      %v1001 = vsel %vm614, %v997, -inf
      %1002 = vmax.xlane.f32.xlu0 %v1001
      %v1003 = vpop.xlane.xlu0 %1002
      %v1004 = vsub.f32 %v996, %v1000
      %v1005 = vsub.f32 %v997, %v1003
      %v1006 = vmul.f32 %v1004, 1.442695
      %v1007 = vpow.pop %v1006
      %v1008 = vmul.f32 %v1005, 1.442695
      %v1009 = vpow.pop %v1008
      %v1010 = vsel %vm614, %v1007, 0.0
      %1011 = vadd.xlane.f32.xlu0 %v1010
      %v1012 = vpop.xlane.xlu0 %1011
      %v1013 = vsel %vm614, %v1009, 0.0
      %1014 = vadd.xlane.f32.xlu0 %v1013
      %v1015 = vpop.xlane.xlu0 %1014
      %v1016 = vrcp.pop %v1012
      %v1017 = vmul.f32 %v1007, %v1016
      %v1018 = vrcp.pop %v1015
      %v1019 = vmul.f32 %v1009, %v1018
      %s1020 = scalar_lea.vmem %s426, 48
      %1021 = vst.msk [vmem:[%s1020] sm:$0xff] %vm614, %v1017
      %1022 = vst.msk [vmem:[%s1020 + $0x8] sm:$0xff] %vm614, %v1019
      %v1023 = vpack.c.bf16 %v1019, %v1017
      %1024 = vrot.lane.b32.xlu0 %v561, 40
      %v1025 = vpop.permute.xlu0 %1024
      %v1028 = vsel %vm614, %v1023, 0
      %1030 = vmatprep.subr.bf16.mxu0 0
      %1031 = vmatpush1.bf16.msra.mxu0 0
      %1032 = vmatprep.subr.bf16.mxu0 0
      %1033 = vmatpush1.bf16.msra.mxu0 0
      %1034 = vmatprep.subr.bf16.mxu0 0
      %1035 = vmatpush1.bf16.msra.mxu0 0
      %1036 = vmatprep.subr.bf16.mxu0 0
      %1037 = vmatpush1.bf16.msra.mxu0 0
      %1038 = vmatprep.subr.bf16.mxu0 0
      %1039 = vmatpush1.bf16.msra.mxu0 0
      %1040 = vmatprep.subr.bf16.mxu0 0
      %1041 = vmatpush1.bf16.msra.mxu0 0
      %1042 = vmatprep.subr.bf16.mxu0 0
      %1043 = vmatpush1.bf16.msra.mxu0 0
      %1044 = vmatprep.subr.bf16.mxu0 0
      %1045 = vmatpush1.bf16.msra.mxu0 %v1025
      %1046 = vmatprep.subr.bf16.mxu0 0
      %1047 = vmatpush2.bf16.msra.mxu0 0
      %1048 = vmatprep.subr.bf16.mxu0 0
      %1049 = vmatpush2.bf16.msra.mxu0 0
      %1050 = vmatprep.subr.bf16.mxu0 0
      %1051 = vmatpush2.bf16.msra.mxu0 0
      %1052 = vmatprep.subr.bf16.mxu0 0
      %1053 = vmatpush2.bf16.msra.mxu0 0
      %1054 = vmatprep.subr.bf16.mxu0 0
      %1055 = vmatpush2.bf16.msra.mxu0 0
      %1056 = vmatprep.subr.bf16.mxu0 0
      %1057 = vmatpush2.bf16.msra.mxu0 0
      %1058 = vmatprep.subr.bf16.mxu0 0
      %1059 = vmatpush2.bf16.msra.mxu0 0
      %1060 = vmatprep.subr.bf16.mxu0 0
      %1061 = vmatpush2.bf16.msra.mxu0 0
      %1062 = vmatprep.mubr.bf16.mxu0 0
      %1063 = vmatmul.mubr.bf16.gmra.mxu0 %v1028
      %v1064 = vpop.f32.mrf.mxu0
      %v1065 = vadd.f32 0.0, %v1064
      %v1066 = vpop.f32.mrf.mxu0
      %v1067 = vpop.f32.mrf.mxu0
      %v1068 = vadd.f32 0.0, %v1067
      %v1069 = vpop.f32.mrf.mxu0
      %1070 = vdwg.mxu0
      %1071 = vst.msk [vmem:[#allocation2 + $0x30] sm:$0xff] %vm439, %v1065
      %1072 = vst.msk [vmem:[#allocation2 + $0x38] sm:$0xff] %vm439, %v1068
      %v1073 = vld [vmem:[#allocation2] ss:$4 sm:$0xff]
      %s1074 = scalar_lea.vmem [#allocation2], 32
      %v1075 = vld [vmem:[%s1074] ss:$4 sm:$0xff]
      %s1076 = scalar_lea.vmem [#allocation2], 1
      %v1077 = vld [vmem:[%s1076] ss:$4 sm:$0xff]
      %s1078 = scalar_lea.vmem [#allocation2], 33
      %v1079 = vld [vmem:[%s1078] ss:$4 sm:$0xff]
      %s1080 = scalar_lea.vmem [#allocation2], 2
      %v1081 = vld [vmem:[%s1080] ss:$4 sm:$0xff]
      %s1082 = scalar_lea.vmem [#allocation2], 34
      %v1083 = vld [vmem:[%s1082] ss:$4 sm:$0xff]
      %s1084 = scalar_lea.vmem [#allocation2], 3
      %v1085 = vld [vmem:[%s1084] ss:$4 sm:$0xff]
      %s1086 = scalar_lea.vmem [#allocation2], 35
      %v1087 = vld [vmem:[%s1086] ss:$4 sm:$0xff]
      %1090 = vrot.lane.b32.xlu0 %v1077, 8
      %v1091 = vpop.permute.xlu0 %1090
      %1092 = vrot.lane.b32.xlu0 %v1079, 8
      %v1093 = vpop.permute.xlu0 %1092
      %1098 = vrot.lane.b32.xlu0 %v1081, 16
      %v1099 = vpop.permute.xlu0 %1098
      %1100 = vrot.lane.b32.xlu0 %v1083, 16
      %v1101 = vpop.permute.xlu0 %1100
      %1106 = vrot.lane.b32.xlu0 %v1085, 24
      %v1107 = vpop.permute.xlu0 %1106
      %1108 = vrot.lane.b32.xlu0 %v1087, 24
      %v1109 = vpop.permute.xlu0 %1108
      %v1112 = vsel %vm439, %v1073, %v1091
      %v1113 = vsel %vm439, %v1075, %v1093
      %v1114 = vsel %vm614, %v1112, %v1099
      %v1115 = vsel %vm614, %v1113, %v1101
      %vm1116 = vcmask 195584
      %v1117 = vsel %vm1116, %v1114, %v1107
      %v1118 = vsel %vm1116, %v1115, %v1109
      %v1119 = vpack.c.bf16 %v1118, %v1117
      %v1120 = vld [vmem:[%s5] sm:$0xf]
      %v1121 = vld [vmem:[%s5 + $0x4] sm:$0xf]
      %v1122 = vld [vmem:[%s5 + $0x8] sm:$0xf]
      %v1123 = vld [vmem:[%s5 + $0xc] sm:$0xf]
      %v1124 = vlaneseq
      %v1125 = vshrl.u32 %v1124, 7
      %v1126 = vsub.s32 1, %v1125
      %v1127 = vrot.slane %v494, %v1126
      %v1132 = vunpack.c.l.b16 %v1120
      %v1133 = vunpack.c.l.b16 %v1121
      %v1134 = vunpack.c.l.b16 %v1122
      %v1135 = vunpack.c.l.b16 %v1123
      %v1136 = vpack.c.b16 %v1133, %v1132
      %v1137 = vpack.c.b16 %v1135, %v1134
      %v1141 = vsel %vm516, %v1119, 0
      %1143 = vmatprep.subr.bf16.mxu0 0
      %1144 = vmatpush1.bf16.msra.mxu0 0
      %1145 = vmatprep.subr.bf16.mxu0 0
      %1146 = vmatpush1.bf16.msra.mxu0 0
      %1147 = vmatprep.subr.bf16.mxu0 0
      %1148 = vmatpush1.bf16.msra.mxu0 0
      %1149 = vmatprep.subr.bf16.mxu0 0
      %1150 = vmatpush1.bf16.msra.mxu0 0
      %1151 = vmatprep.subr.bf16.mxu0 0
      %1152 = vmatpush1.bf16.msra.mxu0 0
      %1153 = vmatprep.subr.bf16.mxu0 0
      %1154 = vmatpush1.bf16.msra.mxu0 0
      %1155 = vmatprep.subr.bf16.mxu0 0
      %1156 = vmatpush1.bf16.msra.mxu0 %v1137
      %1157 = vmatprep.subr.bf16.mxu0 0
      %1158 = vmatpush1.bf16.msra.mxu0 %v1136
      %1159 = vmatprep.subr.bf16.mxu0 0
      %1160 = vmatpush2.bf16.msra.mxu0 0
      %1161 = vmatprep.subr.bf16.mxu0 0
      %1162 = vmatpush2.bf16.msra.mxu0 0
      %1163 = vmatprep.subr.bf16.mxu0 0
      %1164 = vmatpush2.bf16.msra.mxu0 0
      %1165 = vmatprep.subr.bf16.mxu0 0
      %1166 = vmatpush2.bf16.msra.mxu0 0
      %1167 = vmatprep.subr.bf16.mxu0 0
      %1168 = vmatpush2.bf16.msra.mxu0 0
      %1169 = vmatprep.subr.bf16.mxu0 0
      %1170 = vmatpush2.bf16.msra.mxu0 0
      %1171 = vmatprep.subr.bf16.mxu0 0
      %1172 = vmatpush2.bf16.msra.mxu0 0
      %1173 = vmatprep.subr.bf16.mxu0 0
      %1174 = vmatpush2.bf16.msra.mxu0 0
      %1175 = vmatprep.mubr.bf16.mxu0 0
      %1176 = vmatmul.mubr.bf16.gmra.mxu0 %v1141
      %v1177 = vpop.f32.mrf.mxu0
      %v1178 = vadd.f32 %v1127, %v1177
      %v1179 = vpop.f32.mrf.mxu0
      %v1180 = vpop.f32.mrf.mxu0
      %v1181 = vadd.f32 %v1127, %v1180
      %v1182 = vpop.f32.mrf.mxu0
      %1183 = vdwg.mxu0
      %v1184 = vadd.f32 %v492, %v1178
      %v1185 = vadd.f32 %v493, %v1181
      %v1186 = vsel %vm516, %v1184, 0.0
      %1187 = vadd.xlane.f32.xlu0 %v1186
      %v1188 = vpop.xlane.xlu0 %1187
      %v1189 = vsel %vm516, %v1185, 0.0
      %1190 = vadd.xlane.f32.xlu0 %v1189
      %v1191 = vpop.xlane.xlu0 %1190
      %v1192 = vrcp.pop 32.0
      %v1193 = vmul.f32 %v1188, %v1192
      %v1194 = vmul.f32 %v1191, %v1192
      %v1195 = vsub.f32 %v1184, %v1193
      %v1196 = vsub.f32 %v1185, %v1194
      %v1197 = vmul.f32 %v1195, %v1195
      %v1198 = vmul.f32 %v1196, %v1196
      %v1199 = vsel %vm516, %v1197, 0.0
      %1200 = vadd.xlane.f32.xlu0 %v1199
      %v1201 = vpop.xlane.xlu0 %1200
      %v1202 = vsel %vm516, %v1198, 0.0
      %1203 = vadd.xlane.f32.xlu0 %v1202
      %v1204 = vpop.xlane.xlu0 %1203
      %v1205 = vmul.f32 %v1201, %v1192
      %v1206 = vmul.f32 %v1204, %v1192
      %v1207 = vadd.f32 %v1205, 1e-09
      %v1208 = vadd.f32 %v1206, 1e-09
      %v1209 = vrsqrt.pop %v1207
      %v1210 = vrsqrt.pop %v1208
      %v1211 = vmul.f32 %v1195, %v1209
      %v1212 = vmul.f32 %v1196, %v1210
      %v1213 = vlaneseq
      %v1214 = vshrl.u32 %v1213, 7
      %v1215 = vsub.s32 4, %v1214
      %v1216 = vrot.slane %v494, %v1215
      %v1217 = vmul.f32 %v1211, %v1216
      %v1218 = vmul.f32 %v1212, %v1216
      %v1219 = vlaneseq
      %v1220 = vshrl.u32 %v1219, 7
      %v1221 = vsub.s32 5, %v1220
      %v1222 = vrot.slane %v494, %v1221
      %v1223 = vadd.f32 %v1217, %v1222
      %v1224 = vadd.f32 %v1218, %v1222
      %v1225 = vpack.c.bf16 %v1224, %v1223
      %v1226 = vld [vmem:[%s6] sm:$0xf]
      %v1227 = vld [vmem:[%s6 + $0x4] sm:$0xf]
      %v1228 = vld [vmem:[%s6 + $0x8] sm:$0xf]
      %v1229 = vld [vmem:[%s6 + $0xc] sm:$0xf]
      %v1230 = vlaneseq
      %v1231 = vshrl.u32 %v1230, 7
      %v1232 = vsub.s32 2, %v1231
      %v1233 = vrot.slane %v494, %v1232
      %v1238 = vunpack.c.l.b16 %v1226
      %v1239 = vunpack.c.l.b16 %v1227
      %v1240 = vunpack.c.l.b16 %v1228
      %v1241 = vunpack.c.l.b16 %v1229
      %v1242 = vpack.c.b16 %v1239, %v1238
      %v1243 = vpack.c.b16 %v1241, %v1240
      %v1247 = vsel %vm516, %v1225, 0
      %1249 = vmatprep.subr.bf16.mxu0 0
      %1250 = vmatpush1.bf16.msra.mxu0 0
      %1251 = vmatprep.subr.bf16.mxu0 0
      %1252 = vmatpush1.bf16.msra.mxu0 0
      %1253 = vmatprep.subr.bf16.mxu0 0
      %1254 = vmatpush1.bf16.msra.mxu0 0
      %1255 = vmatprep.subr.bf16.mxu0 0
      %1256 = vmatpush1.bf16.msra.mxu0 0
      %1257 = vmatprep.subr.bf16.mxu0 0
      %1258 = vmatpush1.bf16.msra.mxu0 0
      %1259 = vmatprep.subr.bf16.mxu0 0
      %1260 = vmatpush1.bf16.msra.mxu0 0
      %1261 = vmatprep.subr.bf16.mxu0 0
      %1262 = vmatpush1.bf16.msra.mxu0 %v1243
      %1263 = vmatprep.subr.bf16.mxu0 0
      %1264 = vmatpush1.bf16.msra.mxu0 %v1242
      %1265 = vmatprep.subr.bf16.mxu0 0
      %1266 = vmatpush2.bf16.msra.mxu0 0
      %1267 = vmatprep.subr.bf16.mxu0 0
      %1268 = vmatpush2.bf16.msra.mxu0 0
      %1269 = vmatprep.subr.bf16.mxu0 0
      %1270 = vmatpush2.bf16.msra.mxu0 0
      %1271 = vmatprep.subr.bf16.mxu0 0
      %1272 = vmatpush2.bf16.msra.mxu0 0
      %1273 = vmatprep.subr.bf16.mxu0 0
      %1274 = vmatpush2.bf16.msra.mxu0 0
      %1275 = vmatprep.subr.bf16.mxu0 0
      %1276 = vmatpush2.bf16.msra.mxu0 0
      %1277 = vmatprep.subr.bf16.mxu0 0
      %1278 = vmatpush2.bf16.msra.mxu0 0
      %1279 = vmatprep.subr.bf16.mxu0 0
      %1280 = vmatpush2.bf16.msra.mxu0 0
      %1281 = vmatprep.mubr.bf16.mxu0 0
      %1282 = vmatmul.mubr.bf16.gmra.mxu0 %v1247
      %v1283 = vpop.f32.mrf.mxu0
      %v1284 = vadd.f32 %v1233, %v1283
      %v1285 = vpop.f32.mrf.mxu0
      %v1286 = vpop.f32.mrf.mxu0
      %v1287 = vadd.f32 %v1233, %v1286
      %v1288 = vpop.f32.mrf.mxu0
      %1289 = vdwg.mxu0
      %v1290 = vmax.f32 %v1284, 0.0
      %v1291 = vmax.f32 %v1287, 0.0
      %v1292 = vpack.c.bf16 %v1291, %v1290
      %v1293 = vld [vmem:[%s7] sm:$0xf]
      %v1294 = vld [vmem:[%s7 + $0x4] sm:$0xf]
      %v1295 = vld [vmem:[%s7 + $0x8] sm:$0xf]
      %v1296 = vld [vmem:[%s7 + $0xc] sm:$0xf]
      %v1297 = vld [vmem:[%s7 + $0x10] sm:$0xf]
      %v1298 = vld [vmem:[%s7 + $0x14] sm:$0xf]
      %v1299 = vld [vmem:[%s7 + $0x18] sm:$0xf]
      %v1300 = vld [vmem:[%s7 + $0x1c] sm:$0xf]
      %v1301 = vlaneseq
      %v1302 = vshrl.u32 %v1301, 7
      %v1303 = vsub.s32 3, %v1302
      %v1304 = vrot.slane %v494, %v1303
      %v1313 = vunpack.c.l.b16 %v1293
      %v1314 = vunpack.c.l.b16 %v1294
      %v1315 = vunpack.c.l.b16 %v1295
      %v1316 = vunpack.c.l.b16 %v1296
      %v1317 = vunpack.c.l.b16 %v1297
      %v1318 = vunpack.c.l.b16 %v1298
      %v1319 = vunpack.c.l.b16 %v1299
      %v1320 = vunpack.c.l.b16 %v1300
      %v1321 = vpack.c.b16 %v1314, %v1313
      %v1322 = vpack.c.b16 %v1316, %v1315
      %v1323 = vpack.c.b16 %v1318, %v1317
      %v1324 = vpack.c.b16 %v1320, %v1319
      %vm1329 = vcmask 523264
      %v1331 = vsel %vm1329, %v1292, 0
      %1333 = vmatprep.subr.bf16.mxu0 0
      %1334 = vmatpush1.bf16.msra.mxu0 0
      %1335 = vmatprep.subr.bf16.mxu0 0
      %1336 = vmatpush1.bf16.msra.mxu0 0
      %1337 = vmatprep.subr.bf16.mxu0 0
      %1338 = vmatpush1.bf16.msra.mxu0 0
      %1339 = vmatprep.subr.bf16.mxu0 0
      %1340 = vmatpush1.bf16.msra.mxu0 0
      %1341 = vmatprep.subr.bf16.mxu0 0
      %1342 = vmatpush1.bf16.msra.mxu0 %v1324
      %1343 = vmatprep.subr.bf16.mxu0 0
      %1344 = vmatpush1.bf16.msra.mxu0 %v1323
      %1345 = vmatprep.subr.bf16.mxu0 0
      %1346 = vmatpush1.bf16.msra.mxu0 %v1322
      %1347 = vmatprep.subr.bf16.mxu0 0
      %1348 = vmatpush1.bf16.msra.mxu0 %v1321
      %1349 = vmatprep.subr.bf16.mxu0 0
      %1350 = vmatpush2.bf16.msra.mxu0 0
      %1351 = vmatprep.subr.bf16.mxu0 0
      %1352 = vmatpush2.bf16.msra.mxu0 0
      %1353 = vmatprep.subr.bf16.mxu0 0
      %1354 = vmatpush2.bf16.msra.mxu0 0
      %1355 = vmatprep.subr.bf16.mxu0 0
      %1356 = vmatpush2.bf16.msra.mxu0 0
      %1357 = vmatprep.subr.bf16.mxu0 0
      %1358 = vmatpush2.bf16.msra.mxu0 0
      %1359 = vmatprep.subr.bf16.mxu0 0
      %1360 = vmatpush2.bf16.msra.mxu0 0
      %1361 = vmatprep.subr.bf16.mxu0 0
      %1362 = vmatpush2.bf16.msra.mxu0 0
      %1363 = vmatprep.subr.bf16.mxu0 0
      %1364 = vmatpush2.bf16.msra.mxu0 0
      %1365 = vmatprep.mubr.bf16.mxu0 0
      %1366 = vmatmul.mubr.bf16.gmra.mxu0 %v1331
      %v1367 = vpop.f32.mrf.mxu0
      %v1368 = vadd.f32 %v1304, %v1367
      %v1369 = vpop.f32.mrf.mxu0
      %v1370 = vpop.f32.mrf.mxu0
      %v1371 = vadd.f32 %v1304, %v1370
      %v1372 = vpop.f32.mrf.mxu0
      %1373 = vdwg.mxu0
      %v1374 = vadd.f32 %v1223, %v1368
      %v1375 = vadd.f32 %v1224, %v1371
      %v1376 = vsel %vm516, %v1374, 0.0
      %1377 = vadd.xlane.f32.xlu0 %v1376
      %v1378 = vpop.xlane.xlu0 %1377
      %v1379 = vsel %vm516, %v1375, 0.0
      %1380 = vadd.xlane.f32.xlu0 %v1379
      %v1381 = vpop.xlane.xlu0 %1380
      %v1382 = vmul.f32 %v1378, %v1192
      %v1383 = vmul.f32 %v1381, %v1192
      %v1384 = vsub.f32 %v1374, %v1382
      %v1385 = vsub.f32 %v1375, %v1383
      %v1386 = vmul.f32 %v1384, %v1384
      %v1387 = vmul.f32 %v1385, %v1385
      %v1388 = vsel %vm516, %v1386, 0.0
      %1389 = vadd.xlane.f32.xlu0 %v1388
      %v1390 = vpop.xlane.xlu0 %1389
      %v1391 = vsel %vm516, %v1387, 0.0
      %1392 = vadd.xlane.f32.xlu0 %v1391
      %v1393 = vpop.xlane.xlu0 %1392
      %v1394 = vmul.f32 %v1390, %v1192
      %v1395 = vmul.f32 %v1393, %v1192
      %v1396 = vadd.f32 %v1394, 1e-09
      %v1397 = vadd.f32 %v1395, 1e-09
      %v1398 = vrsqrt.pop %v1396
      %v1399 = vrsqrt.pop %v1397
      %v1400 = vmul.f32 %v1384, %v1398
      %v1401 = vmul.f32 %v1385, %v1399
      %v1402 = vlaneseq
      %v1403 = vshrl.u32 %v1402, 7
      %v1404 = vsub.s32 6, %v1403
      %v1405 = vrot.slane %v494, %v1404
      %v1406 = vmul.f32 %v1400, %v1405
      %v1407 = vmul.f32 %v1401, %v1405
      %v1408 = vlaneseq
      %v1409 = vshrl.u32 %v1408, 7
      %v1410 = vsub.s32 7, %v1409
      %v1411 = vrot.slane %v494, %v1410
      %v1412 = vadd.f32 %v1406, %v1411
      %v1413 = vadd.f32 %v1407, %v1411
      %s1414 = scalar_lea.vmem %s8, 8
      %v1415 = vld [vmem:[%s1414] sm:$0xff]
      %v1416 = vpack.c.bf16 %v1413, %v1412
      %s1417 = scalar_lea.vmem %s4, 16
      %v1418 = vld [vmem:[%s1417] sm:$0xf]
      %v1419 = vld [vmem:[%s1417 + $0x4] sm:$0xf]
      %v1420 = vld [vmem:[%s1417 + $0x8] sm:$0xf]
      %v1421 = vld [vmem:[%s1417 + $0xc] sm:$0xf]
      %v1422 = vlaneseq
      %v1423 = vshrl.u32 %v1422, 7
      %v1424 = vsub.s32 0, %v1423
      %v1425 = vrot.slane %v1415, %v1424
      %v1430 = vunpack.c.l.b16 %v1418
      %v1431 = vunpack.c.l.b16 %v1419
      %v1432 = vunpack.c.l.b16 %v1420
      %v1433 = vunpack.c.l.b16 %v1421
      %v1434 = vpack.c.b16 %v1431, %v1430
      %v1435 = vpack.c.b16 %v1433, %v1432
      %v1439 = vsel %vm516, %v1416, 0
      %1441 = vmatprep.subr.bf16.mxu0 0
      %1442 = vmatpush1.bf16.msra.mxu0 0
      %1443 = vmatprep.subr.bf16.mxu0 0
      %1444 = vmatpush1.bf16.msra.mxu0 0
      %1445 = vmatprep.subr.bf16.mxu0 0
      %1446 = vmatpush1.bf16.msra.mxu0 0
      %1447 = vmatprep.subr.bf16.mxu0 0
      %1448 = vmatpush1.bf16.msra.mxu0 0
      %1449 = vmatprep.subr.bf16.mxu0 0
      %1450 = vmatpush1.bf16.msra.mxu0 0
      %1451 = vmatprep.subr.bf16.mxu0 0
      %1452 = vmatpush1.bf16.msra.mxu0 0
      %1453 = vmatprep.subr.bf16.mxu0 0
      %1454 = vmatpush1.bf16.msra.mxu0 %v1435
      %1455 = vmatprep.subr.bf16.mxu0 0
      %1456 = vmatpush1.bf16.msra.mxu0 %v1434
      %1457 = vmatprep.subr.bf16.mxu0 0
      %1458 = vmatpush2.bf16.msra.mxu0 0
      %1459 = vmatprep.subr.bf16.mxu0 0
      %1460 = vmatpush2.bf16.msra.mxu0 0
      %1461 = vmatprep.subr.bf16.mxu0 0
      %1462 = vmatpush2.bf16.msra.mxu0 0
      %1463 = vmatprep.subr.bf16.mxu0 0
      %1464 = vmatpush2.bf16.msra.mxu0 0
      %1465 = vmatprep.subr.bf16.mxu0 0
      %1466 = vmatpush2.bf16.msra.mxu0 0
      %1467 = vmatprep.subr.bf16.mxu0 0
      %1468 = vmatpush2.bf16.msra.mxu0 0
      %1469 = vmatprep.subr.bf16.mxu0 0
      %1470 = vmatpush2.bf16.msra.mxu0 0
      %1471 = vmatprep.subr.bf16.mxu0 0
      %1472 = vmatpush2.bf16.msra.mxu0 0
      %1473 = vmatprep.mubr.bf16.mxu0 0
      %1474 = vmatmul.mubr.bf16.gmra.mxu0 %v1439
      %v1475 = vpop.f32.mrf.mxu0
      %v1476 = vadd.f32 %v1425, %v1475
      %v1477 = vpop.f32.mrf.mxu0
      %v1478 = vpop.f32.mrf.mxu0
      %v1479 = vadd.f32 %v1425, %v1478
      %v1480 = vpop.f32.mrf.mxu0
      %1481 = vdwg.mxu0
      %v1482 = vpack.c.bf16 %v1479, %v1476
      %1484 = vrot.lane.b32.xlu0 %v1482, 120
      %v1485 = vpop.permute.xlu0 %1484
      %v1487 = vsel %vm439, %v1482, 0
      %v1490 = vsel %vm439, %v1485, 0
      %1492 = vmatprep.subr.bf16.mxu0 0
      %1493 = vmatpush1.bf16.xpose.msra.mxu0 0
      %1494 = vmatprep.subr.bf16.mxu0 0
      %1495 = vmatpush1.bf16.xpose.msra.mxu0 0
      %1496 = vmatprep.subr.bf16.mxu0 0
      %1497 = vmatpush1.bf16.xpose.msra.mxu0 0
      %1498 = vmatprep.subr.bf16.mxu0 0
      %1499 = vmatpush1.bf16.xpose.msra.mxu0 0
      %1500 = vmatprep.subr.bf16.mxu0 0
      %1501 = vmatpush1.bf16.xpose.msra.mxu0 0
      %1502 = vmatprep.subr.bf16.mxu0 0
      %1503 = vmatpush1.bf16.xpose.msra.mxu0 0
      %1504 = vmatprep.subr.bf16.mxu0 0
      %1505 = vmatpush1.bf16.xpose.msra.mxu0 0
      %1506 = vmatprep.subr.bf16.mxu0 0
      %1507 = vmatpush1.bf16.xpose.msra.mxu0 %v1490
      %1508 = vmatprep.subr.bf16.mxu0 0
      %1509 = vmatpush2.bf16.xpose.msra.mxu0 0
      %1510 = vmatprep.subr.bf16.mxu0 0
      %1511 = vmatpush2.bf16.xpose.msra.mxu0 0
      %1512 = vmatprep.subr.bf16.mxu0 0
      %1513 = vmatpush2.bf16.xpose.msra.mxu0 0
      %1514 = vmatprep.subr.bf16.mxu0 0
      %1515 = vmatpush2.bf16.xpose.msra.mxu0 0
      %1516 = vmatprep.subr.bf16.mxu0 0
      %1517 = vmatpush2.bf16.xpose.msra.mxu0 0
      %1518 = vmatprep.subr.bf16.mxu0 0
      %1519 = vmatpush2.bf16.xpose.msra.mxu0 0
      %1520 = vmatprep.subr.bf16.mxu0 0
      %1521 = vmatpush2.bf16.xpose.msra.mxu0 0
      %1522 = vmatprep.subr.bf16.mxu0 0
      %1523 = vmatpush2.bf16.xpose.msra.mxu0 0
      %1524 = vmatprep.mubr.bf16.mxu0 0
      %1525 = vmatmul.mubr.bf16.gmra.mxu0 %v1487
      %v1526 = vpop.f32.mrf.mxu0
      %v1527 = vadd.f32 0.0, %v1526
      %v1528 = vpop.f32.mrf.mxu0
      %v1529 = vpop.f32.mrf.mxu0
      %v1530 = vadd.f32 0.0, %v1529
      %v1531 = vpop.f32.mrf.mxu0
      %1532 = vdwg.mxu0
      %v1533 = vmul.f32 %v1527, 0.35355338
      %v1534 = vmul.f32 %v1530, 0.35355338
      %v1535 = vsel %vm614, %v1533, -inf
      %1536 = vmax.xlane.f32.xlu0 %v1535
      %v1537 = vpop.xlane.xlu0 %1536
      %v1538 = vsel %vm614, %v1534, -inf
      %1539 = vmax.xlane.f32.xlu0 %v1538
      %v1540 = vpop.xlane.xlu0 %1539
      %v1541 = vsub.f32 %v1533, %v1537
      %v1542 = vsub.f32 %v1534, %v1540
      %v1543 = vmul.f32 %v1541, 1.442695
      %v1544 = vpow.pop %v1543
      %v1545 = vmul.f32 %v1542, 1.442695
      %v1546 = vpow.pop %v1545
      %v1547 = vsel %vm614, %v1544, 0.0
      %1548 = vadd.xlane.f32.xlu0 %v1547
      %v1549 = vpop.xlane.xlu0 %1548
      %v1550 = vsel %vm614, %v1546, 0.0
      %1551 = vadd.xlane.f32.xlu0 %v1550
      %v1552 = vpop.xlane.xlu0 %1551
      %v1553 = vrcp.pop %v1549
      %v1554 = vmul.f32 %v1544, %v1553
      %v1555 = vrcp.pop %v1552
      %v1556 = vmul.f32 %v1546, %v1555
      %s1557 = scalar_lea.vmem %s426, 64
      %1558 = vst.msk [vmem:[%s1557] sm:$0xff] %vm614, %v1554
      %1559 = vst.msk [vmem:[%s1557 + $0x8] sm:$0xff] %vm614, %v1556
      %v1560 = vpack.c.bf16 %v1556, %v1554
      %1561 = vrot.lane.b32.xlu0 %v1482, 112
      %v1562 = vpop.permute.xlu0 %1561
      %v1565 = vsel %vm614, %v1560, 0
      %1567 = vmatprep.subr.bf16.mxu0 0
      %1568 = vmatpush1.bf16.msra.mxu0 0
      %1569 = vmatprep.subr.bf16.mxu0 0
      %1570 = vmatpush1.bf16.msra.mxu0 0
      %1571 = vmatprep.subr.bf16.mxu0 0
      %1572 = vmatpush1.bf16.msra.mxu0 0
      %1573 = vmatprep.subr.bf16.mxu0 0
      %1574 = vmatpush1.bf16.msra.mxu0 0
      %1575 = vmatprep.subr.bf16.mxu0 0
      %1576 = vmatpush1.bf16.msra.mxu0 0
      %1577 = vmatprep.subr.bf16.mxu0 0
      %1578 = vmatpush1.bf16.msra.mxu0 0
      %1579 = vmatprep.subr.bf16.mxu0 0
      %1580 = vmatpush1.bf16.msra.mxu0 0
      %1581 = vmatprep.subr.bf16.mxu0 0
      %1582 = vmatpush1.bf16.msra.mxu0 %v1562
      %1583 = vmatprep.subr.bf16.mxu0 0
      %1584 = vmatpush2.bf16.msra.mxu0 0
      %1585 = vmatprep.subr.bf16.mxu0 0
      %1586 = vmatpush2.bf16.msra.mxu0 0
      %1587 = vmatprep.subr.bf16.mxu0 0
      %1588 = vmatpush2.bf16.msra.mxu0 0
      %1589 = vmatprep.subr.bf16.mxu0 0
      %1590 = vmatpush2.bf16.msra.mxu0 0
      %1591 = vmatprep.subr.bf16.mxu0 0
      %1592 = vmatpush2.bf16.msra.mxu0 0
      %1593 = vmatprep.subr.bf16.mxu0 0
      %1594 = vmatpush2.bf16.msra.mxu0 0
      %1595 = vmatprep.subr.bf16.mxu0 0
      %1596 = vmatpush2.bf16.msra.mxu0 0
      %1597 = vmatprep.subr.bf16.mxu0 0
      %1598 = vmatpush2.bf16.msra.mxu0 0
      %1599 = vmatprep.mubr.bf16.mxu0 0
      %1600 = vmatmul.mubr.bf16.gmra.mxu0 %v1565
      %v1601 = vpop.f32.mrf.mxu0
      %v1602 = vadd.f32 0.0, %v1601
      %v1603 = vpop.f32.mrf.mxu0
      %v1604 = vpop.f32.mrf.mxu0
      %v1605 = vadd.f32 0.0, %v1604
      %v1606 = vpop.f32.mrf.mxu0
      %1607 = vdwg.mxu0
      %1608 = vst.msk [vmem:[#allocation2] sm:$0xff] %vm439, %v1602
      %1609 = vst.msk [vmem:[#allocation2 + $0x8] sm:$0xff] %vm439, %v1605
      %1610 = vrot.lane.b32.xlu0 %v1482, 104
      %v1611 = vpop.permute.xlu0 %1610
      %1612 = vrot.lane.b32.xlu0 %v1482, 96
      %v1613 = vpop.permute.xlu0 %1612
      %v1615 = vsel %vm439, %v1611, 0
      %v1618 = vsel %vm439, %v1613, 0
      %1620 = vmatprep.subr.bf16.mxu0 0
      %1621 = vmatpush1.bf16.xpose.msra.mxu0 0
      %1622 = vmatprep.subr.bf16.mxu0 0
      %1623 = vmatpush1.bf16.xpose.msra.mxu0 0
      %1624 = vmatprep.subr.bf16.mxu0 0
      %1625 = vmatpush1.bf16.xpose.msra.mxu0 0
      %1626 = vmatprep.subr.bf16.mxu0 0
      %1627 = vmatpush1.bf16.xpose.msra.mxu0 0
      %1628 = vmatprep.subr.bf16.mxu0 0
      %1629 = vmatpush1.bf16.xpose.msra.mxu0 0
      %1630 = vmatprep.subr.bf16.mxu0 0
      %1631 = vmatpush1.bf16.xpose.msra.mxu0 0
      %1632 = vmatprep.subr.bf16.mxu0 0
      %1633 = vmatpush1.bf16.xpose.msra.mxu0 0
      %1634 = vmatprep.subr.bf16.mxu0 0
      %1635 = vmatpush1.bf16.xpose.msra.mxu0 %v1618
      %1636 = vmatprep.subr.bf16.mxu0 0
      %1637 = vmatpush2.bf16.xpose.msra.mxu0 0
      %1638 = vmatprep.subr.bf16.mxu0 0
      %1639 = vmatpush2.bf16.xpose.msra.mxu0 0
      %1640 = vmatprep.subr.bf16.mxu0 0
      %1641 = vmatpush2.bf16.xpose.msra.mxu0 0
      %1642 = vmatprep.subr.bf16.mxu0 0
      %1643 = vmatpush2.bf16.xpose.msra.mxu0 0
      %1644 = vmatprep.subr.bf16.mxu0 0
      %1645 = vmatpush2.bf16.xpose.msra.mxu0 0
      %1646 = vmatprep.subr.bf16.mxu0 0
      %1647 = vmatpush2.bf16.xpose.msra.mxu0 0
      %1648 = vmatprep.subr.bf16.mxu0 0
      %1649 = vmatpush2.bf16.xpose.msra.mxu0 0
      %1650 = vmatprep.subr.bf16.mxu0 0
      %1651 = vmatpush2.bf16.xpose.msra.mxu0 0
      %1652 = vmatprep.mubr.bf16.mxu0 0
      %1653 = vmatmul.mubr.bf16.gmra.mxu0 %v1615
      %v1654 = vpop.f32.mrf.mxu0
      %v1655 = vadd.f32 0.0, %v1654
      %v1656 = vpop.f32.mrf.mxu0
      %v1657 = vpop.f32.mrf.mxu0
      %v1658 = vadd.f32 0.0, %v1657
      %v1659 = vpop.f32.mrf.mxu0
      %1660 = vdwg.mxu0
      %v1661 = vmul.f32 %v1655, 0.35355338
      %v1662 = vmul.f32 %v1658, 0.35355338
      %v1663 = vsel %vm614, %v1661, -inf
      %1664 = vmax.xlane.f32.xlu0 %v1663
      %v1665 = vpop.xlane.xlu0 %1664
      %v1666 = vsel %vm614, %v1662, -inf
      %1667 = vmax.xlane.f32.xlu0 %v1666
      %v1668 = vpop.xlane.xlu0 %1667
      %v1669 = vsub.f32 %v1661, %v1665
      %v1670 = vsub.f32 %v1662, %v1668
      %v1671 = vmul.f32 %v1669, 1.442695
      %v1672 = vpow.pop %v1671
      %v1673 = vmul.f32 %v1670, 1.442695
      %v1674 = vpow.pop %v1673
      %v1675 = vsel %vm614, %v1672, 0.0
      %1676 = vadd.xlane.f32.xlu0 %v1675
      %v1677 = vpop.xlane.xlu0 %1676
      %v1678 = vsel %vm614, %v1674, 0.0
      %1679 = vadd.xlane.f32.xlu0 %v1678
      %v1680 = vpop.xlane.xlu0 %1679
      %v1681 = vrcp.pop %v1677
      %v1682 = vmul.f32 %v1672, %v1681
      %v1683 = vrcp.pop %v1680
      %v1684 = vmul.f32 %v1674, %v1683
      %s1685 = scalar_lea.vmem %s426, 80
      %1686 = vst.msk [vmem:[%s1685] sm:$0xff] %vm614, %v1682
      %1687 = vst.msk [vmem:[%s1685 + $0x8] sm:$0xff] %vm614, %v1684
      %v1688 = vpack.c.bf16 %v1684, %v1682
      %1689 = vrot.lane.b32.xlu0 %v1482, 88
      %v1690 = vpop.permute.xlu0 %1689
      %v1693 = vsel %vm614, %v1688, 0
      %1695 = vmatprep.subr.bf16.mxu0 0
      %1696 = vmatpush1.bf16.msra.mxu0 0
      %1697 = vmatprep.subr.bf16.mxu0 0
      %1698 = vmatpush1.bf16.msra.mxu0 0
      %1699 = vmatprep.subr.bf16.mxu0 0
      %1700 = vmatpush1.bf16.msra.mxu0 0
      %1701 = vmatprep.subr.bf16.mxu0 0
      %1702 = vmatpush1.bf16.msra.mxu0 0
      %1703 = vmatprep.subr.bf16.mxu0 0
      %1704 = vmatpush1.bf16.msra.mxu0 0
      %1705 = vmatprep.subr.bf16.mxu0 0
      %1706 = vmatpush1.bf16.msra.mxu0 0
      %1707 = vmatprep.subr.bf16.mxu0 0
      %1708 = vmatpush1.bf16.msra.mxu0 0
      %1709 = vmatprep.subr.bf16.mxu0 0
      %1710 = vmatpush1.bf16.msra.mxu0 %v1690
      %1711 = vmatprep.subr.bf16.mxu0 0
      %1712 = vmatpush2.bf16.msra.mxu0 0
      %1713 = vmatprep.subr.bf16.mxu0 0
      %1714 = vmatpush2.bf16.msra.mxu0 0
      %1715 = vmatprep.subr.bf16.mxu0 0
      %1716 = vmatpush2.bf16.msra.mxu0 0
      %1717 = vmatprep.subr.bf16.mxu0 0
      %1718 = vmatpush2.bf16.msra.mxu0 0
      %1719 = vmatprep.subr.bf16.mxu0 0
      %1720 = vmatpush2.bf16.msra.mxu0 0
      %1721 = vmatprep.subr.bf16.mxu0 0
      %1722 = vmatpush2.bf16.msra.mxu0 0
      %1723 = vmatprep.subr.bf16.mxu0 0
      %1724 = vmatpush2.bf16.msra.mxu0 0
      %1725 = vmatprep.subr.bf16.mxu0 0
      %1726 = vmatpush2.bf16.msra.mxu0 0
      %1727 = vmatprep.mubr.bf16.mxu0 0
      %1728 = vmatmul.mubr.bf16.gmra.mxu0 %v1693
      %v1729 = vpop.f32.mrf.mxu0
      %v1730 = vadd.f32 0.0, %v1729
      %v1731 = vpop.f32.mrf.mxu0
      %v1732 = vpop.f32.mrf.mxu0
      %v1733 = vadd.f32 0.0, %v1732
      %v1734 = vpop.f32.mrf.mxu0
      %1735 = vdwg.mxu0
      %1736 = vst.msk [vmem:[#allocation2 + $0x10] sm:$0xff] %vm439, %v1730
      %1737 = vst.msk [vmem:[#allocation2 + $0x18] sm:$0xff] %vm439, %v1733
      %1738 = vrot.lane.b32.xlu0 %v1482, 80
      %v1739 = vpop.permute.xlu0 %1738
      %1740 = vrot.lane.b32.xlu0 %v1482, 72
      %v1741 = vpop.permute.xlu0 %1740
      %v1743 = vsel %vm439, %v1739, 0
      %v1746 = vsel %vm439, %v1741, 0
      %1748 = vmatprep.subr.bf16.mxu0 0
      %1749 = vmatpush1.bf16.xpose.msra.mxu0 0
      %1750 = vmatprep.subr.bf16.mxu0 0
      %1751 = vmatpush1.bf16.xpose.msra.mxu0 0
      %1752 = vmatprep.subr.bf16.mxu0 0
      %1753 = vmatpush1.bf16.xpose.msra.mxu0 0
      %1754 = vmatprep.subr.bf16.mxu0 0
      %1755 = vmatpush1.bf16.xpose.msra.mxu0 0
      %1756 = vmatprep.subr.bf16.mxu0 0
      %1757 = vmatpush1.bf16.xpose.msra.mxu0 0
      %1758 = vmatprep.subr.bf16.mxu0 0
      %1759 = vmatpush1.bf16.xpose.msra.mxu0 0
      %1760 = vmatprep.subr.bf16.mxu0 0
      %1761 = vmatpush1.bf16.xpose.msra.mxu0 0
      %1762 = vmatprep.subr.bf16.mxu0 0
      %1763 = vmatpush1.bf16.xpose.msra.mxu0 %v1746
      %1764 = vmatprep.subr.bf16.mxu0 0
      %1765 = vmatpush2.bf16.xpose.msra.mxu0 0
      %1766 = vmatprep.subr.bf16.mxu0 0
      %1767 = vmatpush2.bf16.xpose.msra.mxu0 0
      %1768 = vmatprep.subr.bf16.mxu0 0
      %1769 = vmatpush2.bf16.xpose.msra.mxu0 0
      %1770 = vmatprep.subr.bf16.mxu0 0
      %1771 = vmatpush2.bf16.xpose.msra.mxu0 0
      %1772 = vmatprep.subr.bf16.mxu0 0
      %1773 = vmatpush2.bf16.xpose.msra.mxu0 0
      %1774 = vmatprep.subr.bf16.mxu0 0
      %1775 = vmatpush2.bf16.xpose.msra.mxu0 0
      %1776 = vmatprep.subr.bf16.mxu0 0
      %1777 = vmatpush2.bf16.xpose.msra.mxu0 0
      %1778 = vmatprep.subr.bf16.mxu0 0
      %1779 = vmatpush2.bf16.xpose.msra.mxu0 0
      %1780 = vmatprep.mubr.bf16.mxu0 0
      %1781 = vmatmul.mubr.bf16.gmra.mxu0 %v1743
      %v1782 = vpop.f32.mrf.mxu0
      %v1783 = vadd.f32 0.0, %v1782
      %v1784 = vpop.f32.mrf.mxu0
      %v1785 = vpop.f32.mrf.mxu0
      %v1786 = vadd.f32 0.0, %v1785
      %v1787 = vpop.f32.mrf.mxu0
      %1788 = vdwg.mxu0
      %v1789 = vmul.f32 %v1783, 0.35355338
      %v1790 = vmul.f32 %v1786, 0.35355338
      %v1791 = vsel %vm614, %v1789, -inf
      %1792 = vmax.xlane.f32.xlu0 %v1791
      %v1793 = vpop.xlane.xlu0 %1792
      %v1794 = vsel %vm614, %v1790, -inf
      %1795 = vmax.xlane.f32.xlu0 %v1794
      %v1796 = vpop.xlane.xlu0 %1795
      %v1797 = vsub.f32 %v1789, %v1793
      %v1798 = vsub.f32 %v1790, %v1796
      %v1799 = vmul.f32 %v1797, 1.442695
      %v1800 = vpow.pop %v1799
      %v1801 = vmul.f32 %v1798, 1.442695
      %v1802 = vpow.pop %v1801
      %v1803 = vsel %vm614, %v1800, 0.0
      %1804 = vadd.xlane.f32.xlu0 %v1803
      %v1805 = vpop.xlane.xlu0 %1804
      %v1806 = vsel %vm614, %v1802, 0.0
      %1807 = vadd.xlane.f32.xlu0 %v1806
      %v1808 = vpop.xlane.xlu0 %1807
      %v1809 = vrcp.pop %v1805
      %v1810 = vmul.f32 %v1800, %v1809
      %v1811 = vrcp.pop %v1808
      %v1812 = vmul.f32 %v1802, %v1811
      %s1813 = scalar_lea.vmem %s426, 96
      %1814 = vst.msk [vmem:[%s1813] sm:$0xff] %vm614, %v1810
      %1815 = vst.msk [vmem:[%s1813 + $0x8] sm:$0xff] %vm614, %v1812
      %v1816 = vpack.c.bf16 %v1812, %v1810
      %1817 = vrot.lane.b32.xlu0 %v1482, 64
      %v1818 = vpop.permute.xlu0 %1817
      %v1821 = vsel %vm614, %v1816, 0
      %1823 = vmatprep.subr.bf16.mxu0 0
      %1824 = vmatpush1.bf16.msra.mxu0 0
      %1825 = vmatprep.subr.bf16.mxu0 0
      %1826 = vmatpush1.bf16.msra.mxu0 0
      %1827 = vmatprep.subr.bf16.mxu0 0
      %1828 = vmatpush1.bf16.msra.mxu0 0
      %1829 = vmatprep.subr.bf16.mxu0 0
      %1830 = vmatpush1.bf16.msra.mxu0 0
      %1831 = vmatprep.subr.bf16.mxu0 0
      %1832 = vmatpush1.bf16.msra.mxu0 0
      %1833 = vmatprep.subr.bf16.mxu0 0
      %1834 = vmatpush1.bf16.msra.mxu0 0
      %1835 = vmatprep.subr.bf16.mxu0 0
      %1836 = vmatpush1.bf16.msra.mxu0 0
      %1837 = vmatprep.subr.bf16.mxu0 0
      %1838 = vmatpush1.bf16.msra.mxu0 %v1818
      %1839 = vmatprep.subr.bf16.mxu0 0
      %1840 = vmatpush2.bf16.msra.mxu0 0
      %1841 = vmatprep.subr.bf16.mxu0 0
      %1842 = vmatpush2.bf16.msra.mxu0 0
      %1843 = vmatprep.subr.bf16.mxu0 0
      %1844 = vmatpush2.bf16.msra.mxu0 0
      %1845 = vmatprep.subr.bf16.mxu0 0
      %1846 = vmatpush2.bf16.msra.mxu0 0
      %1847 = vmatprep.subr.bf16.mxu0 0
      %1848 = vmatpush2.bf16.msra.mxu0 0
      %1849 = vmatprep.subr.bf16.mxu0 0
      %1850 = vmatpush2.bf16.msra.mxu0 0
      %1851 = vmatprep.subr.bf16.mxu0 0
      %1852 = vmatpush2.bf16.msra.mxu0 0
      %1853 = vmatprep.subr.bf16.mxu0 0
      %1854 = vmatpush2.bf16.msra.mxu0 0
      %1855 = vmatprep.mubr.bf16.mxu0 0
      %1856 = vmatmul.mubr.bf16.gmra.mxu0 %v1821
      %v1857 = vpop.f32.mrf.mxu0
      %v1858 = vadd.f32 0.0, %v1857
      %v1859 = vpop.f32.mrf.mxu0
      %v1860 = vpop.f32.mrf.mxu0
      %v1861 = vadd.f32 0.0, %v1860
      %v1862 = vpop.f32.mrf.mxu0
      %1863 = vdwg.mxu0
      %1864 = vst.msk [vmem:[#allocation2 + $0x20] sm:$0xff] %vm439, %v1858
      %1865 = vst.msk [vmem:[#allocation2 + $0x28] sm:$0xff] %vm439, %v1861
      %1866 = vrot.lane.b32.xlu0 %v1482, 56
      %v1867 = vpop.permute.xlu0 %1866
      %1868 = vrot.lane.b32.xlu0 %v1482, 48
      %v1869 = vpop.permute.xlu0 %1868
      %v1871 = vsel %vm439, %v1867, 0
      %v1874 = vsel %vm439, %v1869, 0
      %1876 = vmatprep.subr.bf16.mxu0 0
      %1877 = vmatpush1.bf16.xpose.msra.mxu0 0
      %1878 = vmatprep.subr.bf16.mxu0 0
      %1879 = vmatpush1.bf16.xpose.msra.mxu0 0
      %1880 = vmatprep.subr.bf16.mxu0 0
      %1881 = vmatpush1.bf16.xpose.msra.mxu0 0
      %1882 = vmatprep.subr.bf16.mxu0 0
      %1883 = vmatpush1.bf16.xpose.msra.mxu0 0
      %1884 = vmatprep.subr.bf16.mxu0 0
      %1885 = vmatpush1.bf16.xpose.msra.mxu0 0
      %1886 = vmatprep.subr.bf16.mxu0 0
      %1887 = vmatpush1.bf16.xpose.msra.mxu0 0
      %1888 = vmatprep.subr.bf16.mxu0 0
      %1889 = vmatpush1.bf16.xpose.msra.mxu0 0
      %1890 = vmatprep.subr.bf16.mxu0 0
      %1891 = vmatpush1.bf16.xpose.msra.mxu0 %v1874
      %1892 = vmatprep.subr.bf16.mxu0 0
      %1893 = vmatpush2.bf16.xpose.msra.mxu0 0
      %1894 = vmatprep.subr.bf16.mxu0 0
      %1895 = vmatpush2.bf16.xpose.msra.mxu0 0
      %1896 = vmatprep.subr.bf16.mxu0 0
      %1897 = vmatpush2.bf16.xpose.msra.mxu0 0
      %1898 = vmatprep.subr.bf16.mxu0 0
      %1899 = vmatpush2.bf16.xpose.msra.mxu0 0
      %1900 = vmatprep.subr.bf16.mxu0 0
      %1901 = vmatpush2.bf16.xpose.msra.mxu0 0
      %1902 = vmatprep.subr.bf16.mxu0 0
      %1903 = vmatpush2.bf16.xpose.msra.mxu0 0
      %1904 = vmatprep.subr.bf16.mxu0 0
      %1905 = vmatpush2.bf16.xpose.msra.mxu0 0
      %1906 = vmatprep.subr.bf16.mxu0 0
      %1907 = vmatpush2.bf16.xpose.msra.mxu0 0
      %1908 = vmatprep.mubr.bf16.mxu0 0
      %1909 = vmatmul.mubr.bf16.gmra.mxu0 %v1871
      %v1910 = vpop.f32.mrf.mxu0
      %v1911 = vadd.f32 0.0, %v1910
      %v1912 = vpop.f32.mrf.mxu0
      %v1913 = vpop.f32.mrf.mxu0
      %v1914 = vadd.f32 0.0, %v1913
      %v1915 = vpop.f32.mrf.mxu0
      %1916 = vdwg.mxu0
      %v1917 = vmul.f32 %v1911, 0.35355338
      %v1918 = vmul.f32 %v1914, 0.35355338
      %v1919 = vsel %vm614, %v1917, -inf
      %1920 = vmax.xlane.f32.xlu0 %v1919
      %v1921 = vpop.xlane.xlu0 %1920
      %v1922 = vsel %vm614, %v1918, -inf
      %1923 = vmax.xlane.f32.xlu0 %v1922
      %v1924 = vpop.xlane.xlu0 %1923
      %v1925 = vsub.f32 %v1917, %v1921
      %v1926 = vsub.f32 %v1918, %v1924
      %v1927 = vmul.f32 %v1925, 1.442695
      %v1928 = vpow.pop %v1927
      %v1929 = vmul.f32 %v1926, 1.442695
      %v1930 = vpow.pop %v1929
      %v1931 = vsel %vm614, %v1928, 0.0
      %1932 = vadd.xlane.f32.xlu0 %v1931
      %v1933 = vpop.xlane.xlu0 %1932
      %v1934 = vsel %vm614, %v1930, 0.0
      %1935 = vadd.xlane.f32.xlu0 %v1934
      %v1936 = vpop.xlane.xlu0 %1935
      %v1937 = vrcp.pop %v1933
      %v1938 = vmul.f32 %v1928, %v1937
      %v1939 = vrcp.pop %v1936
      %v1940 = vmul.f32 %v1930, %v1939
      %s1941 = scalar_lea.vmem %s426, 112
      %1942 = vst.msk [vmem:[%s1941] sm:$0xff] %vm614, %v1938
      %1943 = vst.msk [vmem:[%s1941 + $0x8] sm:$0xff] %vm614, %v1940
      %v1944 = vpack.c.bf16 %v1940, %v1938
      %1945 = vrot.lane.b32.xlu0 %v1482, 40
      %v1946 = vpop.permute.xlu0 %1945
      %v1949 = vsel %vm614, %v1944, 0
      %1951 = vmatprep.subr.bf16.mxu0 0
      %1952 = vmatpush1.bf16.msra.mxu0 0
      %1953 = vmatprep.subr.bf16.mxu0 0
      %1954 = vmatpush1.bf16.msra.mxu0 0
      %1955 = vmatprep.subr.bf16.mxu0 0
      %1956 = vmatpush1.bf16.msra.mxu0 0
      %1957 = vmatprep.subr.bf16.mxu0 0
      %1958 = vmatpush1.bf16.msra.mxu0 0
      %1959 = vmatprep.subr.bf16.mxu0 0
      %1960 = vmatpush1.bf16.msra.mxu0 0
      %1961 = vmatprep.subr.bf16.mxu0 0
      %1962 = vmatpush1.bf16.msra.mxu0 0
      %1963 = vmatprep.subr.bf16.mxu0 0
      %1964 = vmatpush1.bf16.msra.mxu0 0
      %1965 = vmatprep.subr.bf16.mxu0 0
      %1966 = vmatpush1.bf16.msra.mxu0 %v1946
      %1967 = vmatprep.subr.bf16.mxu0 0
      %1968 = vmatpush2.bf16.msra.mxu0 0
      %1969 = vmatprep.subr.bf16.mxu0 0
      %1970 = vmatpush2.bf16.msra.mxu0 0
      %1971 = vmatprep.subr.bf16.mxu0 0
      %1972 = vmatpush2.bf16.msra.mxu0 0
      %1973 = vmatprep.subr.bf16.mxu0 0
      %1974 = vmatpush2.bf16.msra.mxu0 0
      %1975 = vmatprep.subr.bf16.mxu0 0
      %1976 = vmatpush2.bf16.msra.mxu0 0
      %1977 = vmatprep.subr.bf16.mxu0 0
      %1978 = vmatpush2.bf16.msra.mxu0 0
      %1979 = vmatprep.subr.bf16.mxu0 0
      %1980 = vmatpush2.bf16.msra.mxu0 0
      %1981 = vmatprep.subr.bf16.mxu0 0
      %1982 = vmatpush2.bf16.msra.mxu0 0
      %1983 = vmatprep.mubr.bf16.mxu0 0
      %1984 = vmatmul.mubr.bf16.gmra.mxu0 %v1949
      %v1985 = vpop.f32.mrf.mxu0
      %v1986 = vadd.f32 0.0, %v1985
      %v1987 = vpop.f32.mrf.mxu0
      %v1988 = vpop.f32.mrf.mxu0
      %v1989 = vadd.f32 0.0, %v1988
      %v1990 = vpop.f32.mrf.mxu0
      %1991 = vdwg.mxu0
      %1992 = vst.msk [vmem:[#allocation2 + $0x30] sm:$0xff] %vm439, %v1986
      %1993 = vst.msk [vmem:[#allocation2 + $0x38] sm:$0xff] %vm439, %v1989
      %v1994 = vld [vmem:[#allocation2] ss:$4 sm:$0xff]
      %v1995 = vld [vmem:[%s1074] ss:$4 sm:$0xff]
      %v1996 = vld [vmem:[%s1076] ss:$4 sm:$0xff]
      %v1997 = vld [vmem:[%s1078] ss:$4 sm:$0xff]
      %v1998 = vld [vmem:[%s1080] ss:$4 sm:$0xff]
      %v1999 = vld [vmem:[%s1082] ss:$4 sm:$0xff]
      %v2000 = vld [vmem:[%s1084] ss:$4 sm:$0xff]
      %v2001 = vld [vmem:[%s1086] ss:$4 sm:$0xff]
      %2004 = vrot.lane.b32.xlu0 %v1996, 8
      %v2005 = vpop.permute.xlu0 %2004
      %2006 = vrot.lane.b32.xlu0 %v1997, 8
      %v2007 = vpop.permute.xlu0 %2006
      %2012 = vrot.lane.b32.xlu0 %v1998, 16
      %v2013 = vpop.permute.xlu0 %2012
      %2014 = vrot.lane.b32.xlu0 %v1999, 16
      %v2015 = vpop.permute.xlu0 %2014
      %2020 = vrot.lane.b32.xlu0 %v2000, 24
      %v2021 = vpop.permute.xlu0 %2020
      %2022 = vrot.lane.b32.xlu0 %v2001, 24
      %v2023 = vpop.permute.xlu0 %2022
      %v2026 = vsel %vm439, %v1994, %v2005
      %v2027 = vsel %vm439, %v1995, %v2007
      %v2028 = vsel %vm614, %v2026, %v2013
      %v2029 = vsel %vm614, %v2027, %v2015
      %v2030 = vsel %vm1116, %v2028, %v2021
      %v2031 = vsel %vm1116, %v2029, %v2023
      %v2032 = vpack.c.bf16 %v2031, %v2030
      %s2033 = scalar_lea.vmem %s5, 16
      %v2034 = vld [vmem:[%s2033] sm:$0xf]
      %v2035 = vld [vmem:[%s2033 + $0x4] sm:$0xf]
      %v2036 = vld [vmem:[%s2033 + $0x8] sm:$0xf]
      %v2037 = vld [vmem:[%s2033 + $0xc] sm:$0xf]
      %v2038 = vlaneseq
      %v2039 = vshrl.u32 %v2038, 7
      %v2040 = vsub.s32 1, %v2039
      %v2041 = vrot.slane %v1415, %v2040
      %v2046 = vunpack.c.l.b16 %v2034
      %v2047 = vunpack.c.l.b16 %v2035
      %v2048 = vunpack.c.l.b16 %v2036
      %v2049 = vunpack.c.l.b16 %v2037
      %v2050 = vpack.c.b16 %v2047, %v2046
      %v2051 = vpack.c.b16 %v2049, %v2048
      %v2055 = vsel %vm516, %v2032, 0
      %2057 = vmatprep.subr.bf16.mxu0 0
      %2058 = vmatpush1.bf16.msra.mxu0 0
      %2059 = vmatprep.subr.bf16.mxu0 0
      %2060 = vmatpush1.bf16.msra.mxu0 0
      %2061 = vmatprep.subr.bf16.mxu0 0
      %2062 = vmatpush1.bf16.msra.mxu0 0
      %2063 = vmatprep.subr.bf16.mxu0 0
      %2064 = vmatpush1.bf16.msra.mxu0 0
      %2065 = vmatprep.subr.bf16.mxu0 0
      %2066 = vmatpush1.bf16.msra.mxu0 0
      %2067 = vmatprep.subr.bf16.mxu0 0
      %2068 = vmatpush1.bf16.msra.mxu0 0
      %2069 = vmatprep.subr.bf16.mxu0 0
      %2070 = vmatpush1.bf16.msra.mxu0 %v2051
      %2071 = vmatprep.subr.bf16.mxu0 0
      %2072 = vmatpush1.bf16.msra.mxu0 %v2050
      %2073 = vmatprep.subr.bf16.mxu0 0
      %2074 = vmatpush2.bf16.msra.mxu0 0
      %2075 = vmatprep.subr.bf16.mxu0 0
      %2076 = vmatpush2.bf16.msra.mxu0 0
      %2077 = vmatprep.subr.bf16.mxu0 0
      %2078 = vmatpush2.bf16.msra.mxu0 0
      %2079 = vmatprep.subr.bf16.mxu0 0
      %2080 = vmatpush2.bf16.msra.mxu0 0
      %2081 = vmatprep.subr.bf16.mxu0 0
      %2082 = vmatpush2.bf16.msra.mxu0 0
      %2083 = vmatprep.subr.bf16.mxu0 0
      %2084 = vmatpush2.bf16.msra.mxu0 0
      %2085 = vmatprep.subr.bf16.mxu0 0
      %2086 = vmatpush2.bf16.msra.mxu0 0
      %2087 = vmatprep.subr.bf16.mxu0 0
      %2088 = vmatpush2.bf16.msra.mxu0 0
      %2089 = vmatprep.mubr.bf16.mxu0 0
      %2090 = vmatmul.mubr.bf16.gmra.mxu0 %v2055
      %v2091 = vpop.f32.mrf.mxu0
      %v2092 = vadd.f32 %v2041, %v2091
      %v2093 = vpop.f32.mrf.mxu0
      %v2094 = vpop.f32.mrf.mxu0
      %v2095 = vadd.f32 %v2041, %v2094
      %v2096 = vpop.f32.mrf.mxu0
      %2097 = vdwg.mxu0
      %v2098 = vadd.f32 %v1412, %v2092
      %v2099 = vadd.f32 %v1413, %v2095
      %v2100 = vsel %vm516, %v2098, 0.0
      %2101 = vadd.xlane.f32.xlu0 %v2100
      %v2102 = vpop.xlane.xlu0 %2101
      %v2103 = vsel %vm516, %v2099, 0.0
      %2104 = vadd.xlane.f32.xlu0 %v2103
      %v2105 = vpop.xlane.xlu0 %2104
      %v2106 = vmul.f32 %v2102, %v1192
      %v2107 = vmul.f32 %v2105, %v1192
      %v2108 = vsub.f32 %v2098, %v2106
      %v2109 = vsub.f32 %v2099, %v2107
      %v2110 = vmul.f32 %v2108, %v2108
      %v2111 = vmul.f32 %v2109, %v2109
      %v2112 = vsel %vm516, %v2110, 0.0
      %2113 = vadd.xlane.f32.xlu0 %v2112
      %v2114 = vpop.xlane.xlu0 %2113
      %v2115 = vsel %vm516, %v2111, 0.0
      %2116 = vadd.xlane.f32.xlu0 %v2115
      %v2117 = vpop.xlane.xlu0 %2116
      %v2118 = vmul.f32 %v2114, %v1192
      %v2119 = vmul.f32 %v2117, %v1192
      %v2120 = vadd.f32 %v2118, 1e-09
      %v2121 = vadd.f32 %v2119, 1e-09
      %v2122 = vrsqrt.pop %v2120
      %v2123 = vrsqrt.pop %v2121
      %v2124 = vmul.f32 %v2108, %v2122
      %v2125 = vmul.f32 %v2109, %v2123
      %v2126 = vlaneseq
      %v2127 = vshrl.u32 %v2126, 7
      %v2128 = vsub.s32 4, %v2127
      %v2129 = vrot.slane %v1415, %v2128
      %v2130 = vmul.f32 %v2124, %v2129
      %v2131 = vmul.f32 %v2125, %v2129
      %v2132 = vlaneseq
      %v2133 = vshrl.u32 %v2132, 7
      %v2134 = vsub.s32 5, %v2133
      %v2135 = vrot.slane %v1415, %v2134
      %v2136 = vadd.f32 %v2130, %v2135
      %v2137 = vadd.f32 %v2131, %v2135
      %v2138 = vpack.c.bf16 %v2137, %v2136
      %s2139 = scalar_lea.vmem %s6, 16
      %v2140 = vld [vmem:[%s2139] sm:$0xf]
      %v2141 = vld [vmem:[%s2139 + $0x4] sm:$0xf]
      %v2142 = vld [vmem:[%s2139 + $0x8] sm:$0xf]
      %v2143 = vld [vmem:[%s2139 + $0xc] sm:$0xf]
      %v2144 = vlaneseq
      %v2145 = vshrl.u32 %v2144, 7
      %v2146 = vsub.s32 2, %v2145
      %v2147 = vrot.slane %v1415, %v2146
      %v2152 = vunpack.c.l.b16 %v2140
      %v2153 = vunpack.c.l.b16 %v2141
      %v2154 = vunpack.c.l.b16 %v2142
      %v2155 = vunpack.c.l.b16 %v2143
      %v2156 = vpack.c.b16 %v2153, %v2152
      %v2157 = vpack.c.b16 %v2155, %v2154
      %v2161 = vsel %vm516, %v2138, 0
      %2163 = vmatprep.subr.bf16.mxu0 0
      %2164 = vmatpush1.bf16.msra.mxu0 0
      %2165 = vmatprep.subr.bf16.mxu0 0
      %2166 = vmatpush1.bf16.msra.mxu0 0
      %2167 = vmatprep.subr.bf16.mxu0 0
      %2168 = vmatpush1.bf16.msra.mxu0 0
      %2169 = vmatprep.subr.bf16.mxu0 0
      %2170 = vmatpush1.bf16.msra.mxu0 0
      %2171 = vmatprep.subr.bf16.mxu0 0
      %2172 = vmatpush1.bf16.msra.mxu0 0
      %2173 = vmatprep.subr.bf16.mxu0 0
      %2174 = vmatpush1.bf16.msra.mxu0 0
      %2175 = vmatprep.subr.bf16.mxu0 0
      %2176 = vmatpush1.bf16.msra.mxu0 %v2157
      %2177 = vmatprep.subr.bf16.mxu0 0
      %2178 = vmatpush1.bf16.msra.mxu0 %v2156
      %2179 = vmatprep.subr.bf16.mxu0 0
      %2180 = vmatpush2.bf16.msra.mxu0 0
      %2181 = vmatprep.subr.bf16.mxu0 0
      %2182 = vmatpush2.bf16.msra.mxu0 0
      %2183 = vmatprep.subr.bf16.mxu0 0
      %2184 = vmatpush2.bf16.msra.mxu0 0
      %2185 = vmatprep.subr.bf16.mxu0 0
      %2186 = vmatpush2.bf16.msra.mxu0 0
      %2187 = vmatprep.subr.bf16.mxu0 0
      %2188 = vmatpush2.bf16.msra.mxu0 0
      %2189 = vmatprep.subr.bf16.mxu0 0
      %2190 = vmatpush2.bf16.msra.mxu0 0
      %2191 = vmatprep.subr.bf16.mxu0 0
      %2192 = vmatpush2.bf16.msra.mxu0 0
      %2193 = vmatprep.subr.bf16.mxu0 0
      %2194 = vmatpush2.bf16.msra.mxu0 0
      %2195 = vmatprep.mubr.bf16.mxu0 0
      %2196 = vmatmul.mubr.bf16.gmra.mxu0 %v2161
      %v2197 = vpop.f32.mrf.mxu0
      %v2198 = vadd.f32 %v2147, %v2197
      %v2199 = vpop.f32.mrf.mxu0
      %v2200 = vpop.f32.mrf.mxu0
      %v2201 = vadd.f32 %v2147, %v2200
      %v2202 = vpop.f32.mrf.mxu0
      %2203 = vdwg.mxu0
      %v2204 = vmax.f32 %v2198, 0.0
      %v2205 = vmax.f32 %v2201, 0.0
      %v2206 = vpack.c.bf16 %v2205, %v2204
      %s2207 = scalar_lea.vmem %s7, 32
      %v2208 = vld [vmem:[%s2207] sm:$0xf]
      %v2209 = vld [vmem:[%s2207 + $0x4] sm:$0xf]
      %v2210 = vld [vmem:[%s2207 + $0x8] sm:$0xf]
      %v2211 = vld [vmem:[%s2207 + $0xc] sm:$0xf]
      %v2212 = vld [vmem:[%s2207 + $0x10] sm:$0xf]
      %v2213 = vld [vmem:[%s2207 + $0x14] sm:$0xf]
      %v2214 = vld [vmem:[%s2207 + $0x18] sm:$0xf]
      %v2215 = vld [vmem:[%s2207 + $0x1c] sm:$0xf]
      %v2216 = vlaneseq
      %v2217 = vshrl.u32 %v2216, 7
      %v2218 = vsub.s32 3, %v2217
      %v2219 = vrot.slane %v1415, %v2218
      %v2228 = vunpack.c.l.b16 %v2208
      %v2229 = vunpack.c.l.b16 %v2209
      %v2230 = vunpack.c.l.b16 %v2210
      %v2231 = vunpack.c.l.b16 %v2211
      %v2232 = vunpack.c.l.b16 %v2212
      %v2233 = vunpack.c.l.b16 %v2213
      %v2234 = vunpack.c.l.b16 %v2214
      %v2235 = vunpack.c.l.b16 %v2215
      %v2236 = vpack.c.b16 %v2229, %v2228
      %v2237 = vpack.c.b16 %v2231, %v2230
      %v2238 = vpack.c.b16 %v2233, %v2232
      %v2239 = vpack.c.b16 %v2235, %v2234
      %v2245 = vsel %vm1329, %v2206, 0
      %2247 = vmatprep.subr.bf16.mxu0 0
      %2248 = vmatpush1.bf16.msra.mxu0 0
      %2249 = vmatprep.subr.bf16.mxu0 0
      %2250 = vmatpush1.bf16.msra.mxu0 0
      %2251 = vmatprep.subr.bf16.mxu0 0
      %2252 = vmatpush1.bf16.msra.mxu0 0
      %2253 = vmatprep.subr.bf16.mxu0 0
      %2254 = vmatpush1.bf16.msra.mxu0 0
      %2255 = vmatprep.subr.bf16.mxu0 0
      %2256 = vmatpush1.bf16.msra.mxu0 %v2239
      %2257 = vmatprep.subr.bf16.mxu0 0
      %2258 = vmatpush1.bf16.msra.mxu0 %v2238
      %2259 = vmatprep.subr.bf16.mxu0 0
      %2260 = vmatpush1.bf16.msra.mxu0 %v2237
      %2261 = vmatprep.subr.bf16.mxu0 0
      %2262 = vmatpush1.bf16.msra.mxu0 %v2236
      %2263 = vmatprep.subr.bf16.mxu0 0
      %2264 = vmatpush2.bf16.msra.mxu0 0
      %2265 = vmatprep.subr.bf16.mxu0 0
      %2266 = vmatpush2.bf16.msra.mxu0 0
      %2267 = vmatprep.subr.bf16.mxu0 0
      %2268 = vmatpush2.bf16.msra.mxu0 0
      %2269 = vmatprep.subr.bf16.mxu0 0
      %2270 = vmatpush2.bf16.msra.mxu0 0
      %2271 = vmatprep.subr.bf16.mxu0 0
      %2272 = vmatpush2.bf16.msra.mxu0 0
      %2273 = vmatprep.subr.bf16.mxu0 0
      %2274 = vmatpush2.bf16.msra.mxu0 0
      %2275 = vmatprep.subr.bf16.mxu0 0
      %2276 = vmatpush2.bf16.msra.mxu0 0
      %2277 = vmatprep.subr.bf16.mxu0 0
      %2278 = vmatpush2.bf16.msra.mxu0 0
      %2279 = vmatprep.mubr.bf16.mxu0 0
      %2280 = vmatmul.mubr.bf16.gmra.mxu0 %v2245
      %v2281 = vpop.f32.mrf.mxu0
      %v2282 = vadd.f32 %v2219, %v2281
      %v2283 = vpop.f32.mrf.mxu0
      %v2284 = vpop.f32.mrf.mxu0
      %v2285 = vadd.f32 %v2219, %v2284
      %v2286 = vpop.f32.mrf.mxu0
      %2287 = vdwg.mxu0
      %v2288 = vadd.f32 %v2136, %v2282
      %v2289 = vadd.f32 %v2137, %v2285
      %v2290 = vsel %vm516, %v2288, 0.0
      %2291 = vadd.xlane.f32.xlu0 %v2290
      %v2292 = vpop.xlane.xlu0 %2291
      %v2293 = vsel %vm516, %v2289, 0.0
      %2294 = vadd.xlane.f32.xlu0 %v2293
      %v2295 = vpop.xlane.xlu0 %2294
      %v2296 = vmul.f32 %v2292, %v1192
      %v2297 = vmul.f32 %v2295, %v1192
      %v2298 = vsub.f32 %v2288, %v2296
      %v2299 = vsub.f32 %v2289, %v2297
      %v2300 = vmul.f32 %v2298, %v2298
      %v2301 = vmul.f32 %v2299, %v2299
      %v2302 = vsel %vm516, %v2300, 0.0
      %2303 = vadd.xlane.f32.xlu0 %v2302
      %v2304 = vpop.xlane.xlu0 %2303
      %v2305 = vsel %vm516, %v2301, 0.0
      %2306 = vadd.xlane.f32.xlu0 %v2305
      %v2307 = vpop.xlane.xlu0 %2306
      %v2308 = vmul.f32 %v2304, %v1192
      %v2309 = vmul.f32 %v2307, %v1192
      %v2310 = vadd.f32 %v2308, 1e-09
      %v2311 = vadd.f32 %v2309, 1e-09
      %v2312 = vrsqrt.pop %v2310
      %v2313 = vrsqrt.pop %v2311
      %v2314 = vmul.f32 %v2298, %v2312
      %v2315 = vmul.f32 %v2299, %v2313
      %v2316 = vlaneseq
      %v2317 = vshrl.u32 %v2316, 7
      %v2318 = vsub.s32 6, %v2317
      %v2319 = vrot.slane %v1415, %v2318
      %v2320 = vmul.f32 %v2314, %v2319
      %v2321 = vmul.f32 %v2315, %v2319
      %v2322 = vlaneseq
      %v2323 = vshrl.u32 %v2322, 7
      %v2324 = vsub.s32 7, %v2323
      %v2325 = vrot.slane %v1415, %v2324
      %v2326 = vadd.f32 %v2320, %v2325
      %v2327 = vadd.f32 %v2321, %v2325
      %v2328 = vpack.c.bf16 %v2327, %v2326
      %v2329 = vld [vmem:[%s9] sm:$0xf]
      %v2330 = vld [vmem:[%s9 + $0x4] sm:$0xf]
      %v2331 = vld [vmem:[%s9 + $0x8] sm:$0xf]
      %v2332 = vld [vmem:[%s9 + $0xc] sm:$0xf]
      %v2333 = vld [vmem:[%s10] sm:$0x1]
      %v2335 = vlaneseq
      %v2336 = vshrl.u32 %v2335, 7
      %v2337 = vsub.s32 0, %v2336
      %v2338 = vrot.slane %v2333, %v2337
      %v2344 = vunpack.c.l.b16 %v2329
      %v2345 = vunpack.c.l.b16 %v2330
      %v2346 = vunpack.c.l.b16 %v2331
      %v2347 = vunpack.c.l.b16 %v2332
      %v2348 = vpack.c.b16 %v2345, %v2344
      %v2349 = vpack.c.b16 %v2347, %v2346
      %v2353 = vsel %vm516, %v2328, 0
      %2355 = vmatprep.subr.bf16.mxu0 0
      %2356 = vmatpush1.bf16.msra.mxu0 0
      %2357 = vmatprep.subr.bf16.mxu0 0
      %2358 = vmatpush1.bf16.msra.mxu0 0
      %2359 = vmatprep.subr.bf16.mxu0 0
      %2360 = vmatpush1.bf16.msra.mxu0 0
      %2361 = vmatprep.subr.bf16.mxu0 0
      %2362 = vmatpush1.bf16.msra.mxu0 0
      %2363 = vmatprep.subr.bf16.mxu0 0
      %2364 = vmatpush1.bf16.msra.mxu0 0
      %2365 = vmatprep.subr.bf16.mxu0 0
      %2366 = vmatpush1.bf16.msra.mxu0 0
      %2367 = vmatprep.subr.bf16.mxu0 0
      %2368 = vmatpush1.bf16.msra.mxu0 %v2349
      %2369 = vmatprep.subr.bf16.mxu0 0
      %2370 = vmatpush1.bf16.msra.mxu0 %v2348
      %2371 = vmatprep.subr.bf16.mxu0 0
      %2372 = vmatpush2.bf16.msra.mxu0 0
      %2373 = vmatprep.subr.bf16.mxu0 0
      %2374 = vmatpush2.bf16.msra.mxu0 0
      %2375 = vmatprep.subr.bf16.mxu0 0
      %2376 = vmatpush2.bf16.msra.mxu0 0
      %2377 = vmatprep.subr.bf16.mxu0 0
      %2378 = vmatpush2.bf16.msra.mxu0 0
      %2379 = vmatprep.subr.bf16.mxu0 0
      %2380 = vmatpush2.bf16.msra.mxu0 0
      %2381 = vmatprep.subr.bf16.mxu0 0
      %2382 = vmatpush2.bf16.msra.mxu0 0
      %2383 = vmatprep.subr.bf16.mxu0 0
      %2384 = vmatpush2.bf16.msra.mxu0 0
      %2385 = vmatprep.subr.bf16.mxu0 0
      %2386 = vmatpush2.bf16.msra.mxu0 0
      %2387 = vmatprep.mubr.bf16.mxu0 0
      %2388 = vmatmul.mubr.bf16.gmra.mxu0 %v2353
      %v2389 = vpop.f32.mrf.mxu0
      %v2390 = vadd.f32 %v2338, %v2389
      %v2391 = vpop.f32.mrf.mxu0
      %v2392 = vpop.f32.mrf.mxu0
      %v2393 = vadd.f32 %v2338, %v2392
      %v2394 = vpop.f32.mrf.mxu0
      %2395 = vdwg.mxu0
      %vm2396 = vcmask 31744
      %2397 = vst.msk [vmem:[%s421] sm:$0xff] %vm2396, %v2390
      %2398 = vst.msk [vmem:[%s421 + $0x8] sm:$0xff] %vm2396, %v2393
      %p2399 = scmp.lt.s32.totalorder %s24, 1
      %s2400 = scalar_select %p2399, %s24, 1
      %s2401 = smul.addr %s2400, 2
      %s2402 = smul.addr %s2401, 8
      %s2403 = scalar_lea.vmem %s11, %s2402
      %p2404 = scmp.lt.s32.totalorder %s24, 1
      %s2405 = scalar_select %p2404, %s24, 1
      %s2406 = smul.addr %s2405, 16
      %s2407 = smul.addr %s2406, 8
      %s2408 = scalar_lea.vmem %s12, %s2407
      // Predicated region
      $region65: #{decoder_forward.1} parent=63 // pred_check
        %p2409 = pneg %p278
      $region66: #{decoder_forward.1} parent=63 // pred_check_branch
        %2411 = sbr.rel (%p2409) target = $region68
      $region67: #{decoder_forward.1} parent=63 // pred_region
        _
      $region68: #{decoder_forward.1} parent=63 // pred_fallthru
        _
      // Predicated region
      $region69: #{decoder_forward.1} parent=63 // pred_check
        %p2412 = pneg %p304
      $region70: #{decoder_forward.1} parent=63 // pred_check_branch
        %2414 = sbr.rel (%p2412) target = $region72
      $region71: #{decoder_forward.1} parent=63 // pred_region
        _
      $region72: #{decoder_forward.1} parent=63 // pred_fallthru
        _
    $region64: #{decoder_forward.1} parent=5 // pred_fallthru
      _
    %p2415 = scmp.le.s32.totalorder 2, %s19
    // Predicated region
    $region73: #{decoder_forward.1} parent=5 // pred_check
      %p2416 = pneg %p2415
    $region74: #{decoder_forward.1} parent=5 // pred_check_branch
      %2418 = sbr.rel (%p2416) target = $region76
    $region75: #{decoder_forward.1} parent=5 // pred_region
      %s2419 = ssub.s32 %s19, 2
      // Predicated region
      $region77: #{decoder_forward.1} parent=75 // pred_check
        %p2420 = pneg %p284
      $region78: #{decoder_forward.1} parent=75 // pred_check_branch
        %2422 = sbr.rel (%p2420) target = $region80
      $region79: #{decoder_forward.1} parent=75 // pred_region
        %p2423 = scmp.lt.s32.totalorder %s25, 1
        %s2424 = scalar_select %p2423, %s25, 1
        %s2425 = smul.addr %s2424, 2
        %s2426 = smul.addr %s2425, 8
        %s2427 = scalar_lea.vmem %s11, %s2426
      $region80: #{decoder_forward.1} parent=75 // pred_fallthru
        _
      // Predicated region
      $region81: #{decoder_forward.1} parent=75 // pred_check
        %p2428 = pneg %p310
      $region82: #{decoder_forward.1} parent=75 // pred_check_branch
        %2430 = sbr.rel (%p2428) target = $region84
      $region83: #{decoder_forward.1} parent=75 // pred_region
        %p2431 = scmp.lt.s32.totalorder %s25, 1
        %s2432 = scalar_select %p2431, %s25, 1
        %s2433 = smul.addr %s2432, 16
        %s2434 = smul.addr %s2433, 8
        %s2435 = scalar_lea.vmem %s12, %s2434
      $region84: #{decoder_forward.1} parent=75 // pred_fallthru
        _
    $region76: #{decoder_forward.1} parent=5 // pred_fallthru
      _
  $region6: #{decoder_forward.1} parent=0 // loop_footer
    %s23 = sadd.s32 1, %s19
  $region7: #{decoder_forward.1} parent=0 // loop_footer_branch
    %18 = sbr.rel target = $region3
  $region8: #{decoder_forward.1} parent=0 // loop_exit
    _

</llo_original>
